<compile_context>
chip_gen: v6e
topology: v6e:2x2x1
jax: 0.10.0
libtpu: 0.0.40
codegen_flags: <defaults>
</compile_context>

<pallas_src>
import functools

import jax
import jax.numpy as jnp
from jax.experimental import pallas as pl
from jax.experimental.pallas import tpu as pltpu


MODEL_OPTS = dict(
    num_rnn_blocks=2,
    num_layers_rnn=2,
    hidden_size_rnn=32,
    input_size_rnn=4,
    output_size_rnn=4,
    num_units_embed=[6, 16, 8],
    dropout=0.2,
)


# ----------------------------- fused Pallas kernel ------------------------------

def _lstm_layer_unrolled(x2d, w_ih, w_hh, b, *, T, Bp, H):
    """One LSTM layer over the whole (time-major, flattened) sequence.

    x2d: (T*Bp, I) with row index = t*Bp + b. Weights are pre-transposed and
    gate-reordered to [i, f, o, g]; b = b_ih + b_hh. Returns (T*Bp, H)."""
    # Hoisted input projection: one big MXU matmul for all timesteps.
    precomp = jnp.dot(x2d, w_ih, preferred_element_type=jnp.float32) + b   # (T*Bp, 4H)
    h = jnp.zeros((Bp, H), jnp.float32)
    c = jnp.zeros((Bp, H), jnp.float32)
    hs = []
    for t in range(T):  # static unroll: T is fixed & small, recurrence is the critical path
        gates = precomp[t * Bp:(t + 1) * Bp, :] + jnp.dot(
            h, w_hh, preferred_element_type=jnp.float32)                   # (Bp, 4H) = 1 vreg
        sig = jax.nn.sigmoid(gates[:, :3 * H])                             # covers [i | f | o]
        g_g = jnp.tanh(gates[:, 3 * H:])                                   # covers [g]
        i_g = sig[:, :H]
        f_g = sig[:, H:2 * H]
        o_g = sig[:, 2 * H:3 * H]
        c = f_g * c + i_g * g_g
        h = o_g * jnp.tanh(c)
        hs.append(h)
    return jnp.concatenate(hs, axis=0)                                     # (T*Bp, H)


def _fused_seq2seq_kernel(*refs, T, Bp, H, n_embed, n_blocks, n_layers):
    it = iter(refs)
    x_ref = next(it)                      # (T*Bp, F)   time-major flattened stats
    xe_ref = next(it)                     # (Bp, E0)
    mu_s = next(it); inv_s = next(it)     # (1, F)
    mu_e = next(it); inv_e = next(it)     # (1, E0)
    embed = [(next(it), next(it)) for _ in range(n_embed)]                 # (Ein,Eout),(1,Eout)
    w_i2h_s = next(it)                    # (F, H)
    w_i2h_e = next(it)                    # (E_last, H)
    b_i2h = next(it)                      # (1, H)
    lstm = [[(next(it), next(it), next(it)) for _ in range(n_layers)]
            for _ in range(n_blocks)]                                      # (I,4H),(H,4H),(1,4H)
    w_h2o = next(it)                      # (H, O)
    b_h2o = next(it)                      # (1, O)
    out_ref = next(it)                    # (T*Bp, O)

    # ---- preprocess (fused prologue; Dropout is eval-mode identity) ----
    xs = (x_ref[...] - mu_s[...]) * inv_s[...]                             # (T*Bp, F)
    xe = (xe_ref[...] - mu_e[...]) * inv_e[...]                            # (Bp, E0)

    # ---- embedding MLP (Linear -> ReLU) ----
    for w, b in embed:
        xe = jnp.maximum(
            jnp.dot(xe, w[...], preferred_element_type=jnp.float32) + b[...], 0.0)

    # ---- i2h, split: stats part per (t,b) row; embed part once per batch row ----
    out = jnp.dot(xs, w_i2h_s[...], preferred_element_type=jnp.float32)    # (T*Bp, H)
    emb_part = jnp.dot(xe, w_i2h_e[...], preferred_element_type=jnp.float32) + b_i2h[...]
    out = out + jnp.concatenate([emb_part] * T, axis=0)                    # broadcast over T

    # ---- residual stack of deep LSTM blocks (zero initial h/c per call) ----
    for bi, block in enumerate(lstm):
        x2d = out
        for (w_ih, w_hh, b) in block:
            x2d = _lstm_layer_unrolled(x2d, w_ih[...], w_hh[...], b[...],
                                       T=T, Bp=Bp, H=H)
        out = out + x2d if bi < n_blocks - 1 else x2d

    # ---- h2o ----
    out_ref[...] = jnp.dot(out, w_h2o[...],
                           preferred_element_type=jnp.float32) + b_h2o[...]


# ----------------------- one-time parameter preparation -------------------------

def prepare_params(params, opts):
    """Hoisted weight layout prep: transposes, gate reorder, bias fusion, 1/std."""
    H = opts['hidden_size_rnn']
    F = opts['input_size_rnn']
    f32 = jnp.float32

    def lin_prep(w, b):
        return w.T.astype(f32), b.reshape(1, -1).astype(f32)

    def reorder_gates(a):  # rows [i, f, g, o] -> [i, f, o, g]
        return jnp.concatenate(
            [a[0:H], a[H:2 * H], a[3 * H:4 * H], a[2 * H:3 * H]], axis=0)

    prep = [
        params['mu_stats'].reshape(1, -1).astype(f32),
        (1.0 / params['std_stats']).reshape(1, -1).astype(f32),
        params['mu_embeds'].reshape(1, -1).astype(f32),
        (1.0 / params['std_embeds']).reshape(1, -1).astype(f32),
    ]
    for w, b in params['embed']:
        prep += list(lin_prep(w, b))
    w_i2h, b_i2h = params['i2h']
    prep += [w_i2h[:, :F].T.astype(f32),          # (F, H) stats slice
             w_i2h[:, F:].T.astype(f32),          # (E_last, H) embed slice
             b_i2h.reshape(1, -1).astype(f32)]
    for block in params['rnn_blocks']:
        for (w_ih, w_hh, b_ih, b_hh) in block:
            prep += [reorder_gates(w_ih).T.astype(f32),              # (I, 4H)
                     reorder_gates(w_hh).T.astype(f32),              # (H, 4H)
                     reorder_gates(b_ih + b_hh).reshape(1, -1).astype(f32)]
    w_h2o, b_h2o = params['h2o']
    prep += list(lin_prep(w_h2o, b_h2o))
    return tuple(prep)


# ------------------------------ forward wrapper ---------------------------------

def seq2seq_forward(prep, x_stats, x_embeds, opts):
    """Eval-mode forward pass (predicting=False). One fused pallas_call."""
    B, T, F = x_stats.shape
    H = opts['hidden_size_rnn']
    O = opts['output_size_rnn']
    n_embed = len(opts['num_units_embed']) - 1
    n_blocks = opts['num_rnn_blocks']
    n_layers = opts['num_layers_rnn']

    # Pad batch to a sublane multiple (>=8) so (Bp, 4H=128) gates are vreg-aligned.
    Bp = max(8, ((B + 7) // 8) * 8)
    xs = jnp.pad(x_stats.astype(jnp.float32), ((0, Bp - B), (0, 0), (0, 0)))
    xe = jnp.pad(x_embeds.astype(jnp.float32), ((0, Bp - B), (0, 0)))
    xs2d = jnp.transpose(xs, (1, 0, 2)).reshape(T * Bp, F)   # time-major, flattened

    kernel = functools.partial(
        _fused_seq2seq_kernel, T=T, Bp=Bp, H=H,
        n_embed=n_embed, n_blocks=n_blocks, n_layers=n_layers)
    n_inputs = 2 + len(prep)
    in_specs = [pl.BlockSpec(memory_space=pltpu.MemorySpace.VMEM)
                for _ in range(n_inputs)]
    # TODO(synk): for large B add a batch grid with dimension_semantics=("parallel",)
    #             (v7x 2nd TensorCore); for large T stream T-chunked BlockSpecs with
    #             h/c carried in VMEM scratch instead of full-sequence residency.
    y2d = pl.pallas_call(
        kernel,
        out_shape=jax.ShapeDtypeStruct((T * Bp, O), jnp.float32),
        in_specs=in_specs,
        out_specs=pl.BlockSpec(memory_space=pltpu.MemorySpace.VMEM),
    )(xs2d, xe, *prep)
    return y2d.reshape(T, Bp, O).transpose(1, 0, 2)[:B]


# ------------------------------- param init -------------------------------------

def init_params(key, opts):
    H = opts['hidden_size_rnn']
    I = opts['input_size_rnn']
    O = opts['output_size_rnn']
    units = opts['num_units_embed']
    n_blocks = opts['num_rnn_blocks']
    n_layers = opts['num_layers_rnn']
    in_merged = I + units[-1]

    keys = iter(jax.random.split(key, 256))

    def lin(n_out, n_in):
        s = 1.0 / jnp.sqrt(jnp.float32(n_in))
        w = jax.random.uniform(next(keys), (n_out, n_in), jnp.float32, -s, s)
        b = jax.random.uniform(next(keys), (n_out,), jnp.float32, -s, s)
        return w, b

    params = {}
    params['embed'] = [lin(units[i + 1], units[i]) for i in range(len(units) - 1)]
    params['i2h'] = lin(H, in_merged)
    params['h2o'] = lin(O, H)

    def lstm_layer_params():
        s = 1.0 / jnp.sqrt(jnp.float32(H))
        w_ih = jax.random.uniform(next(keys), (4 * H, H), jnp.float32, -s, s)
        w_hh = jax.random.uniform(next(keys), (4 * H, H), jnp.float32, -s, s)
        b_ih = jax.random.uniform(next(keys), (4 * H,), jnp.float32, -s, s)
        b_hh = jax.random.uniform(next(keys), (4 * H,), jnp.float32, -s, s)
        return (w_ih, w_hh, b_ih, b_hh)

    params['rnn_blocks'] = [
        [lstm_layer_params() for _ in range(n_layers)] for _ in range(n_blocks)
    ]

    # preprocessing stats (std > 1e-5 guaranteed)
    params['mu_stats'] = jax.random.normal(next(keys), (I,), jnp.float32) * 0.5
    params['std_stats'] = jax.random.uniform(next(keys), (I,), jnp.float32, 0.5, 1.5)
    params['mu_embeds'] = jax.random.normal(next(keys), (units[0],), jnp.float32) * 0.5
    params['std_embeds'] = jax.random.uniform(next(keys), (units[0],), jnp.float32, 0.5, 1.5)
    return params


# --------------------------- pure-JAX reference ----------------------------------

def _lstm_layer_ref(x_btf, w_ih, w_hh, b_ih, b_hh):
    B, T, _ = x_btf.shape
    H = w_hh.shape[1]
    h = jnp.zeros((B, H), jnp.float32)
    c = jnp.zeros((B, H), jnp.float32)
    outs = []
    for t in range(T):
        gates = x_btf[:, t, :] @ w_ih.T + h @ w_hh.T + b_ih + b_hh
        i_g = jax.nn.sigmoid(gates[:, 0 * H:1 * H])
        f_g = jax.nn.sigmoid(gates[:, 1 * H:2 * H])
        g_g = jnp.tanh(gates[:, 2 * H:3 * H])
        o_g = jax.nn.sigmoid(gates[:, 3 * H:4 * H])
        c = f_g * c + i_g * g_g
        h = o_g * jnp.tanh(c)
        outs.append(h)
    return jnp.stack(outs, axis=1)


def seq2seq_forward_ref(params, x_stats, x_embeds, opts):
    B, T, F = x_stats.shape
    n_blocks = opts['num_rnn_blocks']
    xs = (x_stats - params['mu_stats']) / params['std_stats']
    xe = (x_embeds - params['mu_embeds']) / params['std_embeds']
    for w, b in params['embed']:
        xe = jnp.maximum(xe @ w.T + b, 0.0)
    xe_rep = jnp.broadcast_to(xe[:, None, :], (B, T, xe.shape[-1]))
    x_merge = jnp.concatenate([xs, xe_rep], axis=-1)
    w, b = params['i2h']
    out = x_merge @ w.T + b
    for i, block in enumerate(params['rnn_blocks']):
        layer_in = out
        for lp in block:
            layer_in = _lstm_layer_ref(layer_in, *lp)
        out = out + layer_in if i < n_blocks - 1 else layer_in
    w, b = params['h2o']
    return out @ w.T + b


# ----------------------------------- main ----------------------------------------

if __name__ == "__main__":
    opts = MODEL_OPTS
    B, T = 2, 8
    key = jax.random.PRNGKey(0)
    k_p, k_s, k_e = jax.random.split(key, 3)

    params = init_params(k_p, opts)
    prep = prepare_params(params, opts)           # one-time weight layout prep
    x_stats = jax.random.normal(k_s, (B, T, opts['input_size_rnn']), jnp.float32)
    x_embeds = jax.random.normal(k_e, (B, opts['num_units_embed'][0]), jnp.float32)

    fwd = jax.jit(functools.partial(seq2seq_forward, opts=opts))
    out = fwd(prep, x_stats, x_embeds)
    out = jax.block_until_ready(out)

    ref = seq2seq_forward_ref(params, x_stats, x_embeds, opts)
    assert out.shape == (B, T, opts['output_size_rnn'])
    assert jnp.allclose(out, ref, rtol=1e-4, atol=1e-4), "mismatch vs pure-JAX reference"

    # TODO(synk): training-mode Dropout and the autoregressive `predicting` branch
    # (data['num_predict']) are not exercised here; eval-mode forward only.
    print("KERNEL_OK")
</pallas_src>

<mosaic_0001>
module attributes {stable_mosaic.version = 11 : i64} {
  func.func @_fused_seq2seq_kernel(%arg0: memref<64x4xf32, #tpu.memory_space<vmem>>, %arg1: memref<8x6xf32, #tpu.memory_space<vmem>>, %arg2: memref<1x4xf32, #tpu.memory_space<vmem>>, %arg3: memref<1x4xf32, #tpu.memory_space<vmem>>, %arg4: memref<1x6xf32, #tpu.memory_space<vmem>>, %arg5: memref<1x6xf32, #tpu.memory_space<vmem>>, %arg6: memref<6x16xf32, #tpu.memory_space<vmem>>, %arg7: memref<1x16xf32, #tpu.memory_space<vmem>>, %arg8: memref<16x8xf32, #tpu.memory_space<vmem>>, %arg9: memref<1x8xf32, #tpu.memory_space<vmem>>, %arg10: memref<4x32xf32, #tpu.memory_space<vmem>>, %arg11: memref<8x32xf32, #tpu.memory_space<vmem>>, %arg12: memref<1x32xf32, #tpu.memory_space<vmem>>, %arg13: memref<32x128xf32, #tpu.memory_space<vmem>>, %arg14: memref<32x128xf32, #tpu.memory_space<vmem>>, %arg15: memref<1x128xf32, #tpu.memory_space<vmem>>, %arg16: memref<32x128xf32, #tpu.memory_space<vmem>>, %arg17: memref<32x128xf32, #tpu.memory_space<vmem>>, %arg18: memref<1x128xf32, #tpu.memory_space<vmem>>, %arg19: memref<32x128xf32, #tpu.memory_space<vmem>>, %arg20: memref<32x128xf32, #tpu.memory_space<vmem>>, %arg21: memref<1x128xf32, #tpu.memory_space<vmem>>, %arg22: memref<32x128xf32, #tpu.memory_space<vmem>>, %arg23: memref<32x128xf32, #tpu.memory_space<vmem>>, %arg24: memref<1x128xf32, #tpu.memory_space<vmem>>, %arg25: memref<32x4xf32, #tpu.memory_space<vmem>>, %arg26: memref<1x4xf32, #tpu.memory_space<vmem>>, %arg27: memref<64x4xf32, #tpu.memory_space<vmem>>) attributes {dimension_semantics = [], scalar_prefetch = 0 : i64, scratch_operands = 0 : i64, tpu.core_type = #tpu.core_type<tc>} {
    %c0 = arith.constant 0 : index
    %c0_0 = arith.constant 0 : index
    %0 = vector.load %arg0[%c0, %c0_0] : memref<64x4xf32, #tpu.memory_space<vmem>>, vector<64x4xf32>
    %c0_1 = arith.constant 0 : index
    %c0_2 = arith.constant 0 : index
    %1 = vector.load %arg2[%c0_1, %c0_2] : memref<1x4xf32, #tpu.memory_space<vmem>>, vector<1x4xf32>
    %2 = vector.broadcast %1 : vector<1x4xf32> to vector<64x4xf32>
    %3 = arith.subf %0, %2 : vector<64x4xf32>
    %c0_3 = arith.constant 0 : index
    %c0_4 = arith.constant 0 : index
    %4 = vector.load %arg3[%c0_3, %c0_4] : memref<1x4xf32, #tpu.memory_space<vmem>>, vector<1x4xf32>
    %5 = vector.broadcast %4 : vector<1x4xf32> to vector<64x4xf32>
    %6 = arith.mulf %3, %5 : vector<64x4xf32>
    %c0_5 = arith.constant 0 : index
    %c0_6 = arith.constant 0 : index
    %7 = vector.load %arg1[%c0_5, %c0_6] : memref<8x6xf32, #tpu.memory_space<vmem>>, vector<8x6xf32>
    %c0_7 = arith.constant 0 : index
    %c0_8 = arith.constant 0 : index
    %8 = vector.load %arg4[%c0_7, %c0_8] : memref<1x6xf32, #tpu.memory_space<vmem>>, vector<1x6xf32>
    %9 = vector.broadcast %8 : vector<1x6xf32> to vector<8x6xf32>
    %10 = arith.subf %7, %9 : vector<8x6xf32>
    %c0_9 = arith.constant 0 : index
    %c0_10 = arith.constant 0 : index
    %11 = vector.load %arg5[%c0_9, %c0_10] : memref<1x6xf32, #tpu.memory_space<vmem>>, vector<1x6xf32>
    %12 = vector.broadcast %11 : vector<1x6xf32> to vector<8x6xf32>
    %13 = arith.mulf %10, %12 : vector<8x6xf32>
    %c0_11 = arith.constant 0 : index
    %c0_12 = arith.constant 0 : index
    %14 = vector.load %arg6[%c0_11, %c0_12] : memref<6x16xf32, #tpu.memory_space<vmem>>, vector<6x16xf32>
    %cst = arith.constant dense<0.000000e+00> : vector<8x16xf32>
    %15 = tpu.matmul %13, %14, %cst {dimension_numbers = #tpu.dot_dimension_numbers<[1], [0], [0], [1], [0, 0, 1, 1], [], []>} : vector<8x6xf32>, vector<6x16xf32>, vector<8x16xf32> -> vector<8x16xf32>
    %c0_13 = arith.constant 0 : index
    %c0_14 = arith.constant 0 : index
    %16 = vector.load %arg7[%c0_13, %c0_14] : memref<1x16xf32, #tpu.memory_space<vmem>>, vector<1x16xf32>
    %17 = vector.broadcast %16 : vector<1x16xf32> to vector<8x16xf32>
    %18 = arith.addf %15, %17 : vector<8x16xf32>
    %cst_15 = arith.constant 0.000000e+00 : f32
    %19 = vector.broadcast %cst_15 : f32 to vector<8x16xf32>
    %20 = arith.maximumf %18, %19 : vector<8x16xf32>
    %c0_16 = arith.constant 0 : index
    %c0_17 = arith.constant 0 : index
    %21 = vector.load %arg8[%c0_16, %c0_17] : memref<16x8xf32, #tpu.memory_space<vmem>>, vector<16x8xf32>
    %cst_18 = arith.constant dense<0.000000e+00> : vector<8x8xf32>
    %22 = tpu.matmul %20, %21, %cst_18 {dimension_numbers = #tpu.dot_dimension_numbers<[1], [0], [0], [1], [0, 0, 1, 1], [], []>} : vector<8x16xf32>, vector<16x8xf32>, vector<8x8xf32> -> vector<8x8xf32>
    %c0_19 = arith.constant 0 : index
    %c0_20 = arith.constant 0 : index
    %23 = vector.load %arg9[%c0_19, %c0_20] : memref<1x8xf32, #tpu.memory_space<vmem>>, vector<1x8xf32>
    %24 = vector.broadcast %23 : vector<1x8xf32> to vector<8x8xf32>
    %25 = arith.addf %22, %24 : vector<8x8xf32>
    %cst_21 = arith.constant 0.000000e+00 : f32
    %26 = vector.broadcast %cst_21 : f32 to vector<8x8xf32>
    %27 = arith.maximumf %25, %26 : vector<8x8xf32>
    %c0_22 = arith.constant 0 : index
    %c0_23 = arith.constant 0 : index
    %28 = vector.load %arg10[%c0_22, %c0_23] : memref<4x32xf32, #tpu.memory_space<vmem>>, vector<4x32xf32>
    %cst_24 = arith.constant dense<0.000000e+00> : vector<64x32xf32>
    %29 = tpu.matmul %6, %28, %cst_24 {dimension_numbers = #tpu.dot_dimension_numbers<[1], [0], [0], [1], [0, 0, 1, 1], [], []>} : vector<64x4xf32>, vector<4x32xf32>, vector<64x32xf32> -> vector<64x32xf32>
    %c0_25 = arith.constant 0 : index
    %c0_26 = arith.constant 0 : index
    %30 = vector.load %arg11[%c0_25, %c0_26] : memref<8x32xf32, #tpu.memory_space<vmem>>, vector<8x32xf32>
    %cst_27 = arith.constant dense<0.000000e+00> : vector<8x32xf32>
    %31 = tpu.matmul %27, %30, %cst_27 {dimension_numbers = #tpu.dot_dimension_numbers<[1], [0], [0], [1], [0, 0, 1, 1], [], []>} : vector<8x8xf32>, vector<8x32xf32>, vector<8x32xf32> -> vector<8x32xf32>
    %c0_28 = arith.constant 0 : index
    %c0_29 = arith.constant 0 : index
    %32 = vector.load %arg12[%c0_28, %c0_29] : memref<1x32xf32, #tpu.memory_space<vmem>>, vector<1x32xf32>
    %33 = vector.broadcast %32 : vector<1x32xf32> to vector<8x32xf32>
    %34 = arith.addf %31, %33 : vector<8x32xf32>
    %35 = tpu.concatenate %34, %34, %34, %34, %34, %34, %34, %34 in 0 : vector<8x32xf32>, vector<8x32xf32>, vector<8x32xf32>, vector<8x32xf32>, vector<8x32xf32>, vector<8x32xf32>, vector<8x32xf32>, vector<8x32xf32> -> vector<64x32xf32>
    %36 = arith.addf %29, %35 : vector<64x32xf32>
    %c0_30 = arith.constant 0 : index
    %c0_31 = arith.constant 0 : index
    %37 = vector.load %arg13[%c0_30, %c0_31] : memref<32x128xf32, #tpu.memory_space<vmem>>, vector<32x128xf32>
    %c0_32 = arith.constant 0 : index
    %c0_33 = arith.constant 0 : index
    %38 = vector.load %arg14[%c0_32, %c0_33] : memref<32x128xf32, #tpu.memory_space<vmem>>, vector<32x128xf32>
    %c0_34 = arith.constant 0 : index
    %c0_35 = arith.constant 0 : index
    %39 = vector.load %arg15[%c0_34, %c0_35] : memref<1x128xf32, #tpu.memory_space<vmem>>, vector<1x128xf32>
    %cst_36 = arith.constant dense<0.000000e+00> : vector<64x128xf32>
    %40 = tpu.matmul %36, %37, %cst_36 {dimension_numbers = #tpu.dot_dimension_numbers<[1], [0], [0], [1], [0, 0, 1, 1], [], []>} : vector<64x32xf32>, vector<32x128xf32>, vector<64x128xf32> -> vector<64x128xf32>
    %41 = vector.broadcast %39 : vector<1x128xf32> to vector<64x128xf32>
    %42 = arith.addf %40, %41 : vector<64x128xf32>
    %cst_37 = arith.constant 0.000000e+00 : f32
    %43 = vector.broadcast %cst_37 : f32 to vector<8x32xf32>
    %cst_38 = arith.constant 0.000000e+00 : f32
    %44 = vector.broadcast %cst_38 : f32 to vector<8x32xf32>
    %45 = vector.extract_strided_slice %42 {offsets = [0, 0], sizes = [8, 128], strides = [1, 1]} : vector<64x128xf32> to vector<8x128xf32>
    %cst_39 = arith.constant dense<0.000000e+00> : vector<8x128xf32>
    %46 = tpu.matmul %43, %38, %cst_39 {dimension_numbers = #tpu.dot_dimension_numbers<[1], [0], [0], [1], [0, 0, 1, 1], [], []>} : vector<8x32xf32>, vector<32x128xf32>, vector<8x128xf32> -> vector<8x128xf32>
    %47 = arith.addf %45, %46 : vector<8x128xf32>
    %48 = vector.extract_strided_slice %47 {offsets = [0, 0], sizes = [8, 96], strides = [1, 1]} : vector<8x128xf32> to vector<8x96xf32>
    %49 = arith.negf %48 : vector<8x96xf32>
    %50 = math.exp %49 : vector<8x96xf32>
    %cst_40 = arith.constant 1.000000e+00 : f32
    %51 = vector.broadcast %cst_40 : f32 to vector<8x96xf32>
    %52 = arith.addf %51, %50 : vector<8x96xf32>
    %53 = arith.divf %51, %52 : vector<8x96xf32>
    %54 = vector.extract_strided_slice %47 {offsets = [0, 96], sizes = [8, 32], strides = [1, 1]} : vector<8x128xf32> to vector<8x32xf32>
    %55 = math.tanh %54 : vector<8x32xf32>
    %56 = vector.extract_strided_slice %53 {offsets = [0, 0], sizes = [8, 32], strides = [1, 1]} : vector<8x96xf32> to vector<8x32xf32>
    %57 = vector.extract_strided_slice %53 {offsets = [0, 32], sizes = [8, 32], strides = [1, 1]} : vector<8x96xf32> to vector<8x32xf32>
    %58 = vector.extract_strided_slice %53 {offsets = [0, 64], sizes = [8, 32], strides = [1, 1]} : vector<8x96xf32> to vector<8x32xf32>
    %59 = arith.mulf %57, %44 : vector<8x32xf32>
    %60 = arith.mulf %56, %55 : vector<8x32xf32>
    %61 = arith.addf %59, %60 : vector<8x32xf32>
    %62 = math.tanh %61 : vector<8x32xf32>
    %63 = arith.mulf %58, %62 : vector<8x32xf32>
    %64 = vector.extract_strided_slice %42 {offsets = [8, 0], sizes = [8, 128], strides = [1, 1]} : vector<64x128xf32> to vector<8x128xf32>
    %cst_41 = arith.constant dense<0.000000e+00> : vector<8x128xf32>
    %65 = tpu.matmul %63, %38, %cst_41 {dimension_numbers = #tpu.dot_dimension_numbers<[1], [0], [0], [1], [0, 0, 1, 1], [], []>} : vector<8x32xf32>, vector<32x128xf32>, vector<8x128xf32> -> vector<8x128xf32>
    %66 = arith.addf %64, %65 : vector<8x128xf32>
    %67 = vector.extract_strided_slice %66 {offsets = [0, 0], sizes = [8, 96], strides = [1, 1]} : vector<8x128xf32> to vector<8x96xf32>
    %68 = arith.negf %67 : vector<8x96xf32>
    %69 = math.exp %68 : vector<8x96xf32>
    %cst_42 = arith.constant 1.000000e+00 : f32
    %70 = vector.broadcast %cst_42 : f32 to vector<8x96xf32>
    %71 = arith.addf %70, %69 : vector<8x96xf32>
    %72 = arith.divf %70, %71 : vector<8x96xf32>
    %73 = vector.extract_strided_slice %66 {offsets = [0, 96], sizes = [8, 32], strides = [1, 1]} : vector<8x128xf32> to vector<8x32xf32>
    %74 = math.tanh %73 : vector<8x32xf32>
    %75 = vector.extract_strided_slice %72 {offsets = [0, 0], sizes = [8, 32], strides = [1, 1]} : vector<8x96xf32> to vector<8x32xf32>
    %76 = vector.extract_strided_slice %72 {offsets = [0, 32], sizes = [8, 32], strides = [1, 1]} : vector<8x96xf32> to vector<8x32xf32>
    %77 = vector.extract_strided_slice %72 {offsets = [0, 64], sizes = [8, 32], strides = [1, 1]} : vector<8x96xf32> to vector<8x32xf32>
    %78 = arith.mulf %76, %61 : vector<8x32xf32>
    %79 = arith.mulf %75, %74 : vector<8x32xf32>
    %80 = arith.addf %78, %79 : vector<8x32xf32>
    %81 = math.tanh %80 : vector<8x32xf32>
    %82 = arith.mulf %77, %81 : vector<8x32xf32>
    %83 = vector.extract_strided_slice %42 {offsets = [16, 0], sizes = [8, 128], strides = [1, 1]} : vector<64x128xf32> to vector<8x128xf32>
    %cst_43 = arith.constant dense<0.000000e+00> : vector<8x128xf32>
    %84 = tpu.matmul %82, %38, %cst_43 {dimension_numbers = #tpu.dot_dimension_numbers<[1], [0], [0], [1], [0, 0, 1, 1], [], []>} : vector<8x32xf32>, vector<32x128xf32>, vector<8x128xf32> -> vector<8x128xf32>
    %85 = arith.addf %83, %84 : vector<8x128xf32>
    %86 = vector.extract_strided_slice %85 {offsets = [0, 0], sizes = [8, 96], strides = [1, 1]} : vector<8x128xf32> to vector<8x96xf32>
    %87 = arith.negf %86 : vector<8x96xf32>
    %88 = math.exp %87 : vector<8x96xf32>
    %cst_44 = arith.constant 1.000000e+00 : f32
    %89 = vector.broadcast %cst_44 : f32 to vector<8x96xf32>
    %90 = arith.addf %89, %88 : vector<8x96xf32>
    %91 = arith.divf %89, %90 : vector<8x96xf32>
    %92 = vector.extract_strided_slice %85 {offsets = [0, 96], sizes = [8, 32], strides = [1, 1]} : vector<8x128xf32> to vector<8x32xf32>
    %93 = math.tanh %92 : vector<8x32xf32>
    %94 = vector.extract_strided_slice %91 {offsets = [0, 0], sizes = [8, 32], strides = [1, 1]} : vector<8x96xf32> to vector<8x32xf32>
    %95 = vector.extract_strided_slice %91 {offsets = [0, 32], sizes = [8, 32], strides = [1, 1]} : vector<8x96xf32> to vector<8x32xf32>
    %96 = vector.extract_strided_slice %91 {offsets = [0, 64], sizes = [8, 32], strides = [1, 1]} : vector<8x96xf32> to vector<8x32xf32>
    %97 = arith.mulf %95, %80 : vector<8x32xf32>
    %98 = arith.mulf %94, %93 : vector<8x32xf32>
    %99 = arith.addf %97, %98 : vector<8x32xf32>
    %100 = math.tanh %99 : vector<8x32xf32>
    %101 = arith.mulf %96, %100 : vector<8x32xf32>
    %102 = vector.extract_strided_slice %42 {offsets = [24, 0], sizes = [8, 128], strides = [1, 1]} : vector<64x128xf32> to vector<8x128xf32>
    %cst_45 = arith.constant dense<0.000000e+00> : vector<8x128xf32>
    %103 = tpu.matmul %101, %38, %cst_45 {dimension_numbers = #tpu.dot_dimension_numbers<[1], [0], [0], [1], [0, 0, 1, 1], [], []>} : vector<8x32xf32>, vector<32x128xf32>, vector<8x128xf32> -> vector<8x128xf32>
    %104 = arith.addf %102, %103 : vector<8x128xf32>
    %105 = vector.extract_strided_slice %104 {offsets = [0, 0], sizes = [8, 96], strides = [1, 1]} : vector<8x128xf32> to vector<8x96xf32>
    %106 = arith.negf %105 : vector<8x96xf32>
    %107 = math.exp %106 : vector<8x96xf32>
    %cst_46 = arith.constant 1.000000e+00 : f32
    %108 = vector.broadcast %cst_46 : f32 to vector<8x96xf32>
    %109 = arith.addf %108, %107 : vector<8x96xf32>
    %110 = arith.divf %108, %109 : vector<8x96xf32>
    %111 = vector.extract_strided_slice %104 {offsets = [0, 96], sizes = [8, 32], strides = [1, 1]} : vector<8x128xf32> to vector<8x32xf32>
    %112 = math.tanh %111 : vector<8x32xf32>
    %113 = vector.extract_strided_slice %110 {offsets = [0, 0], sizes = [8, 32], strides = [1, 1]} : vector<8x96xf32> to vector<8x32xf32>
    %114 = vector.extract_strided_slice %110 {offsets = [0, 32], sizes = [8, 32], strides = [1, 1]} : vector<8x96xf32> to vector<8x32xf32>
    %115 = vector.extract_strided_slice %110 {offsets = [0, 64], sizes = [8, 32], strides = [1, 1]} : vector<8x96xf32> to vector<8x32xf32>
    %116 = arith.mulf %114, %99 : vector<8x32xf32>
    %117 = arith.mulf %113, %112 : vector<8x32xf32>
    %118 = arith.addf %116, %117 : vector<8x32xf32>
    %119 = math.tanh %118 : vector<8x32xf32>
    %120 = arith.mulf %115, %119 : vector<8x32xf32>
    %121 = vector.extract_strided_slice %42 {offsets = [32, 0], sizes = [8, 128], strides = [1, 1]} : vector<64x128xf32> to vector<8x128xf32>
    %cst_47 = arith.constant dense<0.000000e+00> : vector<8x128xf32>
    %122 = tpu.matmul %120, %38, %cst_47 {dimension_numbers = #tpu.dot_dimension_numbers<[1], [0], [0], [1], [0, 0, 1, 1], [], []>} : vector<8x32xf32>, vector<32x128xf32>, vector<8x128xf32> -> vector<8x128xf32>
    %123 = arith.addf %121, %122 : vector<8x128xf32>
    %124 = vector.extract_strided_slice %123 {offsets = [0, 0], sizes = [8, 96], strides = [1, 1]} : vector<8x128xf32> to vector<8x96xf32>
    %125 = arith.negf %124 : vector<8x96xf32>
    %126 = math.exp %125 : vector<8x96xf32>
    %cst_48 = arith.constant 1.000000e+00 : f32
    %127 = vector.broadcast %cst_48 : f32 to vector<8x96xf32>
    %128 = arith.addf %127, %126 : vector<8x96xf32>
    %129 = arith.divf %127, %128 : vector<8x96xf32>
    %130 = vector.extract_strided_slice %123 {offsets = [0, 96], sizes = [8, 32], strides = [1, 1]} : vector<8x128xf32> to vector<8x32xf32>
    %131 = math.tanh %130 : vector<8x32xf32>
    %132 = vector.extract_strided_slice %129 {offsets = [0, 0], sizes = [8, 32], strides = [1, 1]} : vector<8x96xf32> to vector<8x32xf32>
    %133 = vector.extract_strided_slice %129 {offsets = [0, 32], sizes = [8, 32], strides = [1, 1]} : vector<8x96xf32> to vector<8x32xf32>
    %134 = vector.extract_strided_slice %129 {offsets = [0, 64], sizes = [8, 32], strides = [1, 1]} : vector<8x96xf32> to vector<8x32xf32>
    %135 = arith.mulf %133, %118 : vector<8x32xf32>
    %136 = arith.mulf %132, %131 : vector<8x32xf32>
    %137 = arith.addf %135, %136 : vector<8x32xf32>
    %138 = math.tanh %137 : vector<8x32xf32>
    %139 = arith.mulf %134, %138 : vector<8x32xf32>
    %140 = vector.extract_strided_slice %42 {offsets = [40, 0], sizes = [8, 128], strides = [1, 1]} : vector<64x128xf32> to vector<8x128xf32>
    %cst_49 = arith.constant dense<0.000000e+00> : vector<8x128xf32>
    %141 = tpu.matmul %139, %38, %cst_49 {dimension_numbers = #tpu.dot_dimension_numbers<[1], [0], [0], [1], [0, 0, 1, 1], [], []>} : vector<8x32xf32>, vector<32x128xf32>, vector<8x128xf32> -> vector<8x128xf32>
    %142 = arith.addf %140, %141 : vector<8x128xf32>
    %143 = vector.extract_strided_slice %142 {offsets = [0, 0], sizes = [8, 96], strides = [1, 1]} : vector<8x128xf32> to vector<8x96xf32>
    %144 = arith.negf %143 : vector<8x96xf32>
    %145 = math.exp %144 : vector<8x96xf32>
    %cst_50 = arith.constant 1.000000e+00 : f32
    %146 = vector.broadcast %cst_50 : f32 to vector<8x96xf32>
    %147 = arith.addf %146, %145 : vector<8x96xf32>
    %148 = arith.divf %146, %147 : vector<8x96xf32>
    %149 = vector.extract_strided_slice %142 {offsets = [0, 96], sizes = [8, 32], strides = [1, 1]} : vector<8x128xf32> to vector<8x32xf32>
    %150 = math.tanh %149 : vector<8x32xf32>
    %151 = vector.extract_strided_slice %148 {offsets = [0, 0], sizes = [8, 32], strides = [1, 1]} : vector<8x96xf32> to vector<8x32xf32>
    %152 = vector.extract_strided_slice %148 {offsets = [0, 32], sizes = [8, 32], strides = [1, 1]} : vector<8x96xf32> to vector<8x32xf32>
    %153 = vector.extract_strided_slice %148 {offsets = [0, 64], sizes = [8, 32], strides = [1, 1]} : vector<8x96xf32> to vector<8x32xf32>
    %154 = arith.mulf %152, %137 : vector<8x32xf32>
    %155 = arith.mulf %151, %150 : vector<8x32xf32>
    %156 = arith.addf %154, %155 : vector<8x32xf32>
    %157 = math.tanh %156 : vector<8x32xf32>
    %158 = arith.mulf %153, %157 : vector<8x32xf32>
    %159 = vector.extract_strided_slice %42 {offsets = [48, 0], sizes = [8, 128], strides = [1, 1]} : vector<64x128xf32> to vector<8x128xf32>
    %cst_51 = arith.constant dense<0.000000e+00> : vector<8x128xf32>
    %160 = tpu.matmul %158, %38, %cst_51 {dimension_numbers = #tpu.dot_dimension_numbers<[1], [0], [0], [1], [0, 0, 1, 1], [], []>} : vector<8x32xf32>, vector<32x128xf32>, vector<8x128xf32> -> vector<8x128xf32>
    %161 = arith.addf %159, %160 : vector<8x128xf32>
    %162 = vector.extract_strided_slice %161 {offsets = [0, 0], sizes = [8, 96], strides = [1, 1]} : vector<8x128xf32> to vector<8x96xf32>
    %163 = arith.negf %162 : vector<8x96xf32>
    %164 = math.exp %163 : vector<8x96xf32>
    %cst_52 = arith.constant 1.000000e+00 : f32
    %165 = vector.broadcast %cst_52 : f32 to vector<8x96xf32>
    %166 = arith.addf %165, %164 : vector<8x96xf32>
    %167 = arith.divf %165, %166 : vector<8x96xf32>
    %168 = vector.extract_strided_slice %161 {offsets = [0, 96], sizes = [8, 32], strides = [1, 1]} : vector<8x128xf32> to vector<8x32xf32>
    %169 = math.tanh %168 : vector<8x32xf32>
    %170 = vector.extract_strided_slice %167 {offsets = [0, 0], sizes = [8, 32], strides = [1, 1]} : vector<8x96xf32> to vector<8x32xf32>
    %171 = vector.extract_strided_slice %167 {offsets = [0, 32], sizes = [8, 32], strides = [1, 1]} : vector<8x96xf32> to vector<8x32xf32>
    %172 = vector.extract_strided_slice %167 {offsets = [0, 64], sizes = [8, 32], strides = [1, 1]} : vector<8x96xf32> to vector<8x32xf32>
    %173 = arith.mulf %171, %156 : vector<8x32xf32>
    %174 = arith.mulf %170, %169 : vector<8x32xf32>
    %175 = arith.addf %173, %174 : vector<8x32xf32>
    %176 = math.tanh %175 : vector<8x32xf32>
    %177 = arith.mulf %172, %176 : vector<8x32xf32>
    %178 = vector.extract_strided_slice %42 {offsets = [56, 0], sizes = [8, 128], strides = [1, 1]} : vector<64x128xf32> to vector<8x128xf32>
    %cst_53 = arith.constant dense<0.000000e+00> : vector<8x128xf32>
    %179 = tpu.matmul %177, %38, %cst_53 {dimension_numbers = #tpu.dot_dimension_numbers<[1], [0], [0], [1], [0, 0, 1, 1], [], []>} : vector<8x32xf32>, vector<32x128xf32>, vector<8x128xf32> -> vector<8x128xf32>
    %180 = arith.addf %178, %179 : vector<8x128xf32>
    %181 = vector.extract_strided_slice %180 {offsets = [0, 0], sizes = [8, 96], strides = [1, 1]} : vector<8x128xf32> to vector<8x96xf32>
    %182 = arith.negf %181 : vector<8x96xf32>
    %183 = math.exp %182 : vector<8x96xf32>
    %cst_54 = arith.constant 1.000000e+00 : f32
    %184 = vector.broadcast %cst_54 : f32 to vector<8x96xf32>
    %185 = arith.addf %184, %183 : vector<8x96xf32>
    %186 = arith.divf %184, %185 : vector<8x96xf32>
    %187 = vector.extract_strided_slice %180 {offsets = [0, 96], sizes = [8, 32], strides = [1, 1]} : vector<8x128xf32> to vector<8x32xf32>
    %188 = math.tanh %187 : vector<8x32xf32>
    %189 = vector.extract_strided_slice %186 {offsets = [0, 0], sizes = [8, 32], strides = [1, 1]} : vector<8x96xf32> to vector<8x32xf32>
    %190 = vector.extract_strided_slice %186 {offsets = [0, 32], sizes = [8, 32], strides = [1, 1]} : vector<8x96xf32> to vector<8x32xf32>
    %191 = vector.extract_strided_slice %186 {offsets = [0, 64], sizes = [8, 32], strides = [1, 1]} : vector<8x96xf32> to vector<8x32xf32>
    %192 = arith.mulf %190, %175 : vector<8x32xf32>
    %193 = arith.mulf %189, %188 : vector<8x32xf32>
    %194 = arith.addf %192, %193 : vector<8x32xf32>
    %195 = math.tanh %194 : vector<8x32xf32>
    %196 = arith.mulf %191, %195 : vector<8x32xf32>
    %197 = tpu.concatenate %63, %82, %101, %120, %139, %158, %177, %196 in 0 : vector<8x32xf32>, vector<8x32xf32>, vector<8x32xf32>, vector<8x32xf32>, vector<8x32xf32>, vector<8x32xf32>, vector<8x32xf32>, vector<8x32xf32> -> vector<64x32xf32>
    %c0_55 = arith.constant 0 : index
    %c0_56 = arith.constant 0 : index
    %198 = vector.load %arg16[%c0_55, %c0_56] : memref<32x128xf32, #tpu.memory_space<vmem>>, vector<32x128xf32>
    %c0_57 = arith.constant 0 : index
    %c0_58 = arith.constant 0 : index
    %199 = vector.load %arg17[%c0_57, %c0_58] : memref<32x128xf32, #tpu.memory_space<vmem>>, vector<32x128xf32>
    %c0_59 = arith.constant 0 : index
    %c0_60 = arith.constant 0 : index
    %200 = vector.load %arg18[%c0_59, %c0_60] : memref<1x128xf32, #tpu.memory_space<vmem>>, vector<1x128xf32>
    %cst_61 = arith.constant dense<0.000000e+00> : vector<64x128xf32>
    %201 = tpu.matmul %197, %198, %cst_61 {dimension_numbers = #tpu.dot_dimension_numbers<[1], [0], [0], [1], [0, 0, 1, 1], [], []>} : vector<64x32xf32>, vector<32x128xf32>, vector<64x128xf32> -> vector<64x128xf32>
    %202 = vector.broadcast %200 : vector<1x128xf32> to vector<64x128xf32>
    %203 = arith.addf %201, %202 : vector<64x128xf32>
    %cst_62 = arith.constant 0.000000e+00 : f32
    %204 = vector.broadcast %cst_62 : f32 to vector<8x32xf32>
    %cst_63 = arith.constant 0.000000e+00 : f32
    %205 = vector.broadcast %cst_63 : f32 to vector<8x32xf32>
    %206 = vector.extract_strided_slice %203 {offsets = [0, 0], sizes = [8, 128], strides = [1, 1]} : vector<64x128xf32> to vector<8x128xf32>
    %cst_64 = arith.constant dense<0.000000e+00> : vector<8x128xf32>
    %207 = tpu.matmul %204, %199, %cst_64 {dimension_numbers = #tpu.dot_dimension_numbers<[1], [0], [0], [1], [0, 0, 1, 1], [], []>} : vector<8x32xf32>, vector<32x128xf32>, vector<8x128xf32> -> vector<8x128xf32>
    %208 = arith.addf %206, %207 : vector<8x128xf32>
    %209 = vector.extract_strided_slice %208 {offsets = [0, 0], sizes = [8, 96], strides = [1, 1]} : vector<8x128xf32> to vector<8x96xf32>
    %210 = arith.negf %209 : vector<8x96xf32>
    %211 = math.exp %210 : vector<8x96xf32>
    %cst_65 = arith.constant 1.000000e+00 : f32
    %212 = vector.broadcast %cst_65 : f32 to vector<8x96xf32>
    %213 = arith.addf %212, %211 : vector<8x96xf32>
    %214 = arith.divf %212, %213 : vector<8x96xf32>
    %215 = vector.extract_strided_slice %208 {offsets = [0, 96], sizes = [8, 32], strides = [1, 1]} : vector<8x128xf32> to vector<8x32xf32>
    %216 = math.tanh %215 : vector<8x32xf32>
    %217 = vector.extract_strided_slice %214 {offsets = [0, 0], sizes = [8, 32], strides = [1, 1]} : vector<8x96xf32> to vector<8x32xf32>
    %218 = vector.extract_strided_slice %214 {offsets = [0, 32], sizes = [8, 32], strides = [1, 1]} : vector<8x96xf32> to vector<8x32xf32>
    %219 = vector.extract_strided_slice %214 {offsets = [0, 64], sizes = [8, 32], strides = [1, 1]} : vector<8x96xf32> to vector<8x32xf32>
    %220 = arith.mulf %218, %205 : vector<8x32xf32>
    %221 = arith.mulf %217, %216 : vector<8x32xf32>
    %222 = arith.addf %220, %221 : vector<8x32xf32>
    %223 = math.tanh %222 : vector<8x32xf32>
    %224 = arith.mulf %219, %223 : vector<8x32xf32>
    %225 = vector.extract_strided_slice %203 {offsets = [8, 0], sizes = [8, 128], strides = [1, 1]} : vector<64x128xf32> to vector<8x128xf32>
    %cst_66 = arith.constant dense<0.000000e+00> : vector<8x128xf32>
    %226 = tpu.matmul %224, %199, %cst_66 {dimension_numbers = #tpu.dot_dimension_numbers<[1], [0], [0], [1], [0, 0, 1, 1], [], []>} : vector<8x32xf32>, vector<32x128xf32>, vector<8x128xf32> -> vector<8x128xf32>
    %227 = arith.addf %225, %226 : vector<8x128xf32>
    %228 = vector.extract_strided_slice %227 {offsets = [0, 0], sizes = [8, 96], strides = [1, 1]} : vector<8x128xf32> to vector<8x96xf32>
    %229 = arith.negf %228 : vector<8x96xf32>
    %230 = math.exp %229 : vector<8x96xf32>
    %cst_67 = arith.constant 1.000000e+00 : f32
    %231 = vector.broadcast %cst_67 : f32 to vector<8x96xf32>
    %232 = arith.addf %231, %230 : vector<8x96xf32>
    %233 = arith.divf %231, %232 : vector<8x96xf32>
    %234 = vector.extract_strided_slice %227 {offsets = [0, 96], sizes = [8, 32], strides = [1, 1]} : vector<8x128xf32> to vector<8x32xf32>
    %235 = math.tanh %234 : vector<8x32xf32>
    %236 = vector.extract_strided_slice %233 {offsets = [0, 0], sizes = [8, 32], strides = [1, 1]} : vector<8x96xf32> to vector<8x32xf32>
    %237 = vector.extract_strided_slice %233 {offsets = [0, 32], sizes = [8, 32], strides = [1, 1]} : vector<8x96xf32> to vector<8x32xf32>
    %238 = vector.extract_strided_slice %233 {offsets = [0, 64], sizes = [8, 32], strides = [1, 1]} : vector<8x96xf32> to vector<8x32xf32>
    %239 = arith.mulf %237, %222 : vector<8x32xf32>
    %240 = arith.mulf %236, %235 : vector<8x32xf32>
    %241 = arith.addf %239, %240 : vector<8x32xf32>
    %242 = math.tanh %241 : vector<8x32xf32>
    %243 = arith.mulf %238, %242 : vector<8x32xf32>
    %244 = vector.extract_strided_slice %203 {offsets = [16, 0], sizes = [8, 128], strides = [1, 1]} : vector<64x128xf32> to vector<8x128xf32>
    %cst_68 = arith.constant dense<0.000000e+00> : vector<8x128xf32>
    %245 = tpu.matmul %243, %199, %cst_68 {dimension_numbers = #tpu.dot_dimension_numbers<[1], [0], [0], [1], [0, 0, 1, 1], [], []>} : vector<8x32xf32>, vector<32x128xf32>, vector<8x128xf32> -> vector<8x128xf32>
    %246 = arith.addf %244, %245 : vector<8x128xf32>
    %247 = vector.extract_strided_slice %246 {offsets = [0, 0], sizes = [8, 96], strides = [1, 1]} : vector<8x128xf32> to vector<8x96xf32>
    %248 = arith.negf %247 : vector<8x96xf32>
    %249 = math.exp %248 : vector<8x96xf32>
    %cst_69 = arith.constant 1.000000e+00 : f32
    %250 = vector.broadcast %cst_69 : f32 to vector<8x96xf32>
    %251 = arith.addf %250, %249 : vector<8x96xf32>
    %252 = arith.divf %250, %251 : vector<8x96xf32>
    %253 = vector.extract_strided_slice %246 {offsets = [0, 96], sizes = [8, 32], strides = [1, 1]} : vector<8x128xf32> to vector<8x32xf32>
    %254 = math.tanh %253 : vector<8x32xf32>
    %255 = vector.extract_strided_slice %252 {offsets = [0, 0], sizes = [8, 32], strides = [1, 1]} : vector<8x96xf32> to vector<8x32xf32>
    %256 = vector.extract_strided_slice %252 {offsets = [0, 32], sizes = [8, 32], strides = [1, 1]} : vector<8x96xf32> to vector<8x32xf32>
    %257 = vector.extract_strided_slice %252 {offsets = [0, 64], sizes = [8, 32], strides = [1, 1]} : vector<8x96xf32> to vector<8x32xf32>
    %258 = arith.mulf %256, %241 : vector<8x32xf32>
    %259 = arith.mulf %255, %254 : vector<8x32xf32>
    %260 = arith.addf %258, %259 : vector<8x32xf32>
    %261 = math.tanh %260 : vector<8x32xf32>
    %262 = arith.mulf %257, %261 : vector<8x32xf32>
    %263 = vector.extract_strided_slice %203 {offsets = [24, 0], sizes = [8, 128], strides = [1, 1]} : vector<64x128xf32> to vector<8x128xf32>
    %cst_70 = arith.constant dense<0.000000e+00> : vector<8x128xf32>
    %264 = tpu.matmul %262, %199, %cst_70 {dimension_numbers = #tpu.dot_dimension_numbers<[1], [0], [0], [1], [0, 0, 1, 1], [], []>} : vector<8x32xf32>, vector<32x128xf32>, vector<8x128xf32> -> vector<8x128xf32>
    %265 = arith.addf %263, %264 : vector<8x128xf32>
    %266 = vector.extract_strided_slice %265 {offsets = [0, 0], sizes = [8, 96], strides = [1, 1]} : vector<8x128xf32> to vector<8x96xf32>
    %267 = arith.negf %266 : vector<8x96xf32>
    %268 = math.exp %267 : vector<8x96xf32>
    %cst_71 = arith.constant 1.000000e+00 : f32
    %269 = vector.broadcast %cst_71 : f32 to vector<8x96xf32>
    %270 = arith.addf %269, %268 : vector<8x96xf32>
    %271 = arith.divf %269, %270 : vector<8x96xf32>
    %272 = vector.extract_strided_slice %265 {offsets = [0, 96], sizes = [8, 32], strides = [1, 1]} : vector<8x128xf32> to vector<8x32xf32>
    %273 = math.tanh %272 : vector<8x32xf32>
    %274 = vector.extract_strided_slice %271 {offsets = [0, 0], sizes = [8, 32], strides = [1, 1]} : vector<8x96xf32> to vector<8x32xf32>
    %275 = vector.extract_strided_slice %271 {offsets = [0, 32], sizes = [8, 32], strides = [1, 1]} : vector<8x96xf32> to vector<8x32xf32>
    %276 = vector.extract_strided_slice %271 {offsets = [0, 64], sizes = [8, 32], strides = [1, 1]} : vector<8x96xf32> to vector<8x32xf32>
    %277 = arith.mulf %275, %260 : vector<8x32xf32>
    %278 = arith.mulf %274, %273 : vector<8x32xf32>
    %279 = arith.addf %277, %278 : vector<8x32xf32>
    %280 = math.tanh %279 : vector<8x32xf32>
    %281 = arith.mulf %276, %280 : vector<8x32xf32>
    %282 = vector.extract_strided_slice %203 {offsets = [32, 0], sizes = [8, 128], strides = [1, 1]} : vector<64x128xf32> to vector<8x128xf32>
    %cst_72 = arith.constant dense<0.000000e+00> : vector<8x128xf32>
    %283 = tpu.matmul %281, %199, %cst_72 {dimension_numbers = #tpu.dot_dimension_numbers<[1], [0], [0], [1], [0, 0, 1, 1], [], []>} : vector<8x32xf32>, vector<32x128xf32>, vector<8x128xf32> -> vector<8x128xf32>
    %284 = arith.addf %282, %283 : vector<8x128xf32>
    %285 = vector.extract_strided_slice %284 {offsets = [0, 0], sizes = [8, 96], strides = [1, 1]} : vector<8x128xf32> to vector<8x96xf32>
    %286 = arith.negf %285 : vector<8x96xf32>
    %287 = math.exp %286 : vector<8x96xf32>
    %cst_73 = arith.constant 1.000000e+00 : f32
    %288 = vector.broadcast %cst_73 : f32 to vector<8x96xf32>
    %289 = arith.addf %288, %287 : vector<8x96xf32>
    %290 = arith.divf %288, %289 : vector<8x96xf32>
    %291 = vector.extract_strided_slice %284 {offsets = [0, 96], sizes = [8, 32], strides = [1, 1]} : vector<8x128xf32> to vector<8x32xf32>
    %292 = math.tanh %291 : vector<8x32xf32>
    %293 = vector.extract_strided_slice %290 {offsets = [0, 0], sizes = [8, 32], strides = [1, 1]} : vector<8x96xf32> to vector<8x32xf32>
    %294 = vector.extract_strided_slice %290 {offsets = [0, 32], sizes = [8, 32], strides = [1, 1]} : vector<8x96xf32> to vector<8x32xf32>
    %295 = vector.extract_strided_slice %290 {offsets = [0, 64], sizes = [8, 32], strides = [1, 1]} : vector<8x96xf32> to vector<8x32xf32>
    %296 = arith.mulf %294, %279 : vector<8x32xf32>
    %297 = arith.mulf %293, %292 : vector<8x32xf32>
    %298 = arith.addf %296, %297 : vector<8x32xf32>
    %299 = math.tanh %298 : vector<8x32xf32>
    %300 = arith.mulf %295, %299 : vector<8x32xf32>
    %301 = vector.extract_strided_slice %203 {offsets = [40, 0], sizes = [8, 128], strides = [1, 1]} : vector<64x128xf32> to vector<8x128xf32>
    %cst_74 = arith.constant dense<0.000000e+00> : vector<8x128xf32>
    %302 = tpu.matmul %300, %199, %cst_74 {dimension_numbers = #tpu.dot_dimension_numbers<[1], [0], [0], [1], [0, 0, 1, 1], [], []>} : vector<8x32xf32>, vector<32x128xf32>, vector<8x128xf32> -> vector<8x128xf32>
    %303 = arith.addf %301, %302 : vector<8x128xf32>
    %304 = vector.extract_strided_slice %303 {offsets = [0, 0], sizes = [8, 96], strides = [1, 1]} : vector<8x128xf32> to vector<8x96xf32>
    %305 = arith.negf %304 : vector<8x96xf32>
    %306 = math.exp %305 : vector<8x96xf32>
    %cst_75 = arith.constant 1.000000e+00 : f32
    %307 = vector.broadcast %cst_75 : f32 to vector<8x96xf32>
    %308 = arith.addf %307, %306 : vector<8x96xf32>
    %309 = arith.divf %307, %308 : vector<8x96xf32>
    %310 = vector.extract_strided_slice %303 {offsets = [0, 96], sizes = [8, 32], strides = [1, 1]} : vector<8x128xf32> to vector<8x32xf32>
    %311 = math.tanh %310 : vector<8x32xf32>
    %312 = vector.extract_strided_slice %309 {offsets = [0, 0], sizes = [8, 32], strides = [1, 1]} : vector<8x96xf32> to vector<8x32xf32>
    %313 = vector.extract_strided_slice %309 {offsets = [0, 32], sizes = [8, 32], strides = [1, 1]} : vector<8x96xf32> to vector<8x32xf32>
    %314 = vector.extract_strided_slice %309 {offsets = [0, 64], sizes = [8, 32], strides = [1, 1]} : vector<8x96xf32> to vector<8x32xf32>
    %315 = arith.mulf %313, %298 : vector<8x32xf32>
    %316 = arith.mulf %312, %311 : vector<8x32xf32>
    %317 = arith.addf %315, %316 : vector<8x32xf32>
    %318 = math.tanh %317 : vector<8x32xf32>
    %319 = arith.mulf %314, %318 : vector<8x32xf32>
    %320 = vector.extract_strided_slice %203 {offsets = [48, 0], sizes = [8, 128], strides = [1, 1]} : vector<64x128xf32> to vector<8x128xf32>
    %cst_76 = arith.constant dense<0.000000e+00> : vector<8x128xf32>
    %321 = tpu.matmul %319, %199, %cst_76 {dimension_numbers = #tpu.dot_dimension_numbers<[1], [0], [0], [1], [0, 0, 1, 1], [], []>} : vector<8x32xf32>, vector<32x128xf32>, vector<8x128xf32> -> vector<8x128xf32>
    %322 = arith.addf %320, %321 : vector<8x128xf32>
    %323 = vector.extract_strided_slice %322 {offsets = [0, 0], sizes = [8, 96], strides = [1, 1]} : vector<8x128xf32> to vector<8x96xf32>
    %324 = arith.negf %323 : vector<8x96xf32>
    %325 = math.exp %324 : vector<8x96xf32>
    %cst_77 = arith.constant 1.000000e+00 : f32
    %326 = vector.broadcast %cst_77 : f32 to vector<8x96xf32>
    %327 = arith.addf %326, %325 : vector<8x96xf32>
    %328 = arith.divf %326, %327 : vector<8x96xf32>
    %329 = vector.extract_strided_slice %322 {offsets = [0, 96], sizes = [8, 32], strides = [1, 1]} : vector<8x128xf32> to vector<8x32xf32>
    %330 = math.tanh %329 : vector<8x32xf32>
    %331 = vector.extract_strided_slice %328 {offsets = [0, 0], sizes = [8, 32], strides = [1, 1]} : vector<8x96xf32> to vector<8x32xf32>
    %332 = vector.extract_strided_slice %328 {offsets = [0, 32], sizes = [8, 32], strides = [1, 1]} : vector<8x96xf32> to vector<8x32xf32>
    %333 = vector.extract_strided_slice %328 {offsets = [0, 64], sizes = [8, 32], strides = [1, 1]} : vector<8x96xf32> to vector<8x32xf32>
    %334 = arith.mulf %332, %317 : vector<8x32xf32>
    %335 = arith.mulf %331, %330 : vector<8x32xf32>
    %336 = arith.addf %334, %335 : vector<8x32xf32>
    %337 = math.tanh %336 : vector<8x32xf32>
    %338 = arith.mulf %333, %337 : vector<8x32xf32>
    %339 = vector.extract_strided_slice %203 {offsets = [56, 0], sizes = [8, 128], strides = [1, 1]} : vector<64x128xf32> to vector<8x128xf32>
    %cst_78 = arith.constant dense<0.000000e+00> : vector<8x128xf32>
    %340 = tpu.matmul %338, %199, %cst_78 {dimension_numbers = #tpu.dot_dimension_numbers<[1], [0], [0], [1], [0, 0, 1, 1], [], []>} : vector<8x32xf32>, vector<32x128xf32>, vector<8x128xf32> -> vector<8x128xf32>
    %341 = arith.addf %339, %340 : vector<8x128xf32>
    %342 = vector.extract_strided_slice %341 {offsets = [0, 0], sizes = [8, 96], strides = [1, 1]} : vector<8x128xf32> to vector<8x96xf32>
    %343 = arith.negf %342 : vector<8x96xf32>
    %344 = math.exp %343 : vector<8x96xf32>
    %cst_79 = arith.constant 1.000000e+00 : f32
    %345 = vector.broadcast %cst_79 : f32 to vector<8x96xf32>
    %346 = arith.addf %345, %344 : vector<8x96xf32>
    %347 = arith.divf %345, %346 : vector<8x96xf32>
    %348 = vector.extract_strided_slice %341 {offsets = [0, 96], sizes = [8, 32], strides = [1, 1]} : vector<8x128xf32> to vector<8x32xf32>
    %349 = math.tanh %348 : vector<8x32xf32>
    %350 = vector.extract_strided_slice %347 {offsets = [0, 0], sizes = [8, 32], strides = [1, 1]} : vector<8x96xf32> to vector<8x32xf32>
    %351 = vector.extract_strided_slice %347 {offsets = [0, 32], sizes = [8, 32], strides = [1, 1]} : vector<8x96xf32> to vector<8x32xf32>
    %352 = vector.extract_strided_slice %347 {offsets = [0, 64], sizes = [8, 32], strides = [1, 1]} : vector<8x96xf32> to vector<8x32xf32>
    %353 = arith.mulf %351, %336 : vector<8x32xf32>
    %354 = arith.mulf %350, %349 : vector<8x32xf32>
    %355 = arith.addf %353, %354 : vector<8x32xf32>
    %356 = math.tanh %355 : vector<8x32xf32>
    %357 = arith.mulf %352, %356 : vector<8x32xf32>
    %358 = tpu.concatenate %224, %243, %262, %281, %300, %319, %338, %357 in 0 : vector<8x32xf32>, vector<8x32xf32>, vector<8x32xf32>, vector<8x32xf32>, vector<8x32xf32>, vector<8x32xf32>, vector<8x32xf32>, vector<8x32xf32> -> vector<64x32xf32>
    %359 = arith.addf %36, %358 : vector<64x32xf32>
    %c0_80 = arith.constant 0 : index
    %c0_81 = arith.constant 0 : index
    %360 = vector.load %arg19[%c0_80, %c0_81] : memref<32x128xf32, #tpu.memory_space<vmem>>, vector<32x128xf32>
    %c0_82 = arith.constant 0 : index
    %c0_83 = arith.constant 0 : index
    %361 = vector.load %arg20[%c0_82, %c0_83] : memref<32x128xf32, #tpu.memory_space<vmem>>, vector<32x128xf32>
    %c0_84 = arith.constant 0 : index
    %c0_85 = arith.constant 0 : index
    %362 = vector.load %arg21[%c0_84, %c0_85] : memref<1x128xf32, #tpu.memory_space<vmem>>, vector<1x128xf32>
    %cst_86 = arith.constant dense<0.000000e+00> : vector<64x128xf32>
    %363 = tpu.matmul %359, %360, %cst_86 {dimension_numbers = #tpu.dot_dimension_numbers<[1], [0], [0], [1], [0, 0, 1, 1], [], []>} : vector<64x32xf32>, vector<32x128xf32>, vector<64x128xf32> -> vector<64x128xf32>
    %364 = vector.broadcast %362 : vector<1x128xf32> to vector<64x128xf32>
    %365 = arith.addf %363, %364 : vector<64x128xf32>
    %cst_87 = arith.constant 0.000000e+00 : f32
    %366 = vector.broadcast %cst_87 : f32 to vector<8x32xf32>
    %cst_88 = arith.constant 0.000000e+00 : f32
    %367 = vector.broadcast %cst_88 : f32 to vector<8x32xf32>
    %368 = vector.extract_strided_slice %365 {offsets = [0, 0], sizes = [8, 128], strides = [1, 1]} : vector<64x128xf32> to vector<8x128xf32>
    %cst_89 = arith.constant dense<0.000000e+00> : vector<8x128xf32>
    %369 = tpu.matmul %366, %361, %cst_89 {dimension_numbers = #tpu.dot_dimension_numbers<[1], [0], [0], [1], [0, 0, 1, 1], [], []>} : vector<8x32xf32>, vector<32x128xf32>, vector<8x128xf32> -> vector<8x128xf32>
    %370 = arith.addf %368, %369 : vector<8x128xf32>
    %371 = vector.extract_strided_slice %370 {offsets = [0, 0], sizes = [8, 96], strides = [1, 1]} : vector<8x128xf32> to vector<8x96xf32>
    %372 = arith.negf %371 : vector<8x96xf32>
    %373 = math.exp %372 : vector<8x96xf32>
    %cst_90 = arith.constant 1.000000e+00 : f32
    %374 = vector.broadcast %cst_90 : f32 to vector<8x96xf32>
    %375 = arith.addf %374, %373 : vector<8x96xf32>
    %376 = arith.divf %374, %375 : vector<8x96xf32>
    %377 = vector.extract_strided_slice %370 {offsets = [0, 96], sizes = [8, 32], strides = [1, 1]} : vector<8x128xf32> to vector<8x32xf32>
    %378 = math.tanh %377 : vector<8x32xf32>
    %379 = vector.extract_strided_slice %376 {offsets = [0, 0], sizes = [8, 32], strides = [1, 1]} : vector<8x96xf32> to vector<8x32xf32>
    %380 = vector.extract_strided_slice %376 {offsets = [0, 32], sizes = [8, 32], strides = [1, 1]} : vector<8x96xf32> to vector<8x32xf32>
    %381 = vector.extract_strided_slice %376 {offsets = [0, 64], sizes = [8, 32], strides = [1, 1]} : vector<8x96xf32> to vector<8x32xf32>
    %382 = arith.mulf %380, %367 : vector<8x32xf32>
    %383 = arith.mulf %379, %378 : vector<8x32xf32>
    %384 = arith.addf %382, %383 : vector<8x32xf32>
    %385 = math.tanh %384 : vector<8x32xf32>
    %386 = arith.mulf %381, %385 : vector<8x32xf32>
    %387 = vector.extract_strided_slice %365 {offsets = [8, 0], sizes = [8, 128], strides = [1, 1]} : vector<64x128xf32> to vector<8x128xf32>
    %cst_91 = arith.constant dense<0.000000e+00> : vector<8x128xf32>
    %388 = tpu.matmul %386, %361, %cst_91 {dimension_numbers = #tpu.dot_dimension_numbers<[1], [0], [0], [1], [0, 0, 1, 1], [], []>} : vector<8x32xf32>, vector<32x128xf32>, vector<8x128xf32> -> vector<8x128xf32>
    %389 = arith.addf %387, %388 : vector<8x128xf32>
    %390 = vector.extract_strided_slice %389 {offsets = [0, 0], sizes = [8, 96], strides = [1, 1]} : vector<8x128xf32> to vector<8x96xf32>
    %391 = arith.negf %390 : vector<8x96xf32>
    %392 = math.exp %391 : vector<8x96xf32>
    %cst_92 = arith.constant 1.000000e+00 : f32
    %393 = vector.broadcast %cst_92 : f32 to vector<8x96xf32>
    %394 = arith.addf %393, %392 : vector<8x96xf32>
    %395 = arith.divf %393, %394 : vector<8x96xf32>
    %396 = vector.extract_strided_slice %389 {offsets = [0, 96], sizes = [8, 32], strides = [1, 1]} : vector<8x128xf32> to vector<8x32xf32>
    %397 = math.tanh %396 : vector<8x32xf32>
    %398 = vector.extract_strided_slice %395 {offsets = [0, 0], sizes = [8, 32], strides = [1, 1]} : vector<8x96xf32> to vector<8x32xf32>
    %399 = vector.extract_strided_slice %395 {offsets = [0, 32], sizes = [8, 32], strides = [1, 1]} : vector<8x96xf32> to vector<8x32xf32>
    %400 = vector.extract_strided_slice %395 {offsets = [0, 64], sizes = [8, 32], strides = [1, 1]} : vector<8x96xf32> to vector<8x32xf32>
    %401 = arith.mulf %399, %384 : vector<8x32xf32>
    %402 = arith.mulf %398, %397 : vector<8x32xf32>
    %403 = arith.addf %401, %402 : vector<8x32xf32>
    %404 = math.tanh %403 : vector<8x32xf32>
    %405 = arith.mulf %400, %404 : vector<8x32xf32>
    %406 = vector.extract_strided_slice %365 {offsets = [16, 0], sizes = [8, 128], strides = [1, 1]} : vector<64x128xf32> to vector<8x128xf32>
    %cst_93 = arith.constant dense<0.000000e+00> : vector<8x128xf32>
    %407 = tpu.matmul %405, %361, %cst_93 {dimension_numbers = #tpu.dot_dimension_numbers<[1], [0], [0], [1], [0, 0, 1, 1], [], []>} : vector<8x32xf32>, vector<32x128xf32>, vector<8x128xf32> -> vector<8x128xf32>
    %408 = arith.addf %406, %407 : vector<8x128xf32>
    %409 = vector.extract_strided_slice %408 {offsets = [0, 0], sizes = [8, 96], strides = [1, 1]} : vector<8x128xf32> to vector<8x96xf32>
    %410 = arith.negf %409 : vector<8x96xf32>
    %411 = math.exp %410 : vector<8x96xf32>
    %cst_94 = arith.constant 1.000000e+00 : f32
    %412 = vector.broadcast %cst_94 : f32 to vector<8x96xf32>
    %413 = arith.addf %412, %411 : vector<8x96xf32>
    %414 = arith.divf %412, %413 : vector<8x96xf32>
    %415 = vector.extract_strided_slice %408 {offsets = [0, 96], sizes = [8, 32], strides = [1, 1]} : vector<8x128xf32> to vector<8x32xf32>
    %416 = math.tanh %415 : vector<8x32xf32>
    %417 = vector.extract_strided_slice %414 {offsets = [0, 0], sizes = [8, 32], strides = [1, 1]} : vector<8x96xf32> to vector<8x32xf32>
    %418 = vector.extract_strided_slice %414 {offsets = [0, 32], sizes = [8, 32], strides = [1, 1]} : vector<8x96xf32> to vector<8x32xf32>
    %419 = vector.extract_strided_slice %414 {offsets = [0, 64], sizes = [8, 32], strides = [1, 1]} : vector<8x96xf32> to vector<8x32xf32>
    %420 = arith.mulf %418, %403 : vector<8x32xf32>
    %421 = arith.mulf %417, %416 : vector<8x32xf32>
    %422 = arith.addf %420, %421 : vector<8x32xf32>
    %423 = math.tanh %422 : vector<8x32xf32>
    %424 = arith.mulf %419, %423 : vector<8x32xf32>
    %425 = vector.extract_strided_slice %365 {offsets = [24, 0], sizes = [8, 128], strides = [1, 1]} : vector<64x128xf32> to vector<8x128xf32>
    %cst_95 = arith.constant dense<0.000000e+00> : vector<8x128xf32>
    %426 = tpu.matmul %424, %361, %cst_95 {dimension_numbers = #tpu.dot_dimension_numbers<[1], [0], [0], [1], [0, 0, 1, 1], [], []>} : vector<8x32xf32>, vector<32x128xf32>, vector<8x128xf32> -> vector<8x128xf32>
    %427 = arith.addf %425, %426 : vector<8x128xf32>
    %428 = vector.extract_strided_slice %427 {offsets = [0, 0], sizes = [8, 96], strides = [1, 1]} : vector<8x128xf32> to vector<8x96xf32>
    %429 = arith.negf %428 : vector<8x96xf32>
    %430 = math.exp %429 : vector<8x96xf32>
    %cst_96 = arith.constant 1.000000e+00 : f32
    %431 = vector.broadcast %cst_96 : f32 to vector<8x96xf32>
    %432 = arith.addf %431, %430 : vector<8x96xf32>
    %433 = arith.divf %431, %432 : vector<8x96xf32>
    %434 = vector.extract_strided_slice %427 {offsets = [0, 96], sizes = [8, 32], strides = [1, 1]} : vector<8x128xf32> to vector<8x32xf32>
    %435 = math.tanh %434 : vector<8x32xf32>
    %436 = vector.extract_strided_slice %433 {offsets = [0, 0], sizes = [8, 32], strides = [1, 1]} : vector<8x96xf32> to vector<8x32xf32>
    %437 = vector.extract_strided_slice %433 {offsets = [0, 32], sizes = [8, 32], strides = [1, 1]} : vector<8x96xf32> to vector<8x32xf32>
    %438 = vector.extract_strided_slice %433 {offsets = [0, 64], sizes = [8, 32], strides = [1, 1]} : vector<8x96xf32> to vector<8x32xf32>
    %439 = arith.mulf %437, %422 : vector<8x32xf32>
    %440 = arith.mulf %436, %435 : vector<8x32xf32>
    %441 = arith.addf %439, %440 : vector<8x32xf32>
    %442 = math.tanh %441 : vector<8x32xf32>
    %443 = arith.mulf %438, %442 : vector<8x32xf32>
    %444 = vector.extract_strided_slice %365 {offsets = [32, 0], sizes = [8, 128], strides = [1, 1]} : vector<64x128xf32> to vector<8x128xf32>
    %cst_97 = arith.constant dense<0.000000e+00> : vector<8x128xf32>
    %445 = tpu.matmul %443, %361, %cst_97 {dimension_numbers = #tpu.dot_dimension_numbers<[1], [0], [0], [1], [0, 0, 1, 1], [], []>} : vector<8x32xf32>, vector<32x128xf32>, vector<8x128xf32> -> vector<8x128xf32>
    %446 = arith.addf %444, %445 : vector<8x128xf32>
    %447 = vector.extract_strided_slice %446 {offsets = [0, 0], sizes = [8, 96], strides = [1, 1]} : vector<8x128xf32> to vector<8x96xf32>
    %448 = arith.negf %447 : vector<8x96xf32>
    %449 = math.exp %448 : vector<8x96xf32>
    %cst_98 = arith.constant 1.000000e+00 : f32
    %450 = vector.broadcast %cst_98 : f32 to vector<8x96xf32>
    %451 = arith.addf %450, %449 : vector<8x96xf32>
    %452 = arith.divf %450, %451 : vector<8x96xf32>
    %453 = vector.extract_strided_slice %446 {offsets = [0, 96], sizes = [8, 32], strides = [1, 1]} : vector<8x128xf32> to vector<8x32xf32>
    %454 = math.tanh %453 : vector<8x32xf32>
    %455 = vector.extract_strided_slice %452 {offsets = [0, 0], sizes = [8, 32], strides = [1, 1]} : vector<8x96xf32> to vector<8x32xf32>
    %456 = vector.extract_strided_slice %452 {offsets = [0, 32], sizes = [8, 32], strides = [1, 1]} : vector<8x96xf32> to vector<8x32xf32>
    %457 = vector.extract_strided_slice %452 {offsets = [0, 64], sizes = [8, 32], strides = [1, 1]} : vector<8x96xf32> to vector<8x32xf32>
    %458 = arith.mulf %456, %441 : vector<8x32xf32>
    %459 = arith.mulf %455, %454 : vector<8x32xf32>
    %460 = arith.addf %458, %459 : vector<8x32xf32>
    %461 = math.tanh %460 : vector<8x32xf32>
    %462 = arith.mulf %457, %461 : vector<8x32xf32>
    %463 = vector.extract_strided_slice %365 {offsets = [40, 0], sizes = [8, 128], strides = [1, 1]} : vector<64x128xf32> to vector<8x128xf32>
    %cst_99 = arith.constant dense<0.000000e+00> : vector<8x128xf32>
    %464 = tpu.matmul %462, %361, %cst_99 {dimension_numbers = #tpu.dot_dimension_numbers<[1], [0], [0], [1], [0, 0, 1, 1], [], []>} : vector<8x32xf32>, vector<32x128xf32>, vector<8x128xf32> -> vector<8x128xf32>
    %465 = arith.addf %463, %464 : vector<8x128xf32>
    %466 = vector.extract_strided_slice %465 {offsets = [0, 0], sizes = [8, 96], strides = [1, 1]} : vector<8x128xf32> to vector<8x96xf32>
    %467 = arith.negf %466 : vector<8x96xf32>
    %468 = math.exp %467 : vector<8x96xf32>
    %cst_100 = arith.constant 1.000000e+00 : f32
    %469 = vector.broadcast %cst_100 : f32 to vector<8x96xf32>
    %470 = arith.addf %469, %468 : vector<8x96xf32>
    %471 = arith.divf %469, %470 : vector<8x96xf32>
    %472 = vector.extract_strided_slice %465 {offsets = [0, 96], sizes = [8, 32], strides = [1, 1]} : vector<8x128xf32> to vector<8x32xf32>
    %473 = math.tanh %472 : vector<8x32xf32>
    %474 = vector.extract_strided_slice %471 {offsets = [0, 0], sizes = [8, 32], strides = [1, 1]} : vector<8x96xf32> to vector<8x32xf32>
    %475 = vector.extract_strided_slice %471 {offsets = [0, 32], sizes = [8, 32], strides = [1, 1]} : vector<8x96xf32> to vector<8x32xf32>
    %476 = vector.extract_strided_slice %471 {offsets = [0, 64], sizes = [8, 32], strides = [1, 1]} : vector<8x96xf32> to vector<8x32xf32>
    %477 = arith.mulf %475, %460 : vector<8x32xf32>
    %478 = arith.mulf %474, %473 : vector<8x32xf32>
    %479 = arith.addf %477, %478 : vector<8x32xf32>
    %480 = math.tanh %479 : vector<8x32xf32>
    %481 = arith.mulf %476, %480 : vector<8x32xf32>
    %482 = vector.extract_strided_slice %365 {offsets = [48, 0], sizes = [8, 128], strides = [1, 1]} : vector<64x128xf32> to vector<8x128xf32>
    %cst_101 = arith.constant dense<0.000000e+00> : vector<8x128xf32>
    %483 = tpu.matmul %481, %361, %cst_101 {dimension_numbers = #tpu.dot_dimension_numbers<[1], [0], [0], [1], [0, 0, 1, 1], [], []>} : vector<8x32xf32>, vector<32x128xf32>, vector<8x128xf32> -> vector<8x128xf32>
    %484 = arith.addf %482, %483 : vector<8x128xf32>
    %485 = vector.extract_strided_slice %484 {offsets = [0, 0], sizes = [8, 96], strides = [1, 1]} : vector<8x128xf32> to vector<8x96xf32>
    %486 = arith.negf %485 : vector<8x96xf32>
    %487 = math.exp %486 : vector<8x96xf32>
    %cst_102 = arith.constant 1.000000e+00 : f32
    %488 = vector.broadcast %cst_102 : f32 to vector<8x96xf32>
    %489 = arith.addf %488, %487 : vector<8x96xf32>
    %490 = arith.divf %488, %489 : vector<8x96xf32>
    %491 = vector.extract_strided_slice %484 {offsets = [0, 96], sizes = [8, 32], strides = [1, 1]} : vector<8x128xf32> to vector<8x32xf32>
    %492 = math.tanh %491 : vector<8x32xf32>
    %493 = vector.extract_strided_slice %490 {offsets = [0, 0], sizes = [8, 32], strides = [1, 1]} : vector<8x96xf32> to vector<8x32xf32>
    %494 = vector.extract_strided_slice %490 {offsets = [0, 32], sizes = [8, 32], strides = [1, 1]} : vector<8x96xf32> to vector<8x32xf32>
    %495 = vector.extract_strided_slice %490 {offsets = [0, 64], sizes = [8, 32], strides = [1, 1]} : vector<8x96xf32> to vector<8x32xf32>
    %496 = arith.mulf %494, %479 : vector<8x32xf32>
    %497 = arith.mulf %493, %492 : vector<8x32xf32>
    %498 = arith.addf %496, %497 : vector<8x32xf32>
    %499 = math.tanh %498 : vector<8x32xf32>
    %500 = arith.mulf %495, %499 : vector<8x32xf32>
    %501 = vector.extract_strided_slice %365 {offsets = [56, 0], sizes = [8, 128], strides = [1, 1]} : vector<64x128xf32> to vector<8x128xf32>
    %cst_103 = arith.constant dense<0.000000e+00> : vector<8x128xf32>
    %502 = tpu.matmul %500, %361, %cst_103 {dimension_numbers = #tpu.dot_dimension_numbers<[1], [0], [0], [1], [0, 0, 1, 1], [], []>} : vector<8x32xf32>, vector<32x128xf32>, vector<8x128xf32> -> vector<8x128xf32>
    %503 = arith.addf %501, %502 : vector<8x128xf32>
    %504 = vector.extract_strided_slice %503 {offsets = [0, 0], sizes = [8, 96], strides = [1, 1]} : vector<8x128xf32> to vector<8x96xf32>
    %505 = arith.negf %504 : vector<8x96xf32>
    %506 = math.exp %505 : vector<8x96xf32>
    %cst_104 = arith.constant 1.000000e+00 : f32
    %507 = vector.broadcast %cst_104 : f32 to vector<8x96xf32>
    %508 = arith.addf %507, %506 : vector<8x96xf32>
    %509 = arith.divf %507, %508 : vector<8x96xf32>
    %510 = vector.extract_strided_slice %503 {offsets = [0, 96], sizes = [8, 32], strides = [1, 1]} : vector<8x128xf32> to vector<8x32xf32>
    %511 = math.tanh %510 : vector<8x32xf32>
    %512 = vector.extract_strided_slice %509 {offsets = [0, 0], sizes = [8, 32], strides = [1, 1]} : vector<8x96xf32> to vector<8x32xf32>
    %513 = vector.extract_strided_slice %509 {offsets = [0, 32], sizes = [8, 32], strides = [1, 1]} : vector<8x96xf32> to vector<8x32xf32>
    %514 = vector.extract_strided_slice %509 {offsets = [0, 64], sizes = [8, 32], strides = [1, 1]} : vector<8x96xf32> to vector<8x32xf32>
    %515 = arith.mulf %513, %498 : vector<8x32xf32>
    %516 = arith.mulf %512, %511 : vector<8x32xf32>
    %517 = arith.addf %515, %516 : vector<8x32xf32>
    %518 = math.tanh %517 : vector<8x32xf32>
    %519 = arith.mulf %514, %518 : vector<8x32xf32>
    %520 = tpu.concatenate %386, %405, %424, %443, %462, %481, %500, %519 in 0 : vector<8x32xf32>, vector<8x32xf32>, vector<8x32xf32>, vector<8x32xf32>, vector<8x32xf32>, vector<8x32xf32>, vector<8x32xf32>, vector<8x32xf32> -> vector<64x32xf32>
    %c0_105 = arith.constant 0 : index
    %c0_106 = arith.constant 0 : index
    %521 = vector.load %arg22[%c0_105, %c0_106] : memref<32x128xf32, #tpu.memory_space<vmem>>, vector<32x128xf32>
    %c0_107 = arith.constant 0 : index
    %c0_108 = arith.constant 0 : index
    %522 = vector.load %arg23[%c0_107, %c0_108] : memref<32x128xf32, #tpu.memory_space<vmem>>, vector<32x128xf32>
    %c0_109 = arith.constant 0 : index
    %c0_110 = arith.constant 0 : index
    %523 = vector.load %arg24[%c0_109, %c0_110] : memref<1x128xf32, #tpu.memory_space<vmem>>, vector<1x128xf32>
    %cst_111 = arith.constant dense<0.000000e+00> : vector<64x128xf32>
    %524 = tpu.matmul %520, %521, %cst_111 {dimension_numbers = #tpu.dot_dimension_numbers<[1], [0], [0], [1], [0, 0, 1, 1], [], []>} : vector<64x32xf32>, vector<32x128xf32>, vector<64x128xf32> -> vector<64x128xf32>
    %525 = vector.broadcast %523 : vector<1x128xf32> to vector<64x128xf32>
    %526 = arith.addf %524, %525 : vector<64x128xf32>
    %cst_112 = arith.constant 0.000000e+00 : f32
    %527 = vector.broadcast %cst_112 : f32 to vector<8x32xf32>
    %cst_113 = arith.constant 0.000000e+00 : f32
    %528 = vector.broadcast %cst_113 : f32 to vector<8x32xf32>
    %529 = vector.extract_strided_slice %526 {offsets = [0, 0], sizes = [8, 128], strides = [1, 1]} : vector<64x128xf32> to vector<8x128xf32>
    %cst_114 = arith.constant dense<0.000000e+00> : vector<8x128xf32>
    %530 = tpu.matmul %527, %522, %cst_114 {dimension_numbers = #tpu.dot_dimension_numbers<[1], [0], [0], [1], [0, 0, 1, 1], [], []>} : vector<8x32xf32>, vector<32x128xf32>, vector<8x128xf32> -> vector<8x128xf32>
    %531 = arith.addf %529, %530 : vector<8x128xf32>
    %532 = vector.extract_strided_slice %531 {offsets = [0, 0], sizes = [8, 96], strides = [1, 1]} : vector<8x128xf32> to vector<8x96xf32>
    %533 = arith.negf %532 : vector<8x96xf32>
    %534 = math.exp %533 : vector<8x96xf32>
    %cst_115 = arith.constant 1.000000e+00 : f32
    %535 = vector.broadcast %cst_115 : f32 to vector<8x96xf32>
    %536 = arith.addf %535, %534 : vector<8x96xf32>
    %537 = arith.divf %535, %536 : vector<8x96xf32>
    %538 = vector.extract_strided_slice %531 {offsets = [0, 96], sizes = [8, 32], strides = [1, 1]} : vector<8x128xf32> to vector<8x32xf32>
    %539 = math.tanh %538 : vector<8x32xf32>
    %540 = vector.extract_strided_slice %537 {offsets = [0, 0], sizes = [8, 32], strides = [1, 1]} : vector<8x96xf32> to vector<8x32xf32>
    %541 = vector.extract_strided_slice %537 {offsets = [0, 32], sizes = [8, 32], strides = [1, 1]} : vector<8x96xf32> to vector<8x32xf32>
    %542 = vector.extract_strided_slice %537 {offsets = [0, 64], sizes = [8, 32], strides = [1, 1]} : vector<8x96xf32> to vector<8x32xf32>
    %543 = arith.mulf %541, %528 : vector<8x32xf32>
    %544 = arith.mulf %540, %539 : vector<8x32xf32>
    %545 = arith.addf %543, %544 : vector<8x32xf32>
    %546 = math.tanh %545 : vector<8x32xf32>
    %547 = arith.mulf %542, %546 : vector<8x32xf32>
    %548 = vector.extract_strided_slice %526 {offsets = [8, 0], sizes = [8, 128], strides = [1, 1]} : vector<64x128xf32> to vector<8x128xf32>
    %cst_116 = arith.constant dense<0.000000e+00> : vector<8x128xf32>
    %549 = tpu.matmul %547, %522, %cst_116 {dimension_numbers = #tpu.dot_dimension_numbers<[1], [0], [0], [1], [0, 0, 1, 1], [], []>} : vector<8x32xf32>, vector<32x128xf32>, vector<8x128xf32> -> vector<8x128xf32>
    %550 = arith.addf %548, %549 : vector<8x128xf32>
    %551 = vector.extract_strided_slice %550 {offsets = [0, 0], sizes = [8, 96], strides = [1, 1]} : vector<8x128xf32> to vector<8x96xf32>
    %552 = arith.negf %551 : vector<8x96xf32>
    %553 = math.exp %552 : vector<8x96xf32>
    %cst_117 = arith.constant 1.000000e+00 : f32
    %554 = vector.broadcast %cst_117 : f32 to vector<8x96xf32>
    %555 = arith.addf %554, %553 : vector<8x96xf32>
    %556 = arith.divf %554, %555 : vector<8x96xf32>
    %557 = vector.extract_strided_slice %550 {offsets = [0, 96], sizes = [8, 32], strides = [1, 1]} : vector<8x128xf32> to vector<8x32xf32>
    %558 = math.tanh %557 : vector<8x32xf32>
    %559 = vector.extract_strided_slice %556 {offsets = [0, 0], sizes = [8, 32], strides = [1, 1]} : vector<8x96xf32> to vector<8x32xf32>
    %560 = vector.extract_strided_slice %556 {offsets = [0, 32], sizes = [8, 32], strides = [1, 1]} : vector<8x96xf32> to vector<8x32xf32>
    %561 = vector.extract_strided_slice %556 {offsets = [0, 64], sizes = [8, 32], strides = [1, 1]} : vector<8x96xf32> to vector<8x32xf32>
    %562 = arith.mulf %560, %545 : vector<8x32xf32>
    %563 = arith.mulf %559, %558 : vector<8x32xf32>
    %564 = arith.addf %562, %563 : vector<8x32xf32>
    %565 = math.tanh %564 : vector<8x32xf32>
    %566 = arith.mulf %561, %565 : vector<8x32xf32>
    %567 = vector.extract_strided_slice %526 {offsets = [16, 0], sizes = [8, 128], strides = [1, 1]} : vector<64x128xf32> to vector<8x128xf32>
    %cst_118 = arith.constant dense<0.000000e+00> : vector<8x128xf32>
    %568 = tpu.matmul %566, %522, %cst_118 {dimension_numbers = #tpu.dot_dimension_numbers<[1], [0], [0], [1], [0, 0, 1, 1], [], []>} : vector<8x32xf32>, vector<32x128xf32>, vector<8x128xf32> -> vector<8x128xf32>
    %569 = arith.addf %567, %568 : vector<8x128xf32>
    %570 = vector.extract_strided_slice %569 {offsets = [0, 0], sizes = [8, 96], strides = [1, 1]} : vector<8x128xf32> to vector<8x96xf32>
    %571 = arith.negf %570 : vector<8x96xf32>
    %572 = math.exp %571 : vector<8x96xf32>
    %cst_119 = arith.constant 1.000000e+00 : f32
    %573 = vector.broadcast %cst_119 : f32 to vector<8x96xf32>
    %574 = arith.addf %573, %572 : vector<8x96xf32>
    %575 = arith.divf %573, %574 : vector<8x96xf32>
    %576 = vector.extract_strided_slice %569 {offsets = [0, 96], sizes = [8, 32], strides = [1, 1]} : vector<8x128xf32> to vector<8x32xf32>
    %577 = math.tanh %576 : vector<8x32xf32>
    %578 = vector.extract_strided_slice %575 {offsets = [0, 0], sizes = [8, 32], strides = [1, 1]} : vector<8x96xf32> to vector<8x32xf32>
    %579 = vector.extract_strided_slice %575 {offsets = [0, 32], sizes = [8, 32], strides = [1, 1]} : vector<8x96xf32> to vector<8x32xf32>
    %580 = vector.extract_strided_slice %575 {offsets = [0, 64], sizes = [8, 32], strides = [1, 1]} : vector<8x96xf32> to vector<8x32xf32>
    %581 = arith.mulf %579, %564 : vector<8x32xf32>
    %582 = arith.mulf %578, %577 : vector<8x32xf32>
    %583 = arith.addf %581, %582 : vector<8x32xf32>
    %584 = math.tanh %583 : vector<8x32xf32>
    %585 = arith.mulf %580, %584 : vector<8x32xf32>
    %586 = vector.extract_strided_slice %526 {offsets = [24, 0], sizes = [8, 128], strides = [1, 1]} : vector<64x128xf32> to vector<8x128xf32>
    %cst_120 = arith.constant dense<0.000000e+00> : vector<8x128xf32>
    %587 = tpu.matmul %585, %522, %cst_120 {dimension_numbers = #tpu.dot_dimension_numbers<[1], [0], [0], [1], [0, 0, 1, 1], [], []>} : vector<8x32xf32>, vector<32x128xf32>, vector<8x128xf32> -> vector<8x128xf32>
    %588 = arith.addf %586, %587 : vector<8x128xf32>
    %589 = vector.extract_strided_slice %588 {offsets = [0, 0], sizes = [8, 96], strides = [1, 1]} : vector<8x128xf32> to vector<8x96xf32>
    %590 = arith.negf %589 : vector<8x96xf32>
    %591 = math.exp %590 : vector<8x96xf32>
    %cst_121 = arith.constant 1.000000e+00 : f32
    %592 = vector.broadcast %cst_121 : f32 to vector<8x96xf32>
    %593 = arith.addf %592, %591 : vector<8x96xf32>
    %594 = arith.divf %592, %593 : vector<8x96xf32>
    %595 = vector.extract_strided_slice %588 {offsets = [0, 96], sizes = [8, 32], strides = [1, 1]} : vector<8x128xf32> to vector<8x32xf32>
    %596 = math.tanh %595 : vector<8x32xf32>
    %597 = vector.extract_strided_slice %594 {offsets = [0, 0], sizes = [8, 32], strides = [1, 1]} : vector<8x96xf32> to vector<8x32xf32>
    %598 = vector.extract_strided_slice %594 {offsets = [0, 32], sizes = [8, 32], strides = [1, 1]} : vector<8x96xf32> to vector<8x32xf32>
    %599 = vector.extract_strided_slice %594 {offsets = [0, 64], sizes = [8, 32], strides = [1, 1]} : vector<8x96xf32> to vector<8x32xf32>
    %600 = arith.mulf %598, %583 : vector<8x32xf32>
    %601 = arith.mulf %597, %596 : vector<8x32xf32>
    %602 = arith.addf %600, %601 : vector<8x32xf32>
    %603 = math.tanh %602 : vector<8x32xf32>
    %604 = arith.mulf %599, %603 : vector<8x32xf32>
    %605 = vector.extract_strided_slice %526 {offsets = [32, 0], sizes = [8, 128], strides = [1, 1]} : vector<64x128xf32> to vector<8x128xf32>
    %cst_122 = arith.constant dense<0.000000e+00> : vector<8x128xf32>
    %606 = tpu.matmul %604, %522, %cst_122 {dimension_numbers = #tpu.dot_dimension_numbers<[1], [0], [0], [1], [0, 0, 1, 1], [], []>} : vector<8x32xf32>, vector<32x128xf32>, vector<8x128xf32> -> vector<8x128xf32>
    %607 = arith.addf %605, %606 : vector<8x128xf32>
    %608 = vector.extract_strided_slice %607 {offsets = [0, 0], sizes = [8, 96], strides = [1, 1]} : vector<8x128xf32> to vector<8x96xf32>
    %609 = arith.negf %608 : vector<8x96xf32>
    %610 = math.exp %609 : vector<8x96xf32>
    %cst_123 = arith.constant 1.000000e+00 : f32
    %611 = vector.broadcast %cst_123 : f32 to vector<8x96xf32>
    %612 = arith.addf %611, %610 : vector<8x96xf32>
    %613 = arith.divf %611, %612 : vector<8x96xf32>
    %614 = vector.extract_strided_slice %607 {offsets = [0, 96], sizes = [8, 32], strides = [1, 1]} : vector<8x128xf32> to vector<8x32xf32>
    %615 = math.tanh %614 : vector<8x32xf32>
    %616 = vector.extract_strided_slice %613 {offsets = [0, 0], sizes = [8, 32], strides = [1, 1]} : vector<8x96xf32> to vector<8x32xf32>
    %617 = vector.extract_strided_slice %613 {offsets = [0, 32], sizes = [8, 32], strides = [1, 1]} : vector<8x96xf32> to vector<8x32xf32>
    %618 = vector.extract_strided_slice %613 {offsets = [0, 64], sizes = [8, 32], strides = [1, 1]} : vector<8x96xf32> to vector<8x32xf32>
    %619 = arith.mulf %617, %602 : vector<8x32xf32>
    %620 = arith.mulf %616, %615 : vector<8x32xf32>
    %621 = arith.addf %619, %620 : vector<8x32xf32>
    %622 = math.tanh %621 : vector<8x32xf32>
    %623 = arith.mulf %618, %622 : vector<8x32xf32>
    %624 = vector.extract_strided_slice %526 {offsets = [40, 0], sizes = [8, 128], strides = [1, 1]} : vector<64x128xf32> to vector<8x128xf32>
    %cst_124 = arith.constant dense<0.000000e+00> : vector<8x128xf32>
    %625 = tpu.matmul %623, %522, %cst_124 {dimension_numbers = #tpu.dot_dimension_numbers<[1], [0], [0], [1], [0, 0, 1, 1], [], []>} : vector<8x32xf32>, vector<32x128xf32>, vector<8x128xf32> -> vector<8x128xf32>
    %626 = arith.addf %624, %625 : vector<8x128xf32>
    %627 = vector.extract_strided_slice %626 {offsets = [0, 0], sizes = [8, 96], strides = [1, 1]} : vector<8x128xf32> to vector<8x96xf32>
    %628 = arith.negf %627 : vector<8x96xf32>
    %629 = math.exp %628 : vector<8x96xf32>
    %cst_125 = arith.constant 1.000000e+00 : f32
    %630 = vector.broadcast %cst_125 : f32 to vector<8x96xf32>
    %631 = arith.addf %630, %629 : vector<8x96xf32>
    %632 = arith.divf %630, %631 : vector<8x96xf32>
    %633 = vector.extract_strided_slice %626 {offsets = [0, 96], sizes = [8, 32], strides = [1, 1]} : vector<8x128xf32> to vector<8x32xf32>
    %634 = math.tanh %633 : vector<8x32xf32>
    %635 = vector.extract_strided_slice %632 {offsets = [0, 0], sizes = [8, 32], strides = [1, 1]} : vector<8x96xf32> to vector<8x32xf32>
    %636 = vector.extract_strided_slice %632 {offsets = [0, 32], sizes = [8, 32], strides = [1, 1]} : vector<8x96xf32> to vector<8x32xf32>
    %637 = vector.extract_strided_slice %632 {offsets = [0, 64], sizes = [8, 32], strides = [1, 1]} : vector<8x96xf32> to vector<8x32xf32>
    %638 = arith.mulf %636, %621 : vector<8x32xf32>
    %639 = arith.mulf %635, %634 : vector<8x32xf32>
    %640 = arith.addf %638, %639 : vector<8x32xf32>
    %641 = math.tanh %640 : vector<8x32xf32>
    %642 = arith.mulf %637, %641 : vector<8x32xf32>
    %643 = vector.extract_strided_slice %526 {offsets = [48, 0], sizes = [8, 128], strides = [1, 1]} : vector<64x128xf32> to vector<8x128xf32>
    %cst_126 = arith.constant dense<0.000000e+00> : vector<8x128xf32>
    %644 = tpu.matmul %642, %522, %cst_126 {dimension_numbers = #tpu.dot_dimension_numbers<[1], [0], [0], [1], [0, 0, 1, 1], [], []>} : vector<8x32xf32>, vector<32x128xf32>, vector<8x128xf32> -> vector<8x128xf32>
    %645 = arith.addf %643, %644 : vector<8x128xf32>
    %646 = vector.extract_strided_slice %645 {offsets = [0, 0], sizes = [8, 96], strides = [1, 1]} : vector<8x128xf32> to vector<8x96xf32>
    %647 = arith.negf %646 : vector<8x96xf32>
    %648 = math.exp %647 : vector<8x96xf32>
    %cst_127 = arith.constant 1.000000e+00 : f32
    %649 = vector.broadcast %cst_127 : f32 to vector<8x96xf32>
    %650 = arith.addf %649, %648 : vector<8x96xf32>
    %651 = arith.divf %649, %650 : vector<8x96xf32>
    %652 = vector.extract_strided_slice %645 {offsets = [0, 96], sizes = [8, 32], strides = [1, 1]} : vector<8x128xf32> to vector<8x32xf32>
    %653 = math.tanh %652 : vector<8x32xf32>
    %654 = vector.extract_strided_slice %651 {offsets = [0, 0], sizes = [8, 32], strides = [1, 1]} : vector<8x96xf32> to vector<8x32xf32>
    %655 = vector.extract_strided_slice %651 {offsets = [0, 32], sizes = [8, 32], strides = [1, 1]} : vector<8x96xf32> to vector<8x32xf32>
    %656 = vector.extract_strided_slice %651 {offsets = [0, 64], sizes = [8, 32], strides = [1, 1]} : vector<8x96xf32> to vector<8x32xf32>
    %657 = arith.mulf %655, %640 : vector<8x32xf32>
    %658 = arith.mulf %654, %653 : vector<8x32xf32>
    %659 = arith.addf %657, %658 : vector<8x32xf32>
    %660 = math.tanh %659 : vector<8x32xf32>
    %661 = arith.mulf %656, %660 : vector<8x32xf32>
    %662 = vector.extract_strided_slice %526 {offsets = [56, 0], sizes = [8, 128], strides = [1, 1]} : vector<64x128xf32> to vector<8x128xf32>
    %cst_128 = arith.constant dense<0.000000e+00> : vector<8x128xf32>
    %663 = tpu.matmul %661, %522, %cst_128 {dimension_numbers = #tpu.dot_dimension_numbers<[1], [0], [0], [1], [0, 0, 1, 1], [], []>} : vector<8x32xf32>, vector<32x128xf32>, vector<8x128xf32> -> vector<8x128xf32>
    %664 = arith.addf %662, %663 : vector<8x128xf32>
    %665 = vector.extract_strided_slice %664 {offsets = [0, 0], sizes = [8, 96], strides = [1, 1]} : vector<8x128xf32> to vector<8x96xf32>
    %666 = arith.negf %665 : vector<8x96xf32>
    %667 = math.exp %666 : vector<8x96xf32>
    %cst_129 = arith.constant 1.000000e+00 : f32
    %668 = vector.broadcast %cst_129 : f32 to vector<8x96xf32>
    %669 = arith.addf %668, %667 : vector<8x96xf32>
    %670 = arith.divf %668, %669 : vector<8x96xf32>
    %671 = vector.extract_strided_slice %664 {offsets = [0, 96], sizes = [8, 32], strides = [1, 1]} : vector<8x128xf32> to vector<8x32xf32>
    %672 = math.tanh %671 : vector<8x32xf32>
    %673 = vector.extract_strided_slice %670 {offsets = [0, 0], sizes = [8, 32], strides = [1, 1]} : vector<8x96xf32> to vector<8x32xf32>
    %674 = vector.extract_strided_slice %670 {offsets = [0, 32], sizes = [8, 32], strides = [1, 1]} : vector<8x96xf32> to vector<8x32xf32>
    %675 = vector.extract_strided_slice %670 {offsets = [0, 64], sizes = [8, 32], strides = [1, 1]} : vector<8x96xf32> to vector<8x32xf32>
    %676 = arith.mulf %674, %659 : vector<8x32xf32>
    %677 = arith.mulf %673, %672 : vector<8x32xf32>
    %678 = arith.addf %676, %677 : vector<8x32xf32>
    %679 = math.tanh %678 : vector<8x32xf32>
    %680 = arith.mulf %675, %679 : vector<8x32xf32>
    %681 = tpu.concatenate %547, %566, %585, %604, %623, %642, %661, %680 in 0 : vector<8x32xf32>, vector<8x32xf32>, vector<8x32xf32>, vector<8x32xf32>, vector<8x32xf32>, vector<8x32xf32>, vector<8x32xf32>, vector<8x32xf32> -> vector<64x32xf32>
    %c0_130 = arith.constant 0 : index
    %c0_131 = arith.constant 0 : index
    %682 = vector.load %arg25[%c0_130, %c0_131] : memref<32x4xf32, #tpu.memory_space<vmem>>, vector<32x4xf32>
    %cst_132 = arith.constant dense<0.000000e+00> : vector<64x4xf32>
    %683 = tpu.matmul %681, %682, %cst_132 {dimension_numbers = #tpu.dot_dimension_numbers<[1], [0], [0], [1], [0, 0, 1, 1], [], []>} : vector<64x32xf32>, vector<32x4xf32>, vector<64x4xf32> -> vector<64x4xf32>
    %c0_133 = arith.constant 0 : index
    %c0_134 = arith.constant 0 : index
    %684 = vector.load %arg26[%c0_133, %c0_134] : memref<1x4xf32, #tpu.memory_space<vmem>>, vector<1x4xf32>
    %685 = vector.broadcast %684 : vector<1x4xf32> to vector<64x4xf32>
    %686 = arith.addf %683, %685 : vector<64x4xf32>
    %c0_135 = arith.constant 0 : index
    %c0_136 = arith.constant 0 : index
    %687 = vector.load %arg27[%c0_135, %c0_136] : memref<64x4xf32, #tpu.memory_space<vmem>>, vector<64x4xf32>
    tpu.vector_store %arg27[%c0_135, %c0_136], %686 {strides = array<i32>} : memref<64x4xf32, #tpu.memory_space<vmem>>, vector<64x4xf32>,
    return
  }
}

</mosaic_0001>

<llo_original>
// kernel: seq2seq_forward.1
$region0: #{seq2seq_forward.1}
  #allocation0 [shape = 'u32[]', space=smem, size = 0x4, offset = 0x4, fixed_abs, tag = 'smem constant byte address 0x4 - core index']
  #allocation1 [shape = 'u32[144,128]{1,0:T(1,128)}', space=vmem, size = 0x12000, scoped, tag = 'internal scratch']
  %s0 = inlined_call_operand.vmem [shape: f32[64,4], index: 0, kind: input, shape index: {}]
  %s1 = inlined_call_operand.vmem [shape: f32[8,6], index: 1, kind: input, shape index: {}]
  %s2 = inlined_call_operand.hbm [shape: f32[1,4], index: 2, kind: input, shape index: {}]
  %s3 = inlined_call_operand.hbm [shape: f32[1,4], index: 3, kind: input, shape index: {}]
  %s4 = inlined_call_operand.hbm [shape: f32[1,6], index: 4, kind: input, shape index: {}]
  %s5 = inlined_call_operand.hbm [shape: f32[1,6], index: 5, kind: input, shape index: {}]
  %s6 = inlined_call_operand.hbm [shape: f32[6,16], index: 6, kind: input, shape index: {}]
  %s7 = inlined_call_operand.hbm [shape: f32[1,16], index: 7, kind: input, shape index: {}]
  %s8 = inlined_call_operand.vmem [shape: f32[16,8], index: 8, kind: input, shape index: {}]
  %s9 = inlined_call_operand.hbm [shape: f32[1,8], index: 9, kind: input, shape index: {}]
  %s10 = inlined_call_operand.hbm [shape: f32[4,32], index: 10, kind: input, shape index: {}]
  %s11 = inlined_call_operand.hbm [shape: f32[8,32], index: 11, kind: input, shape index: {}]
  %s12 = inlined_call_operand.hbm [shape: f32[1,32], index: 12, kind: input, shape index: {}]
  %s13 = inlined_call_operand.vmem [shape: f32[32,128], index: 13, kind: input, shape index: {}]
  %s14 = inlined_call_operand.vmem [shape: f32[32,128], index: 14, kind: input, shape index: {}]
  %s15 = inlined_call_operand.hbm [shape: f32[1,128], index: 15, kind: input, shape index: {}]
  %s16 = inlined_call_operand.vmem [shape: f32[32,128], index: 16, kind: input, shape index: {}]
  %s17 = inlined_call_operand.vmem [shape: f32[32,128], index: 17, kind: input, shape index: {}]
  %s18 = inlined_call_operand.hbm [shape: f32[1,128], index: 18, kind: input, shape index: {}]
  %s19 = inlined_call_operand.vmem [shape: f32[32,128], index: 19, kind: input, shape index: {}]
  %s20 = inlined_call_operand.vmem [shape: f32[32,128], index: 20, kind: input, shape index: {}]
  %s21 = inlined_call_operand.vmem [shape: f32[1,128], index: 21, kind: input, shape index: {}]
  %s22 = inlined_call_operand.vmem [shape: f32[32,128], index: 22, kind: input, shape index: {}]
  %s23 = inlined_call_operand.hbm [shape: f32[32,128], index: 23, kind: input, shape index: {}]
  %s24 = inlined_call_operand.vmem [shape: f32[1,128], index: 24, kind: input, shape index: {}]
  %s25 = inlined_call_operand.vmem [shape: f32[32,4], index: 25, kind: input, shape index: {}]
  %s26 = inlined_call_operand.vmem [shape: f32[1,4], index: 26, kind: input, shape index: {}]
  %s27 = inlined_call_operand.vmem [shape: f32[64,4], index: 27, kind: output, shape index: {}]
  %s28 = sld [smem:[#allocation0]]
  $region170: #{seq2seq_forward.1} parent=0
    _
  %s30 = ssub.s32 1, %s28
  %s31 = scalar_select 0, %s30, %s28
  $region1: #{seq2seq_forward.1} parent=0
    #allocation2 [shape = 'u8[512]{0}', space=vmem, size = 0x400, scoped, tag = 'input window, operand 2, single buffered']
    #allocation3 [shape = 's32[1]{0}', space=sflag, size = 0x4, scoped, tag = 'scoped memory for seq2seq_forward.1']
    #allocation4 [shape = 'u8[512]{0}', space=vmem, size = 0x400, scoped, tag = 'input window, operand 3, single buffered']
    #allocation5 [shape = 's32[1]{0}', space=sflag, size = 0x4, scoped, tag = 'scoped memory for seq2seq_forward.1']
    #allocation6 [shape = 'u8[512]{0}', space=vmem, size = 0x400, scoped, tag = 'input window, operand 4, single buffered']
    #allocation7 [shape = 'u8[512]{0}', space=vmem, size = 0x400, scoped, tag = 'input window, operand 5, single buffered']
    #allocation8 [shape = 's32[1]{0}', space=sflag, size = 0x4, scoped, tag = 'scoped memory for seq2seq_forward.1']
    #allocation9 [shape = 'u8[4096]{0}', space=vmem, size = 0x1000, scoped, tag = 'input window, operand 6, single buffered']
    #allocation10 [shape = 'u8[512]{0}', space=vmem, size = 0x400, scoped, tag = 'input window, operand 7, single buffered']
    #allocation11 [shape = 's32[1]{0}', space=sflag, size = 0x4, scoped, tag = 'scoped memory for seq2seq_forward.1']
    #allocation12 [shape = 'u8[512]{0}', space=vmem, size = 0x400, scoped, tag = 'input window, operand 9, single buffered']
    #allocation13 [shape = 'u8[2048]{0}', space=vmem, size = 0x800, scoped, tag = 'input window, operand 10, single buffered']
    #allocation14 [shape = 's32[1]{0}', space=sflag, size = 0x4, scoped, tag = 'scoped memory for seq2seq_forward.1']
    #allocation15 [shape = 'u8[4096]{0}', space=vmem, size = 0x1000, scoped, tag = 'input window, operand 11, single buffered']
    #allocation16 [shape = 'u8[512]{0}', space=vmem, size = 0x400, scoped, tag = 'input window, operand 12, single buffered']
    #allocation17 [shape = 's32[1]{0}', space=sflag, size = 0x4, scoped, tag = 'scoped memory for seq2seq_forward.1']
    #allocation18 [shape = 'u8[512]{0}', space=vmem, size = 0x400, scoped, tag = 'input window, operand 15, single buffered']
    #allocation19 [shape = 'u8[512]{0}', space=vmem, size = 0x400, scoped, tag = 'input window, operand 18, single buffered']
    #allocation20 [shape = 's32[1]{0}', space=sflag, size = 0x4, scoped, tag = 'scoped memory for seq2seq_forward.1']
    #allocation21 [shape = 'u8[16384]{0}', space=vmem, size = 0x4000, scoped, tag = 'input window, operand 23, single buffered']
    %32 = vsyncpa [#allocation3], 0
    %33 = vsyncpa [#allocation5], 0
    %34 = vsyncpa [#allocation8], 0
    %35 = vsyncpa [#allocation11], 0
    %36 = vsyncpa [#allocation14], 0
    %37 = vsyncpa [#allocation17], 0
    %38 = vsyncpa [#allocation20], 0
    // Predicated region
    $region2: #{seq2seq_forward.1} parent=1 // pred_check
      _
    $region3: #{seq2seq_forward.1} parent=1 // pred_check_branch
      %40 = sbr.rel (0) target = $region5
    $region4: #{seq2seq_forward.1} parent=1 // pred_region
      _
    $region5: #{seq2seq_forward.1} parent=1 // pred_fallthru
      _
    // Predicated region
    $region6: #{seq2seq_forward.1} parent=1 // pred_check
      _
    $region7: #{seq2seq_forward.1} parent=1 // pred_check_branch
      %42 = sbr.rel (0) target = $region9
    $region8: #{seq2seq_forward.1} parent=1 // pred_region
      _
    $region9: #{seq2seq_forward.1} parent=1 // pred_fallthru
      _
    // Predicated region
    $region10: #{seq2seq_forward.1} parent=1 // pred_check
      _
    $region11: #{seq2seq_forward.1} parent=1 // pred_check_branch
      %44 = sbr.rel (0) target = $region13
    $region12: #{seq2seq_forward.1} parent=1 // pred_region
      %s46 = ssub.s32 16, 16
      %47 = vsyncadd [#allocation3], %s46
      %s49 = sshll.u32 [#allocation2], 4
      %s50 = int_to_ptr.vmem [resolvable:$true] %s49
      %52 = dma.hbm_to_vmem [thread:$0]  %s2, 16, %s50, [#allocation3]
    $region13: #{seq2seq_forward.1} parent=1 // pred_fallthru
      _
    // Predicated region
    $region14: #{seq2seq_forward.1} parent=1 // pred_check
      _
    $region15: #{seq2seq_forward.1} parent=1 // pred_check_branch
      %54 = sbr.rel (0) target = $region17
    $region16: #{seq2seq_forward.1} parent=1 // pred_region
      %s56 = ssub.s32 16, 16
      %57 = vsyncadd [#allocation5], %s56
      %s59 = sshll.u32 [#allocation4], 4
      %s60 = int_to_ptr.vmem [resolvable:$true] %s59
      %62 = dma.hbm_to_vmem [thread:$0]  %s3, 16, %s60, [#allocation5]
    $region17: #{seq2seq_forward.1} parent=1 // pred_fallthru
      _
    // Predicated region
    $region18: #{seq2seq_forward.1} parent=1 // pred_check
      _
    $region19: #{seq2seq_forward.1} parent=1 // pred_check_branch
      %64 = sbr.rel (0) target = $region21
    $region20: #{seq2seq_forward.1} parent=1 // pred_region
      %s66 = ssub.s32 16, 16
      %67 = vsyncadd [#allocation5], %s66
      %s69 = sshll.u32 [#allocation6], 4
      %s70 = int_to_ptr.vmem [resolvable:$true] %s69
      %72 = dma.hbm_to_vmem [thread:$0]  %s4, 16, %s70, [#allocation5]
    $region21: #{seq2seq_forward.1} parent=1 // pred_fallthru
      _
    // Predicated region
    $region22: #{seq2seq_forward.1} parent=1 // pred_check
      _
    $region23: #{seq2seq_forward.1} parent=1 // pred_check_branch
      %74 = sbr.rel (0) target = $region25
    $region24: #{seq2seq_forward.1} parent=1 // pred_region
      %s76 = ssub.s32 16, 16
      %77 = vsyncadd [#allocation8], %s76
      %s79 = sshll.u32 [#allocation7], 4
      %s80 = int_to_ptr.vmem [resolvable:$true] %s79
      %82 = dma.hbm_to_vmem [thread:$0]  %s5, 16, %s80, [#allocation8]
    $region25: #{seq2seq_forward.1} parent=1 // pred_fallthru
      _
    // Predicated region
    $region26: #{seq2seq_forward.1} parent=1 // pred_check
      _
    $region27: #{seq2seq_forward.1} parent=1 // pred_check_branch
      %84 = sbr.rel (0) target = $region29
    $region28: #{seq2seq_forward.1} parent=1 // pred_region
      %s86 = ssub.s32 128, 128
      %87 = vsyncadd [#allocation8], %s86
      %s89 = sshll.u32 [#allocation9], 4
      %s90 = int_to_ptr.vmem [resolvable:$true] %s89
      %92 = dma.hbm_to_vmem [thread:$0]  %s6, 128, %s90, [#allocation8]
    $region29: #{seq2seq_forward.1} parent=1 // pred_fallthru
      _
    // Predicated region
    $region30: #{seq2seq_forward.1} parent=1 // pred_check
      _
    $region31: #{seq2seq_forward.1} parent=1 // pred_check_branch
      %94 = sbr.rel (0) target = $region33
    $region32: #{seq2seq_forward.1} parent=1 // pred_region
      %s96 = ssub.s32 16, 16
      %97 = vsyncadd [#allocation11], %s96
      %s99 = sshll.u32 [#allocation10], 4
      %s100 = int_to_ptr.vmem [resolvable:$true] %s99
      %102 = dma.hbm_to_vmem [thread:$0]  %s7, 16, %s100, [#allocation11]
    $region33: #{seq2seq_forward.1} parent=1 // pred_fallthru
      _
    // Predicated region
    $region34: #{seq2seq_forward.1} parent=1 // pred_check
      _
    $region35: #{seq2seq_forward.1} parent=1 // pred_check_branch
      %104 = sbr.rel (0) target = $region37
    $region36: #{seq2seq_forward.1} parent=1 // pred_region
      _
    $region37: #{seq2seq_forward.1} parent=1 // pred_fallthru
      _
    // Predicated region
    $region38: #{seq2seq_forward.1} parent=1 // pred_check
      _
    $region39: #{seq2seq_forward.1} parent=1 // pred_check_branch
      %106 = sbr.rel (0) target = $region41
    $region40: #{seq2seq_forward.1} parent=1 // pred_region
      %s108 = ssub.s32 16, 16
      %109 = vsyncadd [#allocation11], %s108
      %s111 = sshll.u32 [#allocation12], 4
      %s112 = int_to_ptr.vmem [resolvable:$true] %s111
      %114 = dma.hbm_to_vmem [thread:$0]  %s9, 16, %s112, [#allocation11]
    $region41: #{seq2seq_forward.1} parent=1 // pred_fallthru
      _
    // Predicated region
    $region42: #{seq2seq_forward.1} parent=1 // pred_check
      _
    $region43: #{seq2seq_forward.1} parent=1 // pred_check_branch
      %116 = sbr.rel (0) target = $region45
    $region44: #{seq2seq_forward.1} parent=1 // pred_region
      %s118 = ssub.s32 64, 64
      %119 = vsyncadd [#allocation14], %s118
      %s121 = sshll.u32 [#allocation13], 4
      %s122 = int_to_ptr.vmem [resolvable:$true] %s121
      %124 = dma.hbm_to_vmem [thread:$0]  %s10, 64, %s122, [#allocation14]
    $region45: #{seq2seq_forward.1} parent=1 // pred_fallthru
      _
    // Predicated region
    $region46: #{seq2seq_forward.1} parent=1 // pred_check
      _
    $region47: #{seq2seq_forward.1} parent=1 // pred_check_branch
      %126 = sbr.rel (0) target = $region49
    $region48: #{seq2seq_forward.1} parent=1 // pred_region
      %s128 = ssub.s32 128, 128
      %129 = vsyncadd [#allocation14], %s128
      %s131 = sshll.u32 [#allocation15], 4
      %s132 = int_to_ptr.vmem [resolvable:$true] %s131
      %134 = dma.hbm_to_vmem [thread:$0]  %s11, 128, %s132, [#allocation14]
    $region49: #{seq2seq_forward.1} parent=1 // pred_fallthru
      _
    // Predicated region
    $region50: #{seq2seq_forward.1} parent=1 // pred_check
      _
    $region51: #{seq2seq_forward.1} parent=1 // pred_check_branch
      %136 = sbr.rel (0) target = $region53
    $region52: #{seq2seq_forward.1} parent=1 // pred_region
      %s138 = ssub.s32 16, 16
      %139 = vsyncadd [#allocation17], %s138
      %s141 = sshll.u32 [#allocation16], 4
      %s142 = int_to_ptr.vmem [resolvable:$true] %s141
      %144 = dma.hbm_to_vmem [thread:$0]  %s12, 16, %s142, [#allocation17]
    $region53: #{seq2seq_forward.1} parent=1 // pred_fallthru
      _
    // Predicated region
    $region54: #{seq2seq_forward.1} parent=1 // pred_check
      _
    $region55: #{seq2seq_forward.1} parent=1 // pred_check_branch
      %146 = sbr.rel (0) target = $region57
    $region56: #{seq2seq_forward.1} parent=1 // pred_region
      _
    $region57: #{seq2seq_forward.1} parent=1 // pred_fallthru
      _
    // Predicated region
    $region58: #{seq2seq_forward.1} parent=1 // pred_check
      _
    $region59: #{seq2seq_forward.1} parent=1 // pred_check_branch
      %148 = sbr.rel (0) target = $region61
    $region60: #{seq2seq_forward.1} parent=1 // pred_region
      _
    $region61: #{seq2seq_forward.1} parent=1 // pred_fallthru
      _
    // Predicated region
    $region62: #{seq2seq_forward.1} parent=1 // pred_check
      _
    $region63: #{seq2seq_forward.1} parent=1 // pred_check_branch
      %150 = sbr.rel (0) target = $region65
    $region64: #{seq2seq_forward.1} parent=1 // pred_region
      %s152 = ssub.s32 16, 16
      %153 = vsyncadd [#allocation17], %s152
      %s155 = sshll.u32 [#allocation18], 4
      %s156 = int_to_ptr.vmem [resolvable:$true] %s155
      %158 = dma.hbm_to_vmem [thread:$0]  %s15, 16, %s156, [#allocation17]
    $region65: #{seq2seq_forward.1} parent=1 // pred_fallthru
      _
    // Predicated region
    $region66: #{seq2seq_forward.1} parent=1 // pred_check
      _
    $region67: #{seq2seq_forward.1} parent=1 // pred_check_branch
      %160 = sbr.rel (0) target = $region69
    $region68: #{seq2seq_forward.1} parent=1 // pred_region
      _
    $region69: #{seq2seq_forward.1} parent=1 // pred_fallthru
      _
    // Predicated region
    $region70: #{seq2seq_forward.1} parent=1 // pred_check
      _
    $region71: #{seq2seq_forward.1} parent=1 // pred_check_branch
      %162 = sbr.rel (0) target = $region73
    $region72: #{seq2seq_forward.1} parent=1 // pred_region
      _
    $region73: #{seq2seq_forward.1} parent=1 // pred_fallthru
      _
    // Predicated region
    $region74: #{seq2seq_forward.1} parent=1 // pred_check
      _
    $region75: #{seq2seq_forward.1} parent=1 // pred_check_branch
      %164 = sbr.rel (0) target = $region77
    $region76: #{seq2seq_forward.1} parent=1 // pred_region
      %s166 = ssub.s32 16, 16
      %167 = vsyncadd [#allocation20], %s166
      %s169 = sshll.u32 [#allocation19], 4
      %s170 = int_to_ptr.vmem [resolvable:$true] %s169
      %172 = dma.hbm_to_vmem [thread:$0]  %s18, 16, %s170, [#allocation20]
    $region77: #{seq2seq_forward.1} parent=1 // pred_fallthru
      _
    // Predicated region
    $region78: #{seq2seq_forward.1} parent=1 // pred_check
      _
    $region79: #{seq2seq_forward.1} parent=1 // pred_check_branch
      %174 = sbr.rel (0) target = $region81
    $region80: #{seq2seq_forward.1} parent=1 // pred_region
      _
    $region81: #{seq2seq_forward.1} parent=1 // pred_fallthru
      _
    // Predicated region
    $region82: #{seq2seq_forward.1} parent=1 // pred_check
      _
    $region83: #{seq2seq_forward.1} parent=1 // pred_check_branch
      %176 = sbr.rel (0) target = $region85
    $region84: #{seq2seq_forward.1} parent=1 // pred_region
      _
    $region85: #{seq2seq_forward.1} parent=1 // pred_fallthru
      _
    // Predicated region
    $region86: #{seq2seq_forward.1} parent=1 // pred_check
      _
    $region87: #{seq2seq_forward.1} parent=1 // pred_check_branch
      %178 = sbr.rel (0) target = $region89
    $region88: #{seq2seq_forward.1} parent=1 // pred_region
      _
    $region89: #{seq2seq_forward.1} parent=1 // pred_fallthru
      _
    // Predicated region
    $region90: #{seq2seq_forward.1} parent=1 // pred_check
      _
    $region91: #{seq2seq_forward.1} parent=1 // pred_check_branch
      %180 = sbr.rel (0) target = $region93
    $region92: #{seq2seq_forward.1} parent=1 // pred_region
      _
    $region93: #{seq2seq_forward.1} parent=1 // pred_fallthru
      _
    // Predicated region
    $region94: #{seq2seq_forward.1} parent=1 // pred_check
      _
    $region95: #{seq2seq_forward.1} parent=1 // pred_check_branch
      %182 = sbr.rel (0) target = $region97
    $region96: #{seq2seq_forward.1} parent=1 // pred_region
      %s184 = ssub.s32 512, 512
      %185 = vsyncadd [#allocation20], %s184
      %s186 = sshll.u32 [#allocation21], 4
      %s187 = int_to_ptr.vmem [resolvable:$true] %s186
      %192 = dma.hbm_to_vmem [thread:$0]  %s23, 512, %s187, [#allocation20], 128, 128, 8
    $region97: #{seq2seq_forward.1} parent=1 // pred_fallthru
      _
    // Predicated region
    $region98: #{seq2seq_forward.1} parent=1 // pred_check
      _
    $region99: #{seq2seq_forward.1} parent=1 // pred_check_branch
      %194 = sbr.rel (0) target = $region101
    $region100: #{seq2seq_forward.1} parent=1 // pred_region
      _
    $region101: #{seq2seq_forward.1} parent=1 // pred_fallthru
      _
    // Predicated region
    $region102: #{seq2seq_forward.1} parent=1 // pred_check
      _
    $region103: #{seq2seq_forward.1} parent=1 // pred_check_branch
      %196 = sbr.rel (0) target = $region105
    $region104: #{seq2seq_forward.1} parent=1 // pred_region
      _
    $region105: #{seq2seq_forward.1} parent=1 // pred_fallthru
      _
    // Predicated region
    $region106: #{seq2seq_forward.1} parent=1 // pred_check
      _
    $region107: #{seq2seq_forward.1} parent=1 // pred_check_branch
      %198 = sbr.rel (0) target = $region109
    $region108: #{seq2seq_forward.1} parent=1 // pred_region
      _
    $region109: #{seq2seq_forward.1} parent=1 // pred_fallthru
      _
    // Predicated region
    $region110: #{seq2seq_forward.1} parent=1 // pred_check
      _
    $region111: #{seq2seq_forward.1} parent=1 // pred_check_branch
      %200 = sbr.rel (0) target = $region113
    $region112: #{seq2seq_forward.1} parent=1 // pred_region
      %201 = dma.done [#allocation3], 16
    $region113: #{seq2seq_forward.1} parent=1 // pred_fallthru
      _
    // Predicated region
    $region114: #{seq2seq_forward.1} parent=1 // pred_check
      _
    $region115: #{seq2seq_forward.1} parent=1 // pred_check_branch
      %203 = sbr.rel (0) target = $region117
    $region116: #{seq2seq_forward.1} parent=1 // pred_region
      %204 = dma.done [#allocation5], 16
    $region117: #{seq2seq_forward.1} parent=1 // pred_fallthru
      _
    // Predicated region
    $region118: #{seq2seq_forward.1} parent=1 // pred_check
      _
    $region119: #{seq2seq_forward.1} parent=1 // pred_check_branch
      %206 = sbr.rel (0) target = $region121
    $region120: #{seq2seq_forward.1} parent=1 // pred_region
      %207 = dma.done [#allocation5], 16
    $region121: #{seq2seq_forward.1} parent=1 // pred_fallthru
      _
    // Predicated region
    $region122: #{seq2seq_forward.1} parent=1 // pred_check
      _
    $region123: #{seq2seq_forward.1} parent=1 // pred_check_branch
      %209 = sbr.rel (0) target = $region125
    $region124: #{seq2seq_forward.1} parent=1 // pred_region
      %210 = dma.done [#allocation8], 16
    $region125: #{seq2seq_forward.1} parent=1 // pred_fallthru
      _
    // Predicated region
    $region126: #{seq2seq_forward.1} parent=1 // pred_check
      _
    $region127: #{seq2seq_forward.1} parent=1 // pred_check_branch
      %212 = sbr.rel (0) target = $region129
    $region128: #{seq2seq_forward.1} parent=1 // pred_region
      %213 = dma.done [#allocation8], 128
    $region129: #{seq2seq_forward.1} parent=1 // pred_fallthru
      _
    // Predicated region
    $region130: #{seq2seq_forward.1} parent=1 // pred_check
      _
    $region131: #{seq2seq_forward.1} parent=1 // pred_check_branch
      %215 = sbr.rel (0) target = $region133
    $region132: #{seq2seq_forward.1} parent=1 // pred_region
      %216 = dma.done [#allocation11], 16
    $region133: #{seq2seq_forward.1} parent=1 // pred_fallthru
      _
    // Predicated region
    $region134: #{seq2seq_forward.1} parent=1 // pred_check
      _
    $region135: #{seq2seq_forward.1} parent=1 // pred_check_branch
      %218 = sbr.rel (0) target = $region137
    $region136: #{seq2seq_forward.1} parent=1 // pred_region
      %219 = dma.done [#allocation11], 16
    $region137: #{seq2seq_forward.1} parent=1 // pred_fallthru
      _
    // Predicated region
    $region138: #{seq2seq_forward.1} parent=1 // pred_check
      _
    $region139: #{seq2seq_forward.1} parent=1 // pred_check_branch
      %221 = sbr.rel (0) target = $region141
    $region140: #{seq2seq_forward.1} parent=1 // pred_region
      %222 = dma.done [#allocation14], 64
    $region141: #{seq2seq_forward.1} parent=1 // pred_fallthru
      _
    // Predicated region
    $region142: #{seq2seq_forward.1} parent=1 // pred_check
      _
    $region143: #{seq2seq_forward.1} parent=1 // pred_check_branch
      %224 = sbr.rel (0) target = $region145
    $region144: #{seq2seq_forward.1} parent=1 // pred_region
      %225 = dma.done [#allocation14], 128
    $region145: #{seq2seq_forward.1} parent=1 // pred_fallthru
      _
    // Predicated region
    $region146: #{seq2seq_forward.1} parent=1 // pred_check
      _
    $region147: #{seq2seq_forward.1} parent=1 // pred_check_branch
      %227 = sbr.rel (0) target = $region149
    $region148: #{seq2seq_forward.1} parent=1 // pred_region
      %228 = dma.done [#allocation17], 16
    $region149: #{seq2seq_forward.1} parent=1 // pred_fallthru
      _
    // Predicated region
    $region150: #{seq2seq_forward.1} parent=1 // pred_check
      _
    $region151: #{seq2seq_forward.1} parent=1 // pred_check_branch
      %230 = sbr.rel (0) target = $region153
    $region152: #{seq2seq_forward.1} parent=1 // pred_region
      %231 = dma.done [#allocation17], 16
    $region153: #{seq2seq_forward.1} parent=1 // pred_fallthru
      _
    // Predicated region
    $region154: #{seq2seq_forward.1} parent=1 // pred_check
      _
    $region155: #{seq2seq_forward.1} parent=1 // pred_check_branch
      %233 = sbr.rel (0) target = $region157
    $region156: #{seq2seq_forward.1} parent=1 // pred_region
      %234 = dma.done [#allocation20], 16
    $region157: #{seq2seq_forward.1} parent=1 // pred_fallthru
      _
    // Predicated region
    $region158: #{seq2seq_forward.1} parent=1 // pred_check
      _
    $region159: #{seq2seq_forward.1} parent=1 // pred_check_branch
      %236 = sbr.rel (0) target = $region161
    $region160: #{seq2seq_forward.1} parent=1 // pred_region
      %237 = dma.done [#allocation20], 512
    $region161: #{seq2seq_forward.1} parent=1 // pred_fallthru
      _
    %v238 = vld [vmem:[%s0] sm:$0xff]
    %v239 = vld [vmem:[%s0 + $0x8] sm:$0xff]
    %v240 = vld [vmem:[%s0 + $0x10] sm:$0xff]
    %v241 = vld [vmem:[%s0 + $0x18] sm:$0xff]
    %v242 = vld [vmem:[%s0 + $0x20] sm:$0xff]
    %v243 = vld [vmem:[%s0 + $0x28] sm:$0xff]
    %v244 = vld [vmem:[%s0 + $0x30] sm:$0xff]
    %v245 = vld [vmem:[%s0 + $0x38] sm:$0xff]
    %v246 = vld [vmem:[#allocation2] sm:$0x1]
    %v248 = vlaneseq
    %v249 = vshrl.u32 %v248, 7
    %v250 = vsub.s32 0, %v249
    %v251 = vrot.slane %v246, %v250
    %v253 = vsub.f32 %v238, %v251
    %v254 = vsub.f32 %v239, %v251
    %v255 = vsub.f32 %v240, %v251
    %v256 = vsub.f32 %v241, %v251
    %v257 = vsub.f32 %v242, %v251
    %v258 = vsub.f32 %v243, %v251
    %v259 = vsub.f32 %v244, %v251
    %v260 = vsub.f32 %v245, %v251
    %v261 = vld [vmem:[#allocation4] sm:$0x1]
    %v263 = vlaneseq
    %v264 = vshrl.u32 %v263, 7
    %v265 = vsub.s32 0, %v264
    %v266 = vrot.slane %v261, %v265
    %v268 = vmul.f32 %v253, %v266
    %v269 = vmul.f32 %v254, %v266
    %v270 = vmul.f32 %v255, %v266
    %v271 = vmul.f32 %v256, %v266
    %v272 = vmul.f32 %v257, %v266
    %v273 = vmul.f32 %v258, %v266
    %v274 = vmul.f32 %v259, %v266
    %v275 = vmul.f32 %v260, %v266
    %v276 = vld [vmem:[%s1] sm:$0xff]
    %v277 = vld [vmem:[#allocation6] sm:$0x1]
    %v279 = vlaneseq
    %v280 = vshrl.u32 %v279, 7
    %v281 = vsub.s32 0, %v280
    %v282 = vrot.slane %v277, %v281
    %v284 = vsub.f32 %v276, %v282
    %v285 = vld [vmem:[#allocation7] sm:$0x1]
    %v287 = vlaneseq
    %v288 = vshrl.u32 %v287, 7
    %v289 = vsub.s32 0, %v288
    %v290 = vrot.slane %v285, %v289
    %v292 = vmul.f32 %v284, %v290
    %v293 = vld [vmem:[#allocation9] sm:$0x3f]
    %v294 = vld [vmem:[#allocation10] sm:$0x1]
    %v296 = vlaneseq
    %v297 = vshrl.u32 %v296, 7
    %v298 = vsub.s32 0, %v297
    %v299 = vrot.slane %v294, %v298
    %vm301 = vcmask 48128
    %v303 = vsel %vm301, %v292, 0
    %vm305 = vcmask 1045504
    %v307 = vsel %vm305, %v293, 0
    %309 = vmatprep.subr.mxu0 0.0
    %310 = vmatpush1.msra.mxu0 0.0
    %311 = vmatprep.subr.mxu0 0.0
    %312 = vmatpush1.msra.mxu0 0.0
    %313 = vmatprep.subr.mxu0 0.0
    %314 = vmatpush1.msra.mxu0 0.0
    %315 = vmatprep.subr.mxu0 0.0
    %316 = vmatpush1.msra.mxu0 0.0
    %317 = vmatprep.subr.mxu0 0.0
    %318 = vmatpush1.msra.mxu0 0.0
    %319 = vmatprep.subr.mxu0 0.0
    %320 = vmatpush1.msra.mxu0 0.0
    %321 = vmatprep.subr.mxu0 0.0
    %322 = vmatpush1.msra.mxu0 0.0
    %323 = vmatprep.subr.mxu0 0.0
    %324 = vmatpush1.msra.mxu0 0.0
    %325 = vmatprep.subr.mxu0 0.0
    %326 = vmatpush1.msra.mxu0 0.0
    %327 = vmatprep.subr.mxu0 0.0
    %328 = vmatpush1.msra.mxu0 0.0
    %329 = vmatprep.subr.mxu0 0.0
    %330 = vmatpush1.msra.mxu0 0.0
    %331 = vmatprep.subr.mxu0 0.0
    %332 = vmatpush1.msra.mxu0 0.0
    %333 = vmatprep.subr.mxu0 0.0
    %334 = vmatpush1.msra.mxu0 0.0
    %335 = vmatprep.subr.mxu0 0.0
    %336 = vmatpush1.msra.mxu0 0.0
    %337 = vmatprep.subr.mxu0 0.0
    %338 = vmatpush1.msra.mxu0 0.0
    %339 = vmatprep.subr.mxu0 0.0
    %340 = vmatpush1.msra.mxu0 %v307
    %341 = vmatprep.subr.mxu0 0.0
    %342 = vmatpush2.msra.mxu0 0.0
    %343 = vmatprep.subr.mxu0 0.0
    %344 = vmatpush2.msra.mxu0 0.0
    %345 = vmatprep.subr.mxu0 0.0
    %346 = vmatpush2.msra.mxu0 0.0
    %347 = vmatprep.subr.mxu0 0.0
    %348 = vmatpush2.msra.mxu0 0.0
    %349 = vmatprep.subr.mxu0 0.0
    %350 = vmatpush2.msra.mxu0 0.0
    %351 = vmatprep.subr.mxu0 0.0
    %352 = vmatpush2.msra.mxu0 0.0
    %353 = vmatprep.subr.mxu0 0.0
    %354 = vmatpush2.msra.mxu0 0.0
    %355 = vmatprep.subr.mxu0 0.0
    %356 = vmatpush2.msra.mxu0 0.0
    %357 = vmatprep.subr.mxu0 0.0
    %358 = vmatpush2.msra.mxu0 0.0
    %359 = vmatprep.subr.mxu0 0.0
    %360 = vmatpush2.msra.mxu0 0.0
    %361 = vmatprep.subr.mxu0 0.0
    %362 = vmatpush2.msra.mxu0 0.0
    %363 = vmatprep.subr.mxu0 0.0
    %364 = vmatpush2.msra.mxu0 0.0
    %365 = vmatprep.subr.mxu0 0.0
    %366 = vmatpush2.msra.mxu0 0.0
    %367 = vmatprep.subr.mxu0 0.0
    %368 = vmatpush2.msra.mxu0 0.0
    %369 = vmatprep.subr.mxu0 0.0
    %370 = vmatpush2.msra.mxu0 0.0
    %371 = vmatprep.subr.mxu0 0.0
    %372 = vmatpush2.msra.mxu0 0.0
    %373 = vmatprep.mubr.f32.mxu0 0.0
    %374 = vmatmul.mubr.f32.gmra.mxu0 %v303
    %v375 = vpop.f32.mrf.mxu0
    %v376 = vadd.f32 %v299, %v375
    %v377 = vpop.f32.mrf.mxu0
    %378 = vdwg.mxu0
    %v379 = vmax.f32 %v376, 0.0
    %v380 = vld [vmem:[%s8] sm:$0xff]
    %v381 = vld [vmem:[%s8 + $0x8] sm:$0xff]
    %v382 = vld [vmem:[#allocation12] sm:$0x1]
    %v384 = vlaneseq
    %v385 = vshrl.u32 %v384, 7
    %v386 = vsub.s32 0, %v385
    %v387 = vrot.slane %v382, %v386
    %vm389 = vcmask 130048
    %v391 = vsel %vm389, %v379, 0
    %393 = vmatprep.subr.mxu0 0.0
    %394 = vmatpush1.msra.mxu0 0.0
    %395 = vmatprep.subr.mxu0 0.0
    %396 = vmatpush1.msra.mxu0 0.0
    %397 = vmatprep.subr.mxu0 0.0
    %398 = vmatpush1.msra.mxu0 0.0
    %399 = vmatprep.subr.mxu0 0.0
    %400 = vmatpush1.msra.mxu0 0.0
    %401 = vmatprep.subr.mxu0 0.0
    %402 = vmatpush1.msra.mxu0 0.0
    %403 = vmatprep.subr.mxu0 0.0
    %404 = vmatpush1.msra.mxu0 0.0
    %405 = vmatprep.subr.mxu0 0.0
    %406 = vmatpush1.msra.mxu0 0.0
    %407 = vmatprep.subr.mxu0 0.0
    %408 = vmatpush1.msra.mxu0 0.0
    %409 = vmatprep.subr.mxu0 0.0
    %410 = vmatpush1.msra.mxu0 0.0
    %411 = vmatprep.subr.mxu0 0.0
    %412 = vmatpush1.msra.mxu0 0.0
    %413 = vmatprep.subr.mxu0 0.0
    %414 = vmatpush1.msra.mxu0 0.0
    %415 = vmatprep.subr.mxu0 0.0
    %416 = vmatpush1.msra.mxu0 0.0
    %417 = vmatprep.subr.mxu0 0.0
    %418 = vmatpush1.msra.mxu0 0.0
    %419 = vmatprep.subr.mxu0 0.0
    %420 = vmatpush1.msra.mxu0 0.0
    %421 = vmatprep.subr.mxu0 0.0
    %422 = vmatpush1.msra.mxu0 %v381
    %423 = vmatprep.subr.mxu0 0.0
    %424 = vmatpush1.msra.mxu0 %v380
    %425 = vmatprep.subr.mxu0 0.0
    %426 = vmatpush2.msra.mxu0 0.0
    %427 = vmatprep.subr.mxu0 0.0
    %428 = vmatpush2.msra.mxu0 0.0
    %429 = vmatprep.subr.mxu0 0.0
    %430 = vmatpush2.msra.mxu0 0.0
    %431 = vmatprep.subr.mxu0 0.0
    %432 = vmatpush2.msra.mxu0 0.0
    %433 = vmatprep.subr.mxu0 0.0
    %434 = vmatpush2.msra.mxu0 0.0
    %435 = vmatprep.subr.mxu0 0.0
    %436 = vmatpush2.msra.mxu0 0.0
    %437 = vmatprep.subr.mxu0 0.0
    %438 = vmatpush2.msra.mxu0 0.0
    %439 = vmatprep.subr.mxu0 0.0
    %440 = vmatpush2.msra.mxu0 0.0
    %441 = vmatprep.subr.mxu0 0.0
    %442 = vmatpush2.msra.mxu0 0.0
    %443 = vmatprep.subr.mxu0 0.0
    %444 = vmatpush2.msra.mxu0 0.0
    %445 = vmatprep.subr.mxu0 0.0
    %446 = vmatpush2.msra.mxu0 0.0
    %447 = vmatprep.subr.mxu0 0.0
    %448 = vmatpush2.msra.mxu0 0.0
    %449 = vmatprep.subr.mxu0 0.0
    %450 = vmatpush2.msra.mxu0 0.0
    %451 = vmatprep.subr.mxu0 0.0
    %452 = vmatpush2.msra.mxu0 0.0
    %453 = vmatprep.subr.mxu0 0.0
    %454 = vmatpush2.msra.mxu0 0.0
    %455 = vmatprep.subr.mxu0 0.0
    %456 = vmatpush2.msra.mxu0 0.0
    %457 = vmatprep.mubr.f32.mxu0 0.0
    %458 = vmatmul.mubr.f32.gmra.mxu0 %v391
    %v459 = vpop.f32.mrf.mxu0
    %v460 = vadd.f32 %v387, %v459
    %v461 = vpop.f32.mrf.mxu0
    %462 = vdwg.mxu0
    %v463 = vmax.f32 %v460, 0.0
    %v464 = vld [vmem:[#allocation13] sm:$0xf]
    %v465 = vld [vmem:[#allocation15] sm:$0xff]
    %v466 = vld [vmem:[#allocation16] sm:$0x1]
    %v468 = vlaneseq
    %v469 = vshrl.u32 %v468, 7
    %v470 = vsub.s32 0, %v469
    %v471 = vrot.slane %v466, %v470
    %vm473 = vcmask 64512
    %v475 = vsel %vm473, %v463, 0
    %477 = vmatprep.subr.mxu0 0.0
    %478 = vmatpush1.msra.mxu0 0.0
    %479 = vmatprep.subr.mxu0 0.0
    %480 = vmatpush1.msra.mxu0 0.0
    %481 = vmatprep.subr.mxu0 0.0
    %482 = vmatpush1.msra.mxu0 0.0
    %483 = vmatprep.subr.mxu0 0.0
    %484 = vmatpush1.msra.mxu0 0.0
    %485 = vmatprep.subr.mxu0 0.0
    %486 = vmatpush1.msra.mxu0 0.0
    %487 = vmatprep.subr.mxu0 0.0
    %488 = vmatpush1.msra.mxu0 0.0
    %489 = vmatprep.subr.mxu0 0.0
    %490 = vmatpush1.msra.mxu0 0.0
    %491 = vmatprep.subr.mxu0 0.0
    %492 = vmatpush1.msra.mxu0 0.0
    %493 = vmatprep.subr.mxu0 0.0
    %494 = vmatpush1.msra.mxu0 0.0
    %495 = vmatprep.subr.mxu0 0.0
    %496 = vmatpush1.msra.mxu0 0.0
    %497 = vmatprep.subr.mxu0 0.0
    %498 = vmatpush1.msra.mxu0 0.0
    %499 = vmatprep.subr.mxu0 0.0
    %500 = vmatpush1.msra.mxu0 0.0
    %501 = vmatprep.subr.mxu0 0.0
    %502 = vmatpush1.msra.mxu0 0.0
    %503 = vmatprep.subr.mxu0 0.0
    %504 = vmatpush1.msra.mxu0 0.0
    %505 = vmatprep.subr.mxu0 0.0
    %506 = vmatpush1.msra.mxu0 0.0
    %507 = vmatprep.subr.mxu0 0.0
    %508 = vmatpush1.msra.mxu0 %v465
    %509 = vmatprep.subr.mxu0 0.0
    %510 = vmatpush2.msra.mxu0 0.0
    %511 = vmatprep.subr.mxu0 0.0
    %512 = vmatpush2.msra.mxu0 0.0
    %513 = vmatprep.subr.mxu0 0.0
    %514 = vmatpush2.msra.mxu0 0.0
    %515 = vmatprep.subr.mxu0 0.0
    %516 = vmatpush2.msra.mxu0 0.0
    %517 = vmatprep.subr.mxu0 0.0
    %518 = vmatpush2.msra.mxu0 0.0
    %519 = vmatprep.subr.mxu0 0.0
    %520 = vmatpush2.msra.mxu0 0.0
    %521 = vmatprep.subr.mxu0 0.0
    %522 = vmatpush2.msra.mxu0 0.0
    %523 = vmatprep.subr.mxu0 0.0
    %524 = vmatpush2.msra.mxu0 0.0
    %525 = vmatprep.subr.mxu0 0.0
    %526 = vmatpush2.msra.mxu0 0.0
    %527 = vmatprep.subr.mxu0 0.0
    %528 = vmatpush2.msra.mxu0 0.0
    %529 = vmatprep.subr.mxu0 0.0
    %530 = vmatpush2.msra.mxu0 0.0
    %531 = vmatprep.subr.mxu0 0.0
    %532 = vmatpush2.msra.mxu0 0.0
    %533 = vmatprep.subr.mxu0 0.0
    %534 = vmatpush2.msra.mxu0 0.0
    %535 = vmatprep.subr.mxu0 0.0
    %536 = vmatpush2.msra.mxu0 0.0
    %537 = vmatprep.subr.mxu0 0.0
    %538 = vmatpush2.msra.mxu0 0.0
    %539 = vmatprep.subr.mxu0 0.0
    %540 = vmatpush2.msra.mxu0 0.0
    %541 = vmatprep.mubr.f32.mxu0 0.0
    %542 = vmatmul.mubr.f32.gmra.mxu0 %v475
    %v543 = vpop.f32.mrf.mxu0
    %v544 = vadd.f32 %v471, %v543
    %v545 = vpop.f32.mrf.mxu0
    %546 = vdwg.mxu0
    %vm547 = vcmask 31744
    %v549 = vsel %vm547, %v268, 0
    %v552 = vsel %vm547, %v269, 0
    %v555 = vsel %vm547, %v270, 0
    %v558 = vsel %vm547, %v271, 0
    %v561 = vsel %vm547, %v272, 0
    %v564 = vsel %vm547, %v273, 0
    %v567 = vsel %vm547, %v274, 0
    %v570 = vsel %vm547, %v275, 0
    %vm572 = vcmask 1043456
    %v574 = vsel %vm572, %v464, 0
    %576 = vmatprep.subr.mxu0 0.0
    %577 = vmatpush1.msra.mxu0 0.0
    %578 = vmatprep.subr.mxu0 0.0
    %579 = vmatpush1.msra.mxu0 0.0
    %580 = vmatprep.subr.mxu0 0.0
    %581 = vmatpush1.msra.mxu0 0.0
    %582 = vmatprep.subr.mxu0 0.0
    %583 = vmatpush1.msra.mxu0 0.0
    %584 = vmatprep.subr.mxu0 0.0
    %585 = vmatpush1.msra.mxu0 0.0
    %586 = vmatprep.subr.mxu0 0.0
    %587 = vmatpush1.msra.mxu0 0.0
    %588 = vmatprep.subr.mxu0 0.0
    %589 = vmatpush1.msra.mxu0 0.0
    %590 = vmatprep.subr.mxu0 0.0
    %591 = vmatpush1.msra.mxu0 0.0
    %592 = vmatprep.subr.mxu0 0.0
    %593 = vmatpush1.msra.mxu0 0.0
    %594 = vmatprep.subr.mxu0 0.0
    %595 = vmatpush1.msra.mxu0 0.0
    %596 = vmatprep.subr.mxu0 0.0
    %597 = vmatpush1.msra.mxu0 0.0
    %598 = vmatprep.subr.mxu0 0.0
    %599 = vmatpush1.msra.mxu0 0.0
    %600 = vmatprep.subr.mxu0 0.0
    %601 = vmatpush1.msra.mxu0 0.0
    %602 = vmatprep.subr.mxu0 0.0
    %603 = vmatpush1.msra.mxu0 0.0
    %604 = vmatprep.subr.mxu0 0.0
    %605 = vmatpush1.msra.mxu0 0.0
    %606 = vmatprep.subr.mxu0 0.0
    %607 = vmatpush1.msra.mxu0 %v574
    %608 = vmatprep.subr.mxu0 0.0
    %609 = vmatpush2.msra.mxu0 0.0
    %610 = vmatprep.subr.mxu0 0.0
    %611 = vmatpush2.msra.mxu0 0.0
    %612 = vmatprep.subr.mxu0 0.0
    %613 = vmatpush2.msra.mxu0 0.0
    %614 = vmatprep.subr.mxu0 0.0
    %615 = vmatpush2.msra.mxu0 0.0
    %616 = vmatprep.subr.mxu0 0.0
    %617 = vmatpush2.msra.mxu0 0.0
    %618 = vmatprep.subr.mxu0 0.0
    %619 = vmatpush2.msra.mxu0 0.0
    %620 = vmatprep.subr.mxu0 0.0
    %621 = vmatpush2.msra.mxu0 0.0
    %622 = vmatprep.subr.mxu0 0.0
    %623 = vmatpush2.msra.mxu0 0.0
    %624 = vmatprep.subr.mxu0 0.0
    %625 = vmatpush2.msra.mxu0 0.0
    %626 = vmatprep.subr.mxu0 0.0
    %627 = vmatpush2.msra.mxu0 0.0
    %628 = vmatprep.subr.mxu0 0.0
    %629 = vmatpush2.msra.mxu0 0.0
    %630 = vmatprep.subr.mxu0 0.0
    %631 = vmatpush2.msra.mxu0 0.0
    %632 = vmatprep.subr.mxu0 0.0
    %633 = vmatpush2.msra.mxu0 0.0
    %634 = vmatprep.subr.mxu0 0.0
    %635 = vmatpush2.msra.mxu0 0.0
    %636 = vmatprep.subr.mxu0 0.0
    %637 = vmatpush2.msra.mxu0 0.0
    %638 = vmatprep.subr.mxu0 0.0
    %639 = vmatpush2.msra.mxu0 0.0
    %640 = vmatprep.mubr.f32.mxu0 0.0
    %641 = vmatmul.mubr.f32.gmra.mxu0 %v549
    %v642 = vpop.f32.mrf.mxu0
    %v643 = vadd.f32 %v544, %v642
    %v644 = vpop.f32.mrf.mxu0
    %645 = vmatprep.mubr.f32.mxu0 0.0
    %646 = vmatmul.mubr.f32.gmra.mxu0 %v552
    %v647 = vpop.f32.mrf.mxu0
    %v648 = vadd.f32 %v544, %v647
    %v649 = vpop.f32.mrf.mxu0
    %650 = vmatprep.mubr.f32.mxu0 0.0
    %651 = vmatmul.mubr.f32.gmra.mxu0 %v555
    %v652 = vpop.f32.mrf.mxu0
    %v653 = vadd.f32 %v544, %v652
    %v654 = vpop.f32.mrf.mxu0
    %655 = vmatprep.mubr.f32.mxu0 0.0
    %656 = vmatmul.mubr.f32.gmra.mxu0 %v558
    %v657 = vpop.f32.mrf.mxu0
    %v658 = vadd.f32 %v544, %v657
    %v659 = vpop.f32.mrf.mxu0
    %660 = vmatprep.mubr.f32.mxu0 0.0
    %661 = vmatmul.mubr.f32.gmra.mxu0 %v561
    %v662 = vpop.f32.mrf.mxu0
    %v663 = vadd.f32 %v544, %v662
    %v664 = vpop.f32.mrf.mxu0
    %665 = vmatprep.mubr.f32.mxu0 0.0
    %666 = vmatmul.mubr.f32.gmra.mxu0 %v564
    %v667 = vpop.f32.mrf.mxu0
    %v668 = vadd.f32 %v544, %v667
    %v669 = vpop.f32.mrf.mxu0
    %670 = vmatprep.mubr.f32.mxu0 0.0
    %671 = vmatmul.mubr.f32.gmra.mxu0 %v567
    %v672 = vpop.f32.mrf.mxu0
    %v673 = vadd.f32 %v544, %v672
    %v674 = vpop.f32.mrf.mxu0
    %675 = vmatprep.mubr.f32.mxu0 0.0
    %676 = vmatmul.mubr.f32.gmra.mxu0 %v570
    %v677 = vpop.f32.mrf.mxu0
    %v678 = vadd.f32 %v544, %v677
    %v679 = vpop.f32.mrf.mxu0
    %680 = vdwg.mxu0
    %v681 = vld [vmem:[%s13] sm:$0xff]
    %v682 = vld [vmem:[%s13 + $0x8] sm:$0xff]
    %v683 = vld [vmem:[%s13 + $0x10] sm:$0xff]
    %v684 = vld [vmem:[%s13 + $0x18] sm:$0xff]
    %v685 = vld [vmem:[%s14] sm:$0xff]
    %v686 = vld [vmem:[%s14 + $0x8] sm:$0xff]
    %v687 = vld [vmem:[%s14 + $0x10] sm:$0xff]
    %v688 = vld [vmem:[%s14 + $0x18] sm:$0xff]
    %v689 = vld [vmem:[#allocation18] sm:$0x1]
    %v691 = vlaneseq
    %v692 = vshrl.u32 %v691, 7
    %v693 = vsub.s32 0, %v692
    %v694 = vrot.slane %v689, %v693
    %vm696 = vcmask 261120
    %v698 = vsel %vm696, %v643, 0
    %v701 = vsel %vm696, %v648, 0
    %v704 = vsel %vm696, %v653, 0
    %v707 = vsel %vm696, %v658, 0
    %v710 = vsel %vm696, %v663, 0
    %v713 = vsel %vm696, %v668, 0
    %v716 = vsel %vm696, %v673, 0
    %v719 = vsel %vm696, %v678, 0
    %721 = vmatprep.subr.mxu0 0.0
    %722 = vmatpush1.msra.mxu0 0.0
    %723 = vmatprep.subr.mxu0 0.0
    %724 = vmatpush1.msra.mxu0 0.0
    %725 = vmatprep.subr.mxu0 0.0
    %726 = vmatpush1.msra.mxu0 0.0
    %727 = vmatprep.subr.mxu0 0.0
    %728 = vmatpush1.msra.mxu0 0.0
    %729 = vmatprep.subr.mxu0 0.0
    %730 = vmatpush1.msra.mxu0 0.0
    %731 = vmatprep.subr.mxu0 0.0
    %732 = vmatpush1.msra.mxu0 0.0
    %733 = vmatprep.subr.mxu0 0.0
    %734 = vmatpush1.msra.mxu0 0.0
    %735 = vmatprep.subr.mxu0 0.0
    %736 = vmatpush1.msra.mxu0 0.0
    %737 = vmatprep.subr.mxu0 0.0
    %738 = vmatpush1.msra.mxu0 0.0
    %739 = vmatprep.subr.mxu0 0.0
    %740 = vmatpush1.msra.mxu0 0.0
    %741 = vmatprep.subr.mxu0 0.0
    %742 = vmatpush1.msra.mxu0 0.0
    %743 = vmatprep.subr.mxu0 0.0
    %744 = vmatpush1.msra.mxu0 0.0
    %745 = vmatprep.subr.mxu0 0.0
    %746 = vmatpush1.msra.mxu0 %v684
    %747 = vmatprep.subr.mxu0 0.0
    %748 = vmatpush1.msra.mxu0 %v683
    %749 = vmatprep.subr.mxu0 0.0
    %750 = vmatpush1.msra.mxu0 %v682
    %751 = vmatprep.subr.mxu0 0.0
    %752 = vmatpush1.msra.mxu0 %v681
    %753 = vmatprep.subr.mxu0 0.0
    %754 = vmatpush2.msra.mxu0 0.0
    %755 = vmatprep.subr.mxu0 0.0
    %756 = vmatpush2.msra.mxu0 0.0
    %757 = vmatprep.subr.mxu0 0.0
    %758 = vmatpush2.msra.mxu0 0.0
    %759 = vmatprep.subr.mxu0 0.0
    %760 = vmatpush2.msra.mxu0 0.0
    %761 = vmatprep.subr.mxu0 0.0
    %762 = vmatpush2.msra.mxu0 0.0
    %763 = vmatprep.subr.mxu0 0.0
    %764 = vmatpush2.msra.mxu0 0.0
    %765 = vmatprep.subr.mxu0 0.0
    %766 = vmatpush2.msra.mxu0 0.0
    %767 = vmatprep.subr.mxu0 0.0
    %768 = vmatpush2.msra.mxu0 0.0
    %769 = vmatprep.subr.mxu0 0.0
    %770 = vmatpush2.msra.mxu0 0.0
    %771 = vmatprep.subr.mxu0 0.0
    %772 = vmatpush2.msra.mxu0 0.0
    %773 = vmatprep.subr.mxu0 0.0
    %774 = vmatpush2.msra.mxu0 0.0
    %775 = vmatprep.subr.mxu0 0.0
    %776 = vmatpush2.msra.mxu0 0.0
    %777 = vmatprep.subr.mxu0 0.0
    %778 = vmatpush2.msra.mxu0 0.0
    %779 = vmatprep.subr.mxu0 0.0
    %780 = vmatpush2.msra.mxu0 0.0
    %781 = vmatprep.subr.mxu0 0.0
    %782 = vmatpush2.msra.mxu0 0.0
    %783 = vmatprep.subr.mxu0 0.0
    %784 = vmatpush2.msra.mxu0 0.0
    %785 = vmatprep.mubr.f32.mxu0 0.0
    %786 = vmatmul.mubr.f32.gmra.mxu0 %v698
    %v787 = vpop.f32.mrf.mxu0
    %v788 = vadd.f32 %v694, %v787
    %v789 = vpop.f32.mrf.mxu0
    %790 = vmatprep.mubr.f32.mxu0 0.0
    %791 = vmatmul.mubr.f32.gmra.mxu0 %v701
    %v792 = vpop.f32.mrf.mxu0
    %v793 = vadd.f32 %v694, %v792
    %v794 = vpop.f32.mrf.mxu0
    %795 = vmatprep.mubr.f32.mxu0 0.0
    %796 = vmatmul.mubr.f32.gmra.mxu0 %v704
    %v797 = vpop.f32.mrf.mxu0
    %v798 = vadd.f32 %v694, %v797
    %v799 = vpop.f32.mrf.mxu0
    %800 = vmatprep.mubr.f32.mxu0 0.0
    %801 = vmatmul.mubr.f32.gmra.mxu0 %v707
    %v802 = vpop.f32.mrf.mxu0
    %v803 = vadd.f32 %v694, %v802
    %v804 = vpop.f32.mrf.mxu0
    %805 = vmatprep.mubr.f32.mxu0 0.0
    %806 = vmatmul.mubr.f32.gmra.mxu0 %v710
    %v807 = vpop.f32.mrf.mxu0
    %v808 = vadd.f32 %v694, %v807
    %v809 = vpop.f32.mrf.mxu0
    %810 = vmatprep.mubr.f32.mxu0 0.0
    %811 = vmatmul.mubr.f32.gmra.mxu0 %v713
    %v812 = vpop.f32.mrf.mxu0
    %v813 = vadd.f32 %v694, %v812
    %v814 = vpop.f32.mrf.mxu0
    %815 = vmatprep.mubr.f32.mxu0 0.0
    %816 = vmatmul.mubr.f32.gmra.mxu0 %v716
    %v817 = vpop.f32.mrf.mxu0
    %v818 = vadd.f32 %v694, %v817
    %v819 = vpop.f32.mrf.mxu0
    %820 = vmatprep.mubr.f32.mxu0 0.0
    %821 = vmatmul.mubr.f32.gmra.mxu0 %v719
    %v822 = vpop.f32.mrf.mxu0
    %v823 = vadd.f32 %v694, %v822
    %v824 = vpop.f32.mrf.mxu0
    %825 = vdwg.mxu0
    %v827 = vsel %vm696, 0.0, 0
    %829 = vmatprep.subr.mxu0 0.0
    %830 = vmatpush1.msra.mxu0 0.0
    %831 = vmatprep.subr.mxu0 0.0
    %832 = vmatpush1.msra.mxu0 0.0
    %833 = vmatprep.subr.mxu0 0.0
    %834 = vmatpush1.msra.mxu0 0.0
    %835 = vmatprep.subr.mxu0 0.0
    %836 = vmatpush1.msra.mxu0 0.0
    %837 = vmatprep.subr.mxu0 0.0
    %838 = vmatpush1.msra.mxu0 0.0
    %839 = vmatprep.subr.mxu0 0.0
    %840 = vmatpush1.msra.mxu0 0.0
    %841 = vmatprep.subr.mxu0 0.0
    %842 = vmatpush1.msra.mxu0 0.0
    %843 = vmatprep.subr.mxu0 0.0
    %844 = vmatpush1.msra.mxu0 0.0
    %845 = vmatprep.subr.mxu0 0.0
    %846 = vmatpush1.msra.mxu0 0.0
    %847 = vmatprep.subr.mxu0 0.0
    %848 = vmatpush1.msra.mxu0 0.0
    %849 = vmatprep.subr.mxu0 0.0
    %850 = vmatpush1.msra.mxu0 0.0
    %851 = vmatprep.subr.mxu0 0.0
    %852 = vmatpush1.msra.mxu0 0.0
    %853 = vmatprep.subr.mxu0 0.0
    %854 = vmatpush1.msra.mxu0 %v688
    %855 = vmatprep.subr.mxu0 0.0
    %856 = vmatpush1.msra.mxu0 %v687
    %857 = vmatprep.subr.mxu0 0.0
    %858 = vmatpush1.msra.mxu0 %v686
    %859 = vmatprep.subr.mxu0 0.0
    %860 = vmatpush1.msra.mxu0 %v685
    %861 = vmatprep.subr.mxu0 0.0
    %862 = vmatpush2.msra.mxu0 0.0
    %863 = vmatprep.subr.mxu0 0.0
    %864 = vmatpush2.msra.mxu0 0.0
    %865 = vmatprep.subr.mxu0 0.0
    %866 = vmatpush2.msra.mxu0 0.0
    %867 = vmatprep.subr.mxu0 0.0
    %868 = vmatpush2.msra.mxu0 0.0
    %869 = vmatprep.subr.mxu0 0.0
    %870 = vmatpush2.msra.mxu0 0.0
    %871 = vmatprep.subr.mxu0 0.0
    %872 = vmatpush2.msra.mxu0 0.0
    %873 = vmatprep.subr.mxu0 0.0
    %874 = vmatpush2.msra.mxu0 0.0
    %875 = vmatprep.subr.mxu0 0.0
    %876 = vmatpush2.msra.mxu0 0.0
    %877 = vmatprep.subr.mxu0 0.0
    %878 = vmatpush2.msra.mxu0 0.0
    %879 = vmatprep.subr.mxu0 0.0
    %880 = vmatpush2.msra.mxu0 0.0
    %881 = vmatprep.subr.mxu0 0.0
    %882 = vmatpush2.msra.mxu0 0.0
    %883 = vmatprep.subr.mxu0 0.0
    %884 = vmatpush2.msra.mxu0 0.0
    %885 = vmatprep.subr.mxu0 0.0
    %886 = vmatpush2.msra.mxu0 0.0
    %887 = vmatprep.subr.mxu0 0.0
    %888 = vmatpush2.msra.mxu0 0.0
    %889 = vmatprep.subr.mxu0 0.0
    %890 = vmatpush2.msra.mxu0 0.0
    %891 = vmatprep.subr.mxu0 0.0
    %892 = vmatpush2.msra.mxu0 0.0
    %893 = vmatprep.mubr.f32.mxu0 0.0
    %894 = vmatmul.mubr.f32.gmra.mxu0 %v827
    %v895 = vpop.f32.mrf.mxu0
    %v896 = vadd.f32 0.0, %v895
    %v897 = vpop.f32.mrf.mxu0
    %898 = vdwg.mxu0
    %v899 = vadd.f32 %v788, %v896
    %v900 = vxor.u32 %v899, 2147483648
    %v901 = vmul.f32 %v900, 1.442695
    %v902 = vpow.pop %v901
    %v903 = vadd.f32 %v902, 1.0
    %v904 = vrcp.pop %v903
    %v905 = vmul.f32 1.0, %v904
    %v906 = vtanh.pop %v899
    %v907 = vmul.f32 %v905, 0.0
    %909 = vrot.lane.b32.xlu0 %v906, 32
    %v910 = vpop.permute.xlu0 %909
    %v912 = vmul.f32 %v905, %v910
    %914 = vrot.lane.b32.xlu0 %v912, 32
    %v915 = vpop.permute.xlu0 %914
    %v917 = vadd.f32 %v907, %v915
    %v918 = vtanh.pop %v917
    %920 = vrot.lane.b32.xlu0 %v918, 32
    %v921 = vpop.permute.xlu0 %920
    %v923 = vmul.f32 %v905, %v921
    %925 = vrot.lane.b32.xlu0 %v923, 64
    %v926 = vpop.permute.xlu0 %925
    %v927 = vsel %vm696, %v926, 0
    %929 = vmatprep.subr.mxu0 0.0
    %930 = vmatpush1.msra.mxu0 0.0
    %931 = vmatprep.subr.mxu0 0.0
    %932 = vmatpush1.msra.mxu0 0.0
    %933 = vmatprep.subr.mxu0 0.0
    %934 = vmatpush1.msra.mxu0 0.0
    %935 = vmatprep.subr.mxu0 0.0
    %936 = vmatpush1.msra.mxu0 0.0
    %937 = vmatprep.subr.mxu0 0.0
    %938 = vmatpush1.msra.mxu0 0.0
    %939 = vmatprep.subr.mxu0 0.0
    %940 = vmatpush1.msra.mxu0 0.0
    %941 = vmatprep.subr.mxu0 0.0
    %942 = vmatpush1.msra.mxu0 0.0
    %943 = vmatprep.subr.mxu0 0.0
    %944 = vmatpush1.msra.mxu0 0.0
    %945 = vmatprep.subr.mxu0 0.0
    %946 = vmatpush1.msra.mxu0 0.0
    %947 = vmatprep.subr.mxu0 0.0
    %948 = vmatpush1.msra.mxu0 0.0
    %949 = vmatprep.subr.mxu0 0.0
    %950 = vmatpush1.msra.mxu0 0.0
    %951 = vmatprep.subr.mxu0 0.0
    %952 = vmatpush1.msra.mxu0 0.0
    %953 = vmatprep.subr.mxu0 0.0
    %954 = vmatpush1.msra.mxu0 %v688
    %955 = vmatprep.subr.mxu0 0.0
    %956 = vmatpush1.msra.mxu0 %v687
    %957 = vmatprep.subr.mxu0 0.0
    %958 = vmatpush1.msra.mxu0 %v686
    %959 = vmatprep.subr.mxu0 0.0
    %960 = vmatpush1.msra.mxu0 %v685
    %961 = vmatprep.subr.mxu0 0.0
    %962 = vmatpush2.msra.mxu0 0.0
    %963 = vmatprep.subr.mxu0 0.0
    %964 = vmatpush2.msra.mxu0 0.0
    %965 = vmatprep.subr.mxu0 0.0
    %966 = vmatpush2.msra.mxu0 0.0
    %967 = vmatprep.subr.mxu0 0.0
    %968 = vmatpush2.msra.mxu0 0.0
    %969 = vmatprep.subr.mxu0 0.0
    %970 = vmatpush2.msra.mxu0 0.0
    %971 = vmatprep.subr.mxu0 0.0
    %972 = vmatpush2.msra.mxu0 0.0
    %973 = vmatprep.subr.mxu0 0.0
    %974 = vmatpush2.msra.mxu0 0.0
    %975 = vmatprep.subr.mxu0 0.0
    %976 = vmatpush2.msra.mxu0 0.0
    %977 = vmatprep.subr.mxu0 0.0
    %978 = vmatpush2.msra.mxu0 0.0
    %979 = vmatprep.subr.mxu0 0.0
    %980 = vmatpush2.msra.mxu0 0.0
    %981 = vmatprep.subr.mxu0 0.0
    %982 = vmatpush2.msra.mxu0 0.0
    %983 = vmatprep.subr.mxu0 0.0
    %984 = vmatpush2.msra.mxu0 0.0
    %985 = vmatprep.subr.mxu0 0.0
    %986 = vmatpush2.msra.mxu0 0.0
    %987 = vmatprep.subr.mxu0 0.0
    %988 = vmatpush2.msra.mxu0 0.0
    %989 = vmatprep.subr.mxu0 0.0
    %990 = vmatpush2.msra.mxu0 0.0
    %991 = vmatprep.subr.mxu0 0.0
    %992 = vmatpush2.msra.mxu0 0.0
    %993 = vmatprep.mubr.f32.mxu0 0.0
    %994 = vmatmul.mubr.f32.gmra.mxu0 %v927
    %v995 = vpop.f32.mrf.mxu0
    %v996 = vadd.f32 0.0, %v995
    %v997 = vpop.f32.mrf.mxu0
    %998 = vdwg.mxu0
    %v999 = vadd.f32 %v793, %v996
    %v1000 = vxor.u32 %v999, 2147483648
    %v1001 = vmul.f32 %v1000, 1.442695
    %v1002 = vpow.pop %v1001
    %v1003 = vadd.f32 %v1002, 1.0
    %v1004 = vrcp.pop %v1003
    %v1005 = vmul.f32 1.0, %v1004
    %v1006 = vtanh.pop %v999
    %v1007 = vmul.f32 %v1005, %v917
    %1009 = vrot.lane.b32.xlu0 %v1006, 32
    %v1010 = vpop.permute.xlu0 %1009
    %v1012 = vmul.f32 %v1005, %v1010
    %1014 = vrot.lane.b32.xlu0 %v1012, 32
    %v1015 = vpop.permute.xlu0 %1014
    %v1017 = vadd.f32 %v1007, %v1015
    %v1018 = vtanh.pop %v1017
    %1020 = vrot.lane.b32.xlu0 %v1018, 32
    %v1021 = vpop.permute.xlu0 %1020
    %v1023 = vmul.f32 %v1005, %v1021
    %1025 = vrot.lane.b32.xlu0 %v1023, 64
    %v1026 = vpop.permute.xlu0 %1025
    %v1027 = vsel %vm696, %v1026, 0
    %1029 = vmatprep.subr.mxu0 0.0
    %1030 = vmatpush1.msra.mxu0 0.0
    %1031 = vmatprep.subr.mxu0 0.0
    %1032 = vmatpush1.msra.mxu0 0.0
    %1033 = vmatprep.subr.mxu0 0.0
    %1034 = vmatpush1.msra.mxu0 0.0
    %1035 = vmatprep.subr.mxu0 0.0
    %1036 = vmatpush1.msra.mxu0 0.0
    %1037 = vmatprep.subr.mxu0 0.0
    %1038 = vmatpush1.msra.mxu0 0.0
    %1039 = vmatprep.subr.mxu0 0.0
    %1040 = vmatpush1.msra.mxu0 0.0
    %1041 = vmatprep.subr.mxu0 0.0
    %1042 = vmatpush1.msra.mxu0 0.0
    %1043 = vmatprep.subr.mxu0 0.0
    %1044 = vmatpush1.msra.mxu0 0.0
    %1045 = vmatprep.subr.mxu0 0.0
    %1046 = vmatpush1.msra.mxu0 0.0
    %1047 = vmatprep.subr.mxu0 0.0
    %1048 = vmatpush1.msra.mxu0 0.0
    %1049 = vmatprep.subr.mxu0 0.0
    %1050 = vmatpush1.msra.mxu0 0.0
    %1051 = vmatprep.subr.mxu0 0.0
    %1052 = vmatpush1.msra.mxu0 0.0
    %1053 = vmatprep.subr.mxu0 0.0
    %1054 = vmatpush1.msra.mxu0 %v688
    %1055 = vmatprep.subr.mxu0 0.0
    %1056 = vmatpush1.msra.mxu0 %v687
    %1057 = vmatprep.subr.mxu0 0.0
    %1058 = vmatpush1.msra.mxu0 %v686
    %1059 = vmatprep.subr.mxu0 0.0
    %1060 = vmatpush1.msra.mxu0 %v685
    %1061 = vmatprep.subr.mxu0 0.0
    %1062 = vmatpush2.msra.mxu0 0.0
    %1063 = vmatprep.subr.mxu0 0.0
    %1064 = vmatpush2.msra.mxu0 0.0
    %1065 = vmatprep.subr.mxu0 0.0
    %1066 = vmatpush2.msra.mxu0 0.0
    %1067 = vmatprep.subr.mxu0 0.0
    %1068 = vmatpush2.msra.mxu0 0.0
    %1069 = vmatprep.subr.mxu0 0.0
    %1070 = vmatpush2.msra.mxu0 0.0
    %1071 = vmatprep.subr.mxu0 0.0
    %1072 = vmatpush2.msra.mxu0 0.0
    %1073 = vmatprep.subr.mxu0 0.0
    %1074 = vmatpush2.msra.mxu0 0.0
    %1075 = vmatprep.subr.mxu0 0.0
    %1076 = vmatpush2.msra.mxu0 0.0
    %1077 = vmatprep.subr.mxu0 0.0
    %1078 = vmatpush2.msra.mxu0 0.0
    %1079 = vmatprep.subr.mxu0 0.0
    %1080 = vmatpush2.msra.mxu0 0.0
    %1081 = vmatprep.subr.mxu0 0.0
    %1082 = vmatpush2.msra.mxu0 0.0
    %1083 = vmatprep.subr.mxu0 0.0
    %1084 = vmatpush2.msra.mxu0 0.0
    %1085 = vmatprep.subr.mxu0 0.0
    %1086 = vmatpush2.msra.mxu0 0.0
    %1087 = vmatprep.subr.mxu0 0.0
    %1088 = vmatpush2.msra.mxu0 0.0
    %1089 = vmatprep.subr.mxu0 0.0
    %1090 = vmatpush2.msra.mxu0 0.0
    %1091 = vmatprep.subr.mxu0 0.0
    %1092 = vmatpush2.msra.mxu0 0.0
    %1093 = vmatprep.mubr.f32.mxu0 0.0
    %1094 = vmatmul.mubr.f32.gmra.mxu0 %v1027
    %v1095 = vpop.f32.mrf.mxu0
    %v1096 = vadd.f32 0.0, %v1095
    %v1097 = vpop.f32.mrf.mxu0
    %1098 = vdwg.mxu0
    %v1099 = vadd.f32 %v798, %v1096
    %v1100 = vxor.u32 %v1099, 2147483648
    %v1101 = vmul.f32 %v1100, 1.442695
    %v1102 = vpow.pop %v1101
    %v1103 = vadd.f32 %v1102, 1.0
    %v1104 = vrcp.pop %v1103
    %v1105 = vmul.f32 1.0, %v1104
    %v1106 = vtanh.pop %v1099
    %v1107 = vmul.f32 %v1105, %v1017
    %1109 = vrot.lane.b32.xlu0 %v1106, 32
    %v1110 = vpop.permute.xlu0 %1109
    %v1112 = vmul.f32 %v1105, %v1110
    %1114 = vrot.lane.b32.xlu0 %v1112, 32
    %v1115 = vpop.permute.xlu0 %1114
    %v1117 = vadd.f32 %v1107, %v1115
    %v1118 = vtanh.pop %v1117
    %1120 = vrot.lane.b32.xlu0 %v1118, 32
    %v1121 = vpop.permute.xlu0 %1120
    %v1123 = vmul.f32 %v1105, %v1121
    %1125 = vrot.lane.b32.xlu0 %v1123, 64
    %v1126 = vpop.permute.xlu0 %1125
    %v1127 = vsel %vm696, %v1126, 0
    %1129 = vmatprep.subr.mxu0 0.0
    %1130 = vmatpush1.msra.mxu0 0.0
    %1131 = vmatprep.subr.mxu0 0.0
    %1132 = vmatpush1.msra.mxu0 0.0
    %1133 = vmatprep.subr.mxu0 0.0
    %1134 = vmatpush1.msra.mxu0 0.0
    %1135 = vmatprep.subr.mxu0 0.0
    %1136 = vmatpush1.msra.mxu0 0.0
    %1137 = vmatprep.subr.mxu0 0.0
    %1138 = vmatpush1.msra.mxu0 0.0
    %1139 = vmatprep.subr.mxu0 0.0
    %1140 = vmatpush1.msra.mxu0 0.0
    %1141 = vmatprep.subr.mxu0 0.0
    %1142 = vmatpush1.msra.mxu0 0.0
    %1143 = vmatprep.subr.mxu0 0.0
    %1144 = vmatpush1.msra.mxu0 0.0
    %1145 = vmatprep.subr.mxu0 0.0
    %1146 = vmatpush1.msra.mxu0 0.0
    %1147 = vmatprep.subr.mxu0 0.0
    %1148 = vmatpush1.msra.mxu0 0.0
    %1149 = vmatprep.subr.mxu0 0.0
    %1150 = vmatpush1.msra.mxu0 0.0
    %1151 = vmatprep.subr.mxu0 0.0
    %1152 = vmatpush1.msra.mxu0 0.0
    %1153 = vmatprep.subr.mxu0 0.0
    %1154 = vmatpush1.msra.mxu0 %v688
    %1155 = vmatprep.subr.mxu0 0.0
    %1156 = vmatpush1.msra.mxu0 %v687
    %1157 = vmatprep.subr.mxu0 0.0
    %1158 = vmatpush1.msra.mxu0 %v686
    %1159 = vmatprep.subr.mxu0 0.0
    %1160 = vmatpush1.msra.mxu0 %v685
    %1161 = vmatprep.subr.mxu0 0.0
    %1162 = vmatpush2.msra.mxu0 0.0
    %1163 = vmatprep.subr.mxu0 0.0
    %1164 = vmatpush2.msra.mxu0 0.0
    %1165 = vmatprep.subr.mxu0 0.0
    %1166 = vmatpush2.msra.mxu0 0.0
    %1167 = vmatprep.subr.mxu0 0.0
    %1168 = vmatpush2.msra.mxu0 0.0
    %1169 = vmatprep.subr.mxu0 0.0
    %1170 = vmatpush2.msra.mxu0 0.0
    %1171 = vmatprep.subr.mxu0 0.0
    %1172 = vmatpush2.msra.mxu0 0.0
    %1173 = vmatprep.subr.mxu0 0.0
    %1174 = vmatpush2.msra.mxu0 0.0
    %1175 = vmatprep.subr.mxu0 0.0
    %1176 = vmatpush2.msra.mxu0 0.0
    %1177 = vmatprep.subr.mxu0 0.0
    %1178 = vmatpush2.msra.mxu0 0.0
    %1179 = vmatprep.subr.mxu0 0.0
    %1180 = vmatpush2.msra.mxu0 0.0
    %1181 = vmatprep.subr.mxu0 0.0
    %1182 = vmatpush2.msra.mxu0 0.0
    %1183 = vmatprep.subr.mxu0 0.0
    %1184 = vmatpush2.msra.mxu0 0.0
    %1185 = vmatprep.subr.mxu0 0.0
    %1186 = vmatpush2.msra.mxu0 0.0
    %1187 = vmatprep.subr.mxu0 0.0
    %1188 = vmatpush2.msra.mxu0 0.0
    %1189 = vmatprep.subr.mxu0 0.0
    %1190 = vmatpush2.msra.mxu0 0.0
    %1191 = vmatprep.subr.mxu0 0.0
    %1192 = vmatpush2.msra.mxu0 0.0
    %1193 = vmatprep.mubr.f32.mxu0 0.0
    %1194 = vmatmul.mubr.f32.gmra.mxu0 %v1127
    %v1195 = vpop.f32.mrf.mxu0
    %v1196 = vadd.f32 0.0, %v1195
    %v1197 = vpop.f32.mrf.mxu0
    %1198 = vdwg.mxu0
    %v1199 = vadd.f32 %v803, %v1196
    %v1200 = vxor.u32 %v1199, 2147483648
    %v1201 = vmul.f32 %v1200, 1.442695
    %v1202 = vpow.pop %v1201
    %v1203 = vadd.f32 %v1202, 1.0
    %v1204 = vrcp.pop %v1203
    %v1205 = vmul.f32 1.0, %v1204
    %v1206 = vtanh.pop %v1199
    %v1207 = vmul.f32 %v1205, %v1117
    %1209 = vrot.lane.b32.xlu0 %v1206, 32
    %v1210 = vpop.permute.xlu0 %1209
    %v1212 = vmul.f32 %v1205, %v1210
    %1214 = vrot.lane.b32.xlu0 %v1212, 32
    %v1215 = vpop.permute.xlu0 %1214
    %v1217 = vadd.f32 %v1207, %v1215
    %v1218 = vtanh.pop %v1217
    %1220 = vrot.lane.b32.xlu0 %v1218, 32
    %v1221 = vpop.permute.xlu0 %1220
    %v1223 = vmul.f32 %v1205, %v1221
    %1225 = vrot.lane.b32.xlu0 %v1223, 64
    %v1226 = vpop.permute.xlu0 %1225
    %v1227 = vsel %vm696, %v1226, 0
    %1229 = vmatprep.subr.mxu0 0.0
    %1230 = vmatpush1.msra.mxu0 0.0
    %1231 = vmatprep.subr.mxu0 0.0
    %1232 = vmatpush1.msra.mxu0 0.0
    %1233 = vmatprep.subr.mxu0 0.0
    %1234 = vmatpush1.msra.mxu0 0.0
    %1235 = vmatprep.subr.mxu0 0.0
    %1236 = vmatpush1.msra.mxu0 0.0
    %1237 = vmatprep.subr.mxu0 0.0
    %1238 = vmatpush1.msra.mxu0 0.0
    %1239 = vmatprep.subr.mxu0 0.0
    %1240 = vmatpush1.msra.mxu0 0.0
    %1241 = vmatprep.subr.mxu0 0.0
    %1242 = vmatpush1.msra.mxu0 0.0
    %1243 = vmatprep.subr.mxu0 0.0
    %1244 = vmatpush1.msra.mxu0 0.0
    %1245 = vmatprep.subr.mxu0 0.0
    %1246 = vmatpush1.msra.mxu0 0.0
    %1247 = vmatprep.subr.mxu0 0.0
    %1248 = vmatpush1.msra.mxu0 0.0
    %1249 = vmatprep.subr.mxu0 0.0
    %1250 = vmatpush1.msra.mxu0 0.0
    %1251 = vmatprep.subr.mxu0 0.0
    %1252 = vmatpush1.msra.mxu0 0.0
    %1253 = vmatprep.subr.mxu0 0.0
    %1254 = vmatpush1.msra.mxu0 %v688
    %1255 = vmatprep.subr.mxu0 0.0
    %1256 = vmatpush1.msra.mxu0 %v687
    %1257 = vmatprep.subr.mxu0 0.0
    %1258 = vmatpush1.msra.mxu0 %v686
    %1259 = vmatprep.subr.mxu0 0.0
    %1260 = vmatpush1.msra.mxu0 %v685
    %1261 = vmatprep.subr.mxu0 0.0
    %1262 = vmatpush2.msra.mxu0 0.0
    %1263 = vmatprep.subr.mxu0 0.0
    %1264 = vmatpush2.msra.mxu0 0.0
    %1265 = vmatprep.subr.mxu0 0.0
    %1266 = vmatpush2.msra.mxu0 0.0
    %1267 = vmatprep.subr.mxu0 0.0
    %1268 = vmatpush2.msra.mxu0 0.0
    %1269 = vmatprep.subr.mxu0 0.0
    %1270 = vmatpush2.msra.mxu0 0.0
    %1271 = vmatprep.subr.mxu0 0.0
    %1272 = vmatpush2.msra.mxu0 0.0
    %1273 = vmatprep.subr.mxu0 0.0
    %1274 = vmatpush2.msra.mxu0 0.0
    %1275 = vmatprep.subr.mxu0 0.0
    %1276 = vmatpush2.msra.mxu0 0.0
    %1277 = vmatprep.subr.mxu0 0.0
    %1278 = vmatpush2.msra.mxu0 0.0
    %1279 = vmatprep.subr.mxu0 0.0
    %1280 = vmatpush2.msra.mxu0 0.0
    %1281 = vmatprep.subr.mxu0 0.0
    %1282 = vmatpush2.msra.mxu0 0.0
    %1283 = vmatprep.subr.mxu0 0.0
    %1284 = vmatpush2.msra.mxu0 0.0
    %1285 = vmatprep.subr.mxu0 0.0
    %1286 = vmatpush2.msra.mxu0 0.0
    %1287 = vmatprep.subr.mxu0 0.0
    %1288 = vmatpush2.msra.mxu0 0.0
    %1289 = vmatprep.subr.mxu0 0.0
    %1290 = vmatpush2.msra.mxu0 0.0
    %1291 = vmatprep.subr.mxu0 0.0
    %1292 = vmatpush2.msra.mxu0 0.0
    %1293 = vmatprep.mubr.f32.mxu0 0.0
    %1294 = vmatmul.mubr.f32.gmra.mxu0 %v1227
    %v1295 = vpop.f32.mrf.mxu0
    %v1296 = vadd.f32 0.0, %v1295
    %v1297 = vpop.f32.mrf.mxu0
    %1298 = vdwg.mxu0
    %v1299 = vadd.f32 %v808, %v1296
    %v1300 = vxor.u32 %v1299, 2147483648
    %v1301 = vmul.f32 %v1300, 1.442695
    %v1302 = vpow.pop %v1301
    %v1303 = vadd.f32 %v1302, 1.0
    %v1304 = vrcp.pop %v1303
    %v1305 = vmul.f32 1.0, %v1304
    %v1306 = vtanh.pop %v1299
    %v1307 = vmul.f32 %v1305, %v1217
    %1309 = vrot.lane.b32.xlu0 %v1306, 32
    %v1310 = vpop.permute.xlu0 %1309
    %v1312 = vmul.f32 %v1305, %v1310
    %1314 = vrot.lane.b32.xlu0 %v1312, 32
    %v1315 = vpop.permute.xlu0 %1314
    %v1317 = vadd.f32 %v1307, %v1315
    %v1318 = vtanh.pop %v1317
    %1320 = vrot.lane.b32.xlu0 %v1318, 32
    %v1321 = vpop.permute.xlu0 %1320
    %v1323 = vmul.f32 %v1305, %v1321
    %1325 = vrot.lane.b32.xlu0 %v1323, 64
    %v1326 = vpop.permute.xlu0 %1325
    %v1327 = vsel %vm696, %v1326, 0
    %1329 = vmatprep.subr.mxu0 0.0
    %1330 = vmatpush1.msra.mxu0 0.0
    %1331 = vmatprep.subr.mxu0 0.0
    %1332 = vmatpush1.msra.mxu0 0.0
    %1333 = vmatprep.subr.mxu0 0.0
    %1334 = vmatpush1.msra.mxu0 0.0
    %1335 = vmatprep.subr.mxu0 0.0
    %1336 = vmatpush1.msra.mxu0 0.0
    %1337 = vmatprep.subr.mxu0 0.0
    %1338 = vmatpush1.msra.mxu0 0.0
    %1339 = vmatprep.subr.mxu0 0.0
    %1340 = vmatpush1.msra.mxu0 0.0
    %1341 = vmatprep.subr.mxu0 0.0
    %1342 = vmatpush1.msra.mxu0 0.0
    %1343 = vmatprep.subr.mxu0 0.0
    %1344 = vmatpush1.msra.mxu0 0.0
    %1345 = vmatprep.subr.mxu0 0.0
    %1346 = vmatpush1.msra.mxu0 0.0
    %1347 = vmatprep.subr.mxu0 0.0
    %1348 = vmatpush1.msra.mxu0 0.0
    %1349 = vmatprep.subr.mxu0 0.0
    %1350 = vmatpush1.msra.mxu0 0.0
    %1351 = vmatprep.subr.mxu0 0.0
    %1352 = vmatpush1.msra.mxu0 0.0
    %1353 = vmatprep.subr.mxu0 0.0
    %1354 = vmatpush1.msra.mxu0 %v688
    %1355 = vmatprep.subr.mxu0 0.0
    %1356 = vmatpush1.msra.mxu0 %v687
    %1357 = vmatprep.subr.mxu0 0.0
    %1358 = vmatpush1.msra.mxu0 %v686
    %1359 = vmatprep.subr.mxu0 0.0
    %1360 = vmatpush1.msra.mxu0 %v685
    %1361 = vmatprep.subr.mxu0 0.0
    %1362 = vmatpush2.msra.mxu0 0.0
    %1363 = vmatprep.subr.mxu0 0.0
    %1364 = vmatpush2.msra.mxu0 0.0
    %1365 = vmatprep.subr.mxu0 0.0
    %1366 = vmatpush2.msra.mxu0 0.0
    %1367 = vmatprep.subr.mxu0 0.0
    %1368 = vmatpush2.msra.mxu0 0.0
    %1369 = vmatprep.subr.mxu0 0.0
    %1370 = vmatpush2.msra.mxu0 0.0
    %1371 = vmatprep.subr.mxu0 0.0
    %1372 = vmatpush2.msra.mxu0 0.0
    %1373 = vmatprep.subr.mxu0 0.0
    %1374 = vmatpush2.msra.mxu0 0.0
    %1375 = vmatprep.subr.mxu0 0.0
    %1376 = vmatpush2.msra.mxu0 0.0
    %1377 = vmatprep.subr.mxu0 0.0
    %1378 = vmatpush2.msra.mxu0 0.0
    %1379 = vmatprep.subr.mxu0 0.0
    %1380 = vmatpush2.msra.mxu0 0.0
    %1381 = vmatprep.subr.mxu0 0.0
    %1382 = vmatpush2.msra.mxu0 0.0
    %1383 = vmatprep.subr.mxu0 0.0
    %1384 = vmatpush2.msra.mxu0 0.0
    %1385 = vmatprep.subr.mxu0 0.0
    %1386 = vmatpush2.msra.mxu0 0.0
    %1387 = vmatprep.subr.mxu0 0.0
    %1388 = vmatpush2.msra.mxu0 0.0
    %1389 = vmatprep.subr.mxu0 0.0
    %1390 = vmatpush2.msra.mxu0 0.0
    %1391 = vmatprep.subr.mxu0 0.0
    %1392 = vmatpush2.msra.mxu0 0.0
    %1393 = vmatprep.mubr.f32.mxu0 0.0
    %1394 = vmatmul.mubr.f32.gmra.mxu0 %v1327
    %v1395 = vpop.f32.mrf.mxu0
    %v1396 = vadd.f32 0.0, %v1395
    %v1397 = vpop.f32.mrf.mxu0
    %1398 = vdwg.mxu0
    %v1399 = vadd.f32 %v813, %v1396
    %v1400 = vxor.u32 %v1399, 2147483648
    %v1401 = vmul.f32 %v1400, 1.442695
    %v1402 = vpow.pop %v1401
    %v1403 = vadd.f32 %v1402, 1.0
    %v1404 = vrcp.pop %v1403
    %v1405 = vmul.f32 1.0, %v1404
    %v1406 = vtanh.pop %v1399
    %v1407 = vmul.f32 %v1405, %v1317
    %1409 = vrot.lane.b32.xlu0 %v1406, 32
    %v1410 = vpop.permute.xlu0 %1409
    %v1412 = vmul.f32 %v1405, %v1410
    %1414 = vrot.lane.b32.xlu0 %v1412, 32
    %v1415 = vpop.permute.xlu0 %1414
    %v1417 = vadd.f32 %v1407, %v1415
    %v1418 = vtanh.pop %v1417
    %1420 = vrot.lane.b32.xlu0 %v1418, 32
    %v1421 = vpop.permute.xlu0 %1420
    %v1423 = vmul.f32 %v1405, %v1421
    %1425 = vrot.lane.b32.xlu0 %v1423, 64
    %v1426 = vpop.permute.xlu0 %1425
    %v1427 = vsel %vm696, %v1426, 0
    %1429 = vmatprep.subr.mxu0 0.0
    %1430 = vmatpush1.msra.mxu0 0.0
    %1431 = vmatprep.subr.mxu0 0.0
    %1432 = vmatpush1.msra.mxu0 0.0
    %1433 = vmatprep.subr.mxu0 0.0
    %1434 = vmatpush1.msra.mxu0 0.0
    %1435 = vmatprep.subr.mxu0 0.0
    %1436 = vmatpush1.msra.mxu0 0.0
    %1437 = vmatprep.subr.mxu0 0.0
    %1438 = vmatpush1.msra.mxu0 0.0
    %1439 = vmatprep.subr.mxu0 0.0
    %1440 = vmatpush1.msra.mxu0 0.0
    %1441 = vmatprep.subr.mxu0 0.0
    %1442 = vmatpush1.msra.mxu0 0.0
    %1443 = vmatprep.subr.mxu0 0.0
    %1444 = vmatpush1.msra.mxu0 0.0
    %1445 = vmatprep.subr.mxu0 0.0
    %1446 = vmatpush1.msra.mxu0 0.0
    %1447 = vmatprep.subr.mxu0 0.0
    %1448 = vmatpush1.msra.mxu0 0.0
    %1449 = vmatprep.subr.mxu0 0.0
    %1450 = vmatpush1.msra.mxu0 0.0
    %1451 = vmatprep.subr.mxu0 0.0
    %1452 = vmatpush1.msra.mxu0 0.0
    %1453 = vmatprep.subr.mxu0 0.0
    %1454 = vmatpush1.msra.mxu0 %v688
    %1455 = vmatprep.subr.mxu0 0.0
    %1456 = vmatpush1.msra.mxu0 %v687
    %1457 = vmatprep.subr.mxu0 0.0
    %1458 = vmatpush1.msra.mxu0 %v686
    %1459 = vmatprep.subr.mxu0 0.0
    %1460 = vmatpush1.msra.mxu0 %v685
    %1461 = vmatprep.subr.mxu0 0.0
    %1462 = vmatpush2.msra.mxu0 0.0
    %1463 = vmatprep.subr.mxu0 0.0
    %1464 = vmatpush2.msra.mxu0 0.0
    %1465 = vmatprep.subr.mxu0 0.0
    %1466 = vmatpush2.msra.mxu0 0.0
    %1467 = vmatprep.subr.mxu0 0.0
    %1468 = vmatpush2.msra.mxu0 0.0
    %1469 = vmatprep.subr.mxu0 0.0
    %1470 = vmatpush2.msra.mxu0 0.0
    %1471 = vmatprep.subr.mxu0 0.0
    %1472 = vmatpush2.msra.mxu0 0.0
    %1473 = vmatprep.subr.mxu0 0.0
    %1474 = vmatpush2.msra.mxu0 0.0
    %1475 = vmatprep.subr.mxu0 0.0
    %1476 = vmatpush2.msra.mxu0 0.0
    %1477 = vmatprep.subr.mxu0 0.0
    %1478 = vmatpush2.msra.mxu0 0.0
    %1479 = vmatprep.subr.mxu0 0.0
    %1480 = vmatpush2.msra.mxu0 0.0
    %1481 = vmatprep.subr.mxu0 0.0
    %1482 = vmatpush2.msra.mxu0 0.0
    %1483 = vmatprep.subr.mxu0 0.0
    %1484 = vmatpush2.msra.mxu0 0.0
    %1485 = vmatprep.subr.mxu0 0.0
    %1486 = vmatpush2.msra.mxu0 0.0
    %1487 = vmatprep.subr.mxu0 0.0
    %1488 = vmatpush2.msra.mxu0 0.0
    %1489 = vmatprep.subr.mxu0 0.0
    %1490 = vmatpush2.msra.mxu0 0.0
    %1491 = vmatprep.subr.mxu0 0.0
    %1492 = vmatpush2.msra.mxu0 0.0
    %1493 = vmatprep.mubr.f32.mxu0 0.0
    %1494 = vmatmul.mubr.f32.gmra.mxu0 %v1427
    %v1495 = vpop.f32.mrf.mxu0
    %v1496 = vadd.f32 0.0, %v1495
    %v1497 = vpop.f32.mrf.mxu0
    %1498 = vdwg.mxu0
    %v1499 = vadd.f32 %v818, %v1496
    %v1500 = vxor.u32 %v1499, 2147483648
    %v1501 = vmul.f32 %v1500, 1.442695
    %v1502 = vpow.pop %v1501
    %v1503 = vadd.f32 %v1502, 1.0
    %v1504 = vrcp.pop %v1503
    %v1505 = vmul.f32 1.0, %v1504
    %v1506 = vtanh.pop %v1499
    %v1507 = vmul.f32 %v1505, %v1417
    %1509 = vrot.lane.b32.xlu0 %v1506, 32
    %v1510 = vpop.permute.xlu0 %1509
    %v1512 = vmul.f32 %v1505, %v1510
    %1514 = vrot.lane.b32.xlu0 %v1512, 32
    %v1515 = vpop.permute.xlu0 %1514
    %v1517 = vadd.f32 %v1507, %v1515
    %v1518 = vtanh.pop %v1517
    %1520 = vrot.lane.b32.xlu0 %v1518, 32
    %v1521 = vpop.permute.xlu0 %1520
    %v1523 = vmul.f32 %v1505, %v1521
    %1525 = vrot.lane.b32.xlu0 %v1523, 64
    %v1526 = vpop.permute.xlu0 %1525
    %v1527 = vsel %vm696, %v1526, 0
    %1529 = vmatprep.subr.mxu0 0.0
    %1530 = vmatpush1.msra.mxu0 0.0
    %1531 = vmatprep.subr.mxu0 0.0
    %1532 = vmatpush1.msra.mxu0 0.0
    %1533 = vmatprep.subr.mxu0 0.0
    %1534 = vmatpush1.msra.mxu0 0.0
    %1535 = vmatprep.subr.mxu0 0.0
    %1536 = vmatpush1.msra.mxu0 0.0
    %1537 = vmatprep.subr.mxu0 0.0
    %1538 = vmatpush1.msra.mxu0 0.0
    %1539 = vmatprep.subr.mxu0 0.0
    %1540 = vmatpush1.msra.mxu0 0.0
    %1541 = vmatprep.subr.mxu0 0.0
    %1542 = vmatpush1.msra.mxu0 0.0
    %1543 = vmatprep.subr.mxu0 0.0
    %1544 = vmatpush1.msra.mxu0 0.0
    %1545 = vmatprep.subr.mxu0 0.0
    %1546 = vmatpush1.msra.mxu0 0.0
    %1547 = vmatprep.subr.mxu0 0.0
    %1548 = vmatpush1.msra.mxu0 0.0
    %1549 = vmatprep.subr.mxu0 0.0
    %1550 = vmatpush1.msra.mxu0 0.0
    %1551 = vmatprep.subr.mxu0 0.0
    %1552 = vmatpush1.msra.mxu0 0.0
    %1553 = vmatprep.subr.mxu0 0.0
    %1554 = vmatpush1.msra.mxu0 %v688
    %1555 = vmatprep.subr.mxu0 0.0
    %1556 = vmatpush1.msra.mxu0 %v687
    %1557 = vmatprep.subr.mxu0 0.0
    %1558 = vmatpush1.msra.mxu0 %v686
    %1559 = vmatprep.subr.mxu0 0.0
    %1560 = vmatpush1.msra.mxu0 %v685
    %1561 = vmatprep.subr.mxu0 0.0
    %1562 = vmatpush2.msra.mxu0 0.0
    %1563 = vmatprep.subr.mxu0 0.0
    %1564 = vmatpush2.msra.mxu0 0.0
    %1565 = vmatprep.subr.mxu0 0.0
    %1566 = vmatpush2.msra.mxu0 0.0
    %1567 = vmatprep.subr.mxu0 0.0
    %1568 = vmatpush2.msra.mxu0 0.0
    %1569 = vmatprep.subr.mxu0 0.0
    %1570 = vmatpush2.msra.mxu0 0.0
    %1571 = vmatprep.subr.mxu0 0.0
    %1572 = vmatpush2.msra.mxu0 0.0
    %1573 = vmatprep.subr.mxu0 0.0
    %1574 = vmatpush2.msra.mxu0 0.0
    %1575 = vmatprep.subr.mxu0 0.0
    %1576 = vmatpush2.msra.mxu0 0.0
    %1577 = vmatprep.subr.mxu0 0.0
    %1578 = vmatpush2.msra.mxu0 0.0
    %1579 = vmatprep.subr.mxu0 0.0
    %1580 = vmatpush2.msra.mxu0 0.0
    %1581 = vmatprep.subr.mxu0 0.0
    %1582 = vmatpush2.msra.mxu0 0.0
    %1583 = vmatprep.subr.mxu0 0.0
    %1584 = vmatpush2.msra.mxu0 0.0
    %1585 = vmatprep.subr.mxu0 0.0
    %1586 = vmatpush2.msra.mxu0 0.0
    %1587 = vmatprep.subr.mxu0 0.0
    %1588 = vmatpush2.msra.mxu0 0.0
    %1589 = vmatprep.subr.mxu0 0.0
    %1590 = vmatpush2.msra.mxu0 0.0
    %1591 = vmatprep.subr.mxu0 0.0
    %1592 = vmatpush2.msra.mxu0 0.0
    %1593 = vmatprep.mubr.f32.mxu0 0.0
    %1594 = vmatmul.mubr.f32.gmra.mxu0 %v1527
    %v1595 = vpop.f32.mrf.mxu0
    %v1596 = vadd.f32 0.0, %v1595
    %v1597 = vpop.f32.mrf.mxu0
    %1598 = vdwg.mxu0
    %v1599 = vadd.f32 %v823, %v1596
    %v1600 = vxor.u32 %v1599, 2147483648
    %v1601 = vmul.f32 %v1600, 1.442695
    %v1602 = vpow.pop %v1601
    %v1603 = vadd.f32 %v1602, 1.0
    %v1604 = vrcp.pop %v1603
    %v1605 = vmul.f32 1.0, %v1604
    %v1606 = vtanh.pop %v1599
    %v1607 = vmul.f32 %v1605, %v1517
    %1609 = vrot.lane.b32.xlu0 %v1606, 32
    %v1610 = vpop.permute.xlu0 %1609
    %v1612 = vmul.f32 %v1605, %v1610
    %1614 = vrot.lane.b32.xlu0 %v1612, 32
    %v1615 = vpop.permute.xlu0 %1614
    %v1617 = vadd.f32 %v1607, %v1615
    %v1618 = vtanh.pop %v1617
    %1620 = vrot.lane.b32.xlu0 %v1618, 32
    %v1621 = vpop.permute.xlu0 %1620
    %v1623 = vmul.f32 %v1605, %v1621
    %v1624 = vld [vmem:[%s16] sm:$0xff]
    %v1625 = vld [vmem:[%s16 + $0x8] sm:$0xff]
    %v1626 = vld [vmem:[%s16 + $0x10] sm:$0xff]
    %v1627 = vld [vmem:[%s16 + $0x18] sm:$0xff]
    %v1628 = vld [vmem:[%s17] sm:$0xff]
    %v1629 = vld [vmem:[%s17 + $0x8] sm:$0xff]
    %v1630 = vld [vmem:[%s17 + $0x10] sm:$0xff]
    %v1631 = vld [vmem:[%s17 + $0x18] sm:$0xff]
    %v1632 = vld [vmem:[#allocation19] sm:$0x1]
    %v1634 = vlaneseq
    %v1635 = vshrl.u32 %v1634, 7
    %v1636 = vsub.s32 0, %v1635
    %v1637 = vrot.slane %v1632, %v1636
    %1640 = vrot.lane.b32.xlu0 %v1623, 64
    %v1641 = vpop.permute.xlu0 %1640
    %v1642 = vsel %vm696, %v1641, 0
    %1644 = vmatprep.subr.mxu0 0.0
    %1645 = vmatpush1.msra.mxu0 0.0
    %1646 = vmatprep.subr.mxu0 0.0
    %1647 = vmatpush1.msra.mxu0 0.0
    %1648 = vmatprep.subr.mxu0 0.0
    %1649 = vmatpush1.msra.mxu0 0.0
    %1650 = vmatprep.subr.mxu0 0.0
    %1651 = vmatpush1.msra.mxu0 0.0
    %1652 = vmatprep.subr.mxu0 0.0
    %1653 = vmatpush1.msra.mxu0 0.0
    %1654 = vmatprep.subr.mxu0 0.0
    %1655 = vmatpush1.msra.mxu0 0.0
    %1656 = vmatprep.subr.mxu0 0.0
    %1657 = vmatpush1.msra.mxu0 0.0
    %1658 = vmatprep.subr.mxu0 0.0
    %1659 = vmatpush1.msra.mxu0 0.0
    %1660 = vmatprep.subr.mxu0 0.0
    %1661 = vmatpush1.msra.mxu0 0.0
    %1662 = vmatprep.subr.mxu0 0.0
    %1663 = vmatpush1.msra.mxu0 0.0
    %1664 = vmatprep.subr.mxu0 0.0
    %1665 = vmatpush1.msra.mxu0 0.0
    %1666 = vmatprep.subr.mxu0 0.0
    %1667 = vmatpush1.msra.mxu0 0.0
    %1668 = vmatprep.subr.mxu0 0.0
    %1669 = vmatpush1.msra.mxu0 %v1627
    %1670 = vmatprep.subr.mxu0 0.0
    %1671 = vmatpush1.msra.mxu0 %v1626
    %1672 = vmatprep.subr.mxu0 0.0
    %1673 = vmatpush1.msra.mxu0 %v1625
    %1674 = vmatprep.subr.mxu0 0.0
    %1675 = vmatpush1.msra.mxu0 %v1624
    %1676 = vmatprep.subr.mxu0 0.0
    %1677 = vmatpush2.msra.mxu0 0.0
    %1678 = vmatprep.subr.mxu0 0.0
    %1679 = vmatpush2.msra.mxu0 0.0
    %1680 = vmatprep.subr.mxu0 0.0
    %1681 = vmatpush2.msra.mxu0 0.0
    %1682 = vmatprep.subr.mxu0 0.0
    %1683 = vmatpush2.msra.mxu0 0.0
    %1684 = vmatprep.subr.mxu0 0.0
    %1685 = vmatpush2.msra.mxu0 0.0
    %1686 = vmatprep.subr.mxu0 0.0
    %1687 = vmatpush2.msra.mxu0 0.0
    %1688 = vmatprep.subr.mxu0 0.0
    %1689 = vmatpush2.msra.mxu0 0.0
    %1690 = vmatprep.subr.mxu0 0.0
    %1691 = vmatpush2.msra.mxu0 0.0
    %1692 = vmatprep.subr.mxu0 0.0
    %1693 = vmatpush2.msra.mxu0 0.0
    %1694 = vmatprep.subr.mxu0 0.0
    %1695 = vmatpush2.msra.mxu0 0.0
    %1696 = vmatprep.subr.mxu0 0.0
    %1697 = vmatpush2.msra.mxu0 0.0
    %1698 = vmatprep.subr.mxu0 0.0
    %1699 = vmatpush2.msra.mxu0 0.0
    %1700 = vmatprep.subr.mxu0 0.0
    %1701 = vmatpush2.msra.mxu0 0.0
    %1702 = vmatprep.subr.mxu0 0.0
    %1703 = vmatpush2.msra.mxu0 0.0
    %1704 = vmatprep.subr.mxu0 0.0
    %1705 = vmatpush2.msra.mxu0 0.0
    %1706 = vmatprep.subr.mxu0 0.0
    %1707 = vmatpush2.msra.mxu0 0.0
    %1708 = vmatprep.mubr.f32.mxu0 0.0
    %1709 = vmatmul.mubr.f32.gmra.mxu0 %v927
    %v1710 = vpop.f32.mrf.mxu0
    %v1711 = vadd.f32 %v1637, %v1710
    %v1712 = vpop.f32.mrf.mxu0
    %1713 = vmatprep.mubr.f32.mxu0 0.0
    %1714 = vmatmul.mubr.f32.gmra.mxu0 %v1027
    %v1715 = vpop.f32.mrf.mxu0
    %v1716 = vadd.f32 %v1637, %v1715
    %v1717 = vpop.f32.mrf.mxu0
    %1718 = vmatprep.mubr.f32.mxu0 0.0
    %1719 = vmatmul.mubr.f32.gmra.mxu0 %v1127
    %v1720 = vpop.f32.mrf.mxu0
    %v1721 = vadd.f32 %v1637, %v1720
    %v1722 = vpop.f32.mrf.mxu0
    %1723 = vmatprep.mubr.f32.mxu0 0.0
    %1724 = vmatmul.mubr.f32.gmra.mxu0 %v1227
    %v1725 = vpop.f32.mrf.mxu0
    %v1726 = vadd.f32 %v1637, %v1725
    %v1727 = vpop.f32.mrf.mxu0
    %1728 = vmatprep.mubr.f32.mxu0 0.0
    %1729 = vmatmul.mubr.f32.gmra.mxu0 %v1327
    %v1730 = vpop.f32.mrf.mxu0
    %v1731 = vadd.f32 %v1637, %v1730
    %v1732 = vpop.f32.mrf.mxu0
    %1733 = vmatprep.mubr.f32.mxu0 0.0
    %1734 = vmatmul.mubr.f32.gmra.mxu0 %v1427
    %v1735 = vpop.f32.mrf.mxu0
    %v1736 = vadd.f32 %v1637, %v1735
    %v1737 = vpop.f32.mrf.mxu0
    %1738 = vmatprep.mubr.f32.mxu0 0.0
    %1739 = vmatmul.mubr.f32.gmra.mxu0 %v1527
    %v1740 = vpop.f32.mrf.mxu0
    %v1741 = vadd.f32 %v1637, %v1740
    %v1742 = vpop.f32.mrf.mxu0
    %1743 = vmatprep.mubr.f32.mxu0 0.0
    %1744 = vmatmul.mubr.f32.gmra.mxu0 %v1642
    %v1745 = vpop.f32.mrf.mxu0
    %v1746 = vadd.f32 %v1637, %v1745
    %v1747 = vpop.f32.mrf.mxu0
    %1748 = vdwg.mxu0
    %1749 = vmatprep.subr.mxu0 0.0
    %1750 = vmatpush1.msra.mxu0 0.0
    %1751 = vmatprep.subr.mxu0 0.0
    %1752 = vmatpush1.msra.mxu0 0.0
    %1753 = vmatprep.subr.mxu0 0.0
    %1754 = vmatpush1.msra.mxu0 0.0
    %1755 = vmatprep.subr.mxu0 0.0
    %1756 = vmatpush1.msra.mxu0 0.0
    %1757 = vmatprep.subr.mxu0 0.0
    %1758 = vmatpush1.msra.mxu0 0.0
    %1759 = vmatprep.subr.mxu0 0.0
    %1760 = vmatpush1.msra.mxu0 0.0
    %1761 = vmatprep.subr.mxu0 0.0
    %1762 = vmatpush1.msra.mxu0 0.0
    %1763 = vmatprep.subr.mxu0 0.0
    %1764 = vmatpush1.msra.mxu0 0.0
    %1765 = vmatprep.subr.mxu0 0.0
    %1766 = vmatpush1.msra.mxu0 0.0
    %1767 = vmatprep.subr.mxu0 0.0
    %1768 = vmatpush1.msra.mxu0 0.0
    %1769 = vmatprep.subr.mxu0 0.0
    %1770 = vmatpush1.msra.mxu0 0.0
    %1771 = vmatprep.subr.mxu0 0.0
    %1772 = vmatpush1.msra.mxu0 0.0
    %1773 = vmatprep.subr.mxu0 0.0
    %1774 = vmatpush1.msra.mxu0 %v1631
    %1775 = vmatprep.subr.mxu0 0.0
    %1776 = vmatpush1.msra.mxu0 %v1630
    %1777 = vmatprep.subr.mxu0 0.0
    %1778 = vmatpush1.msra.mxu0 %v1629
    %1779 = vmatprep.subr.mxu0 0.0
    %1780 = vmatpush1.msra.mxu0 %v1628
    %1781 = vmatprep.subr.mxu0 0.0
    %1782 = vmatpush2.msra.mxu0 0.0
    %1783 = vmatprep.subr.mxu0 0.0
    %1784 = vmatpush2.msra.mxu0 0.0
    %1785 = vmatprep.subr.mxu0 0.0
    %1786 = vmatpush2.msra.mxu0 0.0
    %1787 = vmatprep.subr.mxu0 0.0
    %1788 = vmatpush2.msra.mxu0 0.0
    %1789 = vmatprep.subr.mxu0 0.0
    %1790 = vmatpush2.msra.mxu0 0.0
    %1791 = vmatprep.subr.mxu0 0.0
    %1792 = vmatpush2.msra.mxu0 0.0
    %1793 = vmatprep.subr.mxu0 0.0
    %1794 = vmatpush2.msra.mxu0 0.0
    %1795 = vmatprep.subr.mxu0 0.0
    %1796 = vmatpush2.msra.mxu0 0.0
    %1797 = vmatprep.subr.mxu0 0.0
    %1798 = vmatpush2.msra.mxu0 0.0
    %1799 = vmatprep.subr.mxu0 0.0
    %1800 = vmatpush2.msra.mxu0 0.0
    %1801 = vmatprep.subr.mxu0 0.0
    %1802 = vmatpush2.msra.mxu0 0.0
    %1803 = vmatprep.subr.mxu0 0.0
    %1804 = vmatpush2.msra.mxu0 0.0
    %1805 = vmatprep.subr.mxu0 0.0
    %1806 = vmatpush2.msra.mxu0 0.0
    %1807 = vmatprep.subr.mxu0 0.0
    %1808 = vmatpush2.msra.mxu0 0.0
    %1809 = vmatprep.subr.mxu0 0.0
    %1810 = vmatpush2.msra.mxu0 0.0
    %1811 = vmatprep.subr.mxu0 0.0
    %1812 = vmatpush2.msra.mxu0 0.0
    %1813 = vmatprep.mubr.f32.mxu0 0.0
    %1814 = vmatmul.mubr.f32.gmra.mxu0 %v827
    %v1815 = vpop.f32.mrf.mxu0
    %v1816 = vadd.f32 0.0, %v1815
    %v1817 = vpop.f32.mrf.mxu0
    %1818 = vdwg.mxu0
    %v1819 = vadd.f32 %v1711, %v1816
    %v1820 = vxor.u32 %v1819, 2147483648
    %v1821 = vmul.f32 %v1820, 1.442695
    %v1822 = vpow.pop %v1821
    %v1823 = vadd.f32 %v1822, 1.0
    %v1824 = vrcp.pop %v1823
    %v1825 = vmul.f32 1.0, %v1824
    %v1826 = vtanh.pop %v1819
    %v1827 = vmul.f32 %v1825, 0.0
    %1829 = vrot.lane.b32.xlu0 %v1826, 32
    %v1830 = vpop.permute.xlu0 %1829
    %v1832 = vmul.f32 %v1825, %v1830
    %1834 = vrot.lane.b32.xlu0 %v1832, 32
    %v1835 = vpop.permute.xlu0 %1834
    %v1837 = vadd.f32 %v1827, %v1835
    %v1838 = vtanh.pop %v1837
    %1840 = vrot.lane.b32.xlu0 %v1838, 32
    %v1841 = vpop.permute.xlu0 %1840
    %v1843 = vmul.f32 %v1825, %v1841
    %1845 = vrot.lane.b32.xlu0 %v1843, 64
    %v1846 = vpop.permute.xlu0 %1845
    %v1847 = vsel %vm696, %v1846, 0
    %1849 = vmatprep.subr.mxu0 0.0
    %1850 = vmatpush1.msra.mxu0 0.0
    %1851 = vmatprep.subr.mxu0 0.0
    %1852 = vmatpush1.msra.mxu0 0.0
    %1853 = vmatprep.subr.mxu0 0.0
    %1854 = vmatpush1.msra.mxu0 0.0
    %1855 = vmatprep.subr.mxu0 0.0
    %1856 = vmatpush1.msra.mxu0 0.0
    %1857 = vmatprep.subr.mxu0 0.0
    %1858 = vmatpush1.msra.mxu0 0.0
    %1859 = vmatprep.subr.mxu0 0.0
    %1860 = vmatpush1.msra.mxu0 0.0
    %1861 = vmatprep.subr.mxu0 0.0
    %1862 = vmatpush1.msra.mxu0 0.0
    %1863 = vmatprep.subr.mxu0 0.0
    %1864 = vmatpush1.msra.mxu0 0.0
    %1865 = vmatprep.subr.mxu0 0.0
    %1866 = vmatpush1.msra.mxu0 0.0
    %1867 = vmatprep.subr.mxu0 0.0
    %1868 = vmatpush1.msra.mxu0 0.0
    %1869 = vmatprep.subr.mxu0 0.0
    %1870 = vmatpush1.msra.mxu0 0.0
    %1871 = vmatprep.subr.mxu0 0.0
    %1872 = vmatpush1.msra.mxu0 0.0
    %1873 = vmatprep.subr.mxu0 0.0
    %1874 = vmatpush1.msra.mxu0 %v1631
    %1875 = vmatprep.subr.mxu0 0.0
    %1876 = vmatpush1.msra.mxu0 %v1630
    %1877 = vmatprep.subr.mxu0 0.0
    %1878 = vmatpush1.msra.mxu0 %v1629
    %1879 = vmatprep.subr.mxu0 0.0
    %1880 = vmatpush1.msra.mxu0 %v1628
    %1881 = vmatprep.subr.mxu0 0.0
    %1882 = vmatpush2.msra.mxu0 0.0
    %1883 = vmatprep.subr.mxu0 0.0
    %1884 = vmatpush2.msra.mxu0 0.0
    %1885 = vmatprep.subr.mxu0 0.0
    %1886 = vmatpush2.msra.mxu0 0.0
    %1887 = vmatprep.subr.mxu0 0.0
    %1888 = vmatpush2.msra.mxu0 0.0
    %1889 = vmatprep.subr.mxu0 0.0
    %1890 = vmatpush2.msra.mxu0 0.0
    %1891 = vmatprep.subr.mxu0 0.0
    %1892 = vmatpush2.msra.mxu0 0.0
    %1893 = vmatprep.subr.mxu0 0.0
    %1894 = vmatpush2.msra.mxu0 0.0
    %1895 = vmatprep.subr.mxu0 0.0
    %1896 = vmatpush2.msra.mxu0 0.0
    %1897 = vmatprep.subr.mxu0 0.0
    %1898 = vmatpush2.msra.mxu0 0.0
    %1899 = vmatprep.subr.mxu0 0.0
    %1900 = vmatpush2.msra.mxu0 0.0
    %1901 = vmatprep.subr.mxu0 0.0
    %1902 = vmatpush2.msra.mxu0 0.0
    %1903 = vmatprep.subr.mxu0 0.0
    %1904 = vmatpush2.msra.mxu0 0.0
    %1905 = vmatprep.subr.mxu0 0.0
    %1906 = vmatpush2.msra.mxu0 0.0
    %1907 = vmatprep.subr.mxu0 0.0
    %1908 = vmatpush2.msra.mxu0 0.0
    %1909 = vmatprep.subr.mxu0 0.0
    %1910 = vmatpush2.msra.mxu0 0.0
    %1911 = vmatprep.subr.mxu0 0.0
    %1912 = vmatpush2.msra.mxu0 0.0
    %1913 = vmatprep.mubr.f32.mxu0 0.0
    %1914 = vmatmul.mubr.f32.gmra.mxu0 %v1847
    %v1915 = vpop.f32.mrf.mxu0
    %v1916 = vadd.f32 0.0, %v1915
    %v1917 = vpop.f32.mrf.mxu0
    %1918 = vdwg.mxu0
    %v1919 = vadd.f32 %v1716, %v1916
    %v1920 = vxor.u32 %v1919, 2147483648
    %v1921 = vmul.f32 %v1920, 1.442695
    %v1922 = vpow.pop %v1921
    %v1923 = vadd.f32 %v1922, 1.0
    %v1924 = vrcp.pop %v1923
    %v1925 = vmul.f32 1.0, %v1924
    %v1926 = vtanh.pop %v1919
    %v1927 = vmul.f32 %v1925, %v1837
    %1929 = vrot.lane.b32.xlu0 %v1926, 32
    %v1930 = vpop.permute.xlu0 %1929
    %v1932 = vmul.f32 %v1925, %v1930
    %1934 = vrot.lane.b32.xlu0 %v1932, 32
    %v1935 = vpop.permute.xlu0 %1934
    %v1937 = vadd.f32 %v1927, %v1935
    %v1938 = vtanh.pop %v1937
    %1940 = vrot.lane.b32.xlu0 %v1938, 32
    %v1941 = vpop.permute.xlu0 %1940
    %v1943 = vmul.f32 %v1925, %v1941
    %1945 = vrot.lane.b32.xlu0 %v1943, 64
    %v1946 = vpop.permute.xlu0 %1945
    %v1947 = vsel %vm696, %v1946, 0
    %1949 = vmatprep.subr.mxu0 0.0
    %1950 = vmatpush1.msra.mxu0 0.0
    %1951 = vmatprep.subr.mxu0 0.0
    %1952 = vmatpush1.msra.mxu0 0.0
    %1953 = vmatprep.subr.mxu0 0.0
    %1954 = vmatpush1.msra.mxu0 0.0
    %1955 = vmatprep.subr.mxu0 0.0
    %1956 = vmatpush1.msra.mxu0 0.0
    %1957 = vmatprep.subr.mxu0 0.0
    %1958 = vmatpush1.msra.mxu0 0.0
    %1959 = vmatprep.subr.mxu0 0.0
    %1960 = vmatpush1.msra.mxu0 0.0
    %1961 = vmatprep.subr.mxu0 0.0
    %1962 = vmatpush1.msra.mxu0 0.0
    %1963 = vmatprep.subr.mxu0 0.0
    %1964 = vmatpush1.msra.mxu0 0.0
    %1965 = vmatprep.subr.mxu0 0.0
    %1966 = vmatpush1.msra.mxu0 0.0
    %1967 = vmatprep.subr.mxu0 0.0
    %1968 = vmatpush1.msra.mxu0 0.0
    %1969 = vmatprep.subr.mxu0 0.0
    %1970 = vmatpush1.msra.mxu0 0.0
    %1971 = vmatprep.subr.mxu0 0.0
    %1972 = vmatpush1.msra.mxu0 0.0
    %1973 = vmatprep.subr.mxu0 0.0
    %1974 = vmatpush1.msra.mxu0 %v1631
    %1975 = vmatprep.subr.mxu0 0.0
    %1976 = vmatpush1.msra.mxu0 %v1630
    %1977 = vmatprep.subr.mxu0 0.0
    %1978 = vmatpush1.msra.mxu0 %v1629
    %1979 = vmatprep.subr.mxu0 0.0
    %1980 = vmatpush1.msra.mxu0 %v1628
    %1981 = vmatprep.subr.mxu0 0.0
    %1982 = vmatpush2.msra.mxu0 0.0
    %1983 = vmatprep.subr.mxu0 0.0
    %1984 = vmatpush2.msra.mxu0 0.0
    %1985 = vmatprep.subr.mxu0 0.0
    %1986 = vmatpush2.msra.mxu0 0.0
    %1987 = vmatprep.subr.mxu0 0.0
    %1988 = vmatpush2.msra.mxu0 0.0
    %1989 = vmatprep.subr.mxu0 0.0
    %1990 = vmatpush2.msra.mxu0 0.0
    %1991 = vmatprep.subr.mxu0 0.0
    %1992 = vmatpush2.msra.mxu0 0.0
    %1993 = vmatprep.subr.mxu0 0.0
    %1994 = vmatpush2.msra.mxu0 0.0
    %1995 = vmatprep.subr.mxu0 0.0
    %1996 = vmatpush2.msra.mxu0 0.0
    %1997 = vmatprep.subr.mxu0 0.0
    %1998 = vmatpush2.msra.mxu0 0.0
    %1999 = vmatprep.subr.mxu0 0.0
    %2000 = vmatpush2.msra.mxu0 0.0
    %2001 = vmatprep.subr.mxu0 0.0
    %2002 = vmatpush2.msra.mxu0 0.0
    %2003 = vmatprep.subr.mxu0 0.0
    %2004 = vmatpush2.msra.mxu0 0.0
    %2005 = vmatprep.subr.mxu0 0.0
    %2006 = vmatpush2.msra.mxu0 0.0
    %2007 = vmatprep.subr.mxu0 0.0
    %2008 = vmatpush2.msra.mxu0 0.0
    %2009 = vmatprep.subr.mxu0 0.0
    %2010 = vmatpush2.msra.mxu0 0.0
    %2011 = vmatprep.subr.mxu0 0.0
    %2012 = vmatpush2.msra.mxu0 0.0
    %2013 = vmatprep.mubr.f32.mxu0 0.0
    %2014 = vmatmul.mubr.f32.gmra.mxu0 %v1947
    %v2015 = vpop.f32.mrf.mxu0
    %v2016 = vadd.f32 0.0, %v2015
    %v2017 = vpop.f32.mrf.mxu0
    %2018 = vdwg.mxu0
    %v2019 = vadd.f32 %v1721, %v2016
    %v2020 = vxor.u32 %v2019, 2147483648
    %v2021 = vmul.f32 %v2020, 1.442695
    %v2022 = vpow.pop %v2021
    %v2023 = vadd.f32 %v2022, 1.0
    %v2024 = vrcp.pop %v2023
    %v2025 = vmul.f32 1.0, %v2024
    %v2026 = vtanh.pop %v2019
    %v2027 = vmul.f32 %v2025, %v1937
    %2029 = vrot.lane.b32.xlu0 %v2026, 32
    %v2030 = vpop.permute.xlu0 %2029
    %v2032 = vmul.f32 %v2025, %v2030
    %2034 = vrot.lane.b32.xlu0 %v2032, 32
    %v2035 = vpop.permute.xlu0 %2034
    %v2037 = vadd.f32 %v2027, %v2035
    %v2038 = vtanh.pop %v2037
    %2040 = vrot.lane.b32.xlu0 %v2038, 32
    %v2041 = vpop.permute.xlu0 %2040
    %v2043 = vmul.f32 %v2025, %v2041
    %2045 = vrot.lane.b32.xlu0 %v2043, 64
    %v2046 = vpop.permute.xlu0 %2045
    %v2047 = vsel %vm696, %v2046, 0
    %2049 = vmatprep.subr.mxu0 0.0
    %2050 = vmatpush1.msra.mxu0 0.0
    %2051 = vmatprep.subr.mxu0 0.0
    %2052 = vmatpush1.msra.mxu0 0.0
    %2053 = vmatprep.subr.mxu0 0.0
    %2054 = vmatpush1.msra.mxu0 0.0
    %2055 = vmatprep.subr.mxu0 0.0
    %2056 = vmatpush1.msra.mxu0 0.0
    %2057 = vmatprep.subr.mxu0 0.0
    %2058 = vmatpush1.msra.mxu0 0.0
    %2059 = vmatprep.subr.mxu0 0.0
    %2060 = vmatpush1.msra.mxu0 0.0
    %2061 = vmatprep.subr.mxu0 0.0
    %2062 = vmatpush1.msra.mxu0 0.0
    %2063 = vmatprep.subr.mxu0 0.0
    %2064 = vmatpush1.msra.mxu0 0.0
    %2065 = vmatprep.subr.mxu0 0.0
    %2066 = vmatpush1.msra.mxu0 0.0
    %2067 = vmatprep.subr.mxu0 0.0
    %2068 = vmatpush1.msra.mxu0 0.0
    %2069 = vmatprep.subr.mxu0 0.0
    %2070 = vmatpush1.msra.mxu0 0.0
    %2071 = vmatprep.subr.mxu0 0.0
    %2072 = vmatpush1.msra.mxu0 0.0
    %2073 = vmatprep.subr.mxu0 0.0
    %2074 = vmatpush1.msra.mxu0 %v1631
    %2075 = vmatprep.subr.mxu0 0.0
    %2076 = vmatpush1.msra.mxu0 %v1630
    %2077 = vmatprep.subr.mxu0 0.0
    %2078 = vmatpush1.msra.mxu0 %v1629
    %2079 = vmatprep.subr.mxu0 0.0
    %2080 = vmatpush1.msra.mxu0 %v1628
    %2081 = vmatprep.subr.mxu0 0.0
    %2082 = vmatpush2.msra.mxu0 0.0
    %2083 = vmatprep.subr.mxu0 0.0
    %2084 = vmatpush2.msra.mxu0 0.0
    %2085 = vmatprep.subr.mxu0 0.0
    %2086 = vmatpush2.msra.mxu0 0.0
    %2087 = vmatprep.subr.mxu0 0.0
    %2088 = vmatpush2.msra.mxu0 0.0
    %2089 = vmatprep.subr.mxu0 0.0
    %2090 = vmatpush2.msra.mxu0 0.0
    %2091 = vmatprep.subr.mxu0 0.0
    %2092 = vmatpush2.msra.mxu0 0.0
    %2093 = vmatprep.subr.mxu0 0.0
    %2094 = vmatpush2.msra.mxu0 0.0
    %2095 = vmatprep.subr.mxu0 0.0
    %2096 = vmatpush2.msra.mxu0 0.0
    %2097 = vmatprep.subr.mxu0 0.0
    %2098 = vmatpush2.msra.mxu0 0.0
    %2099 = vmatprep.subr.mxu0 0.0
    %2100 = vmatpush2.msra.mxu0 0.0
    %2101 = vmatprep.subr.mxu0 0.0
    %2102 = vmatpush2.msra.mxu0 0.0
    %2103 = vmatprep.subr.mxu0 0.0
    %2104 = vmatpush2.msra.mxu0 0.0
    %2105 = vmatprep.subr.mxu0 0.0
    %2106 = vmatpush2.msra.mxu0 0.0
    %2107 = vmatprep.subr.mxu0 0.0
    %2108 = vmatpush2.msra.mxu0 0.0
    %2109 = vmatprep.subr.mxu0 0.0
    %2110 = vmatpush2.msra.mxu0 0.0
    %2111 = vmatprep.subr.mxu0 0.0
    %2112 = vmatpush2.msra.mxu0 0.0
    %2113 = vmatprep.mubr.f32.mxu0 0.0
    %2114 = vmatmul.mubr.f32.gmra.mxu0 %v2047
    %v2115 = vpop.f32.mrf.mxu0
    %v2116 = vadd.f32 0.0, %v2115
    %v2117 = vpop.f32.mrf.mxu0
    %2118 = vdwg.mxu0
    %v2119 = vadd.f32 %v1726, %v2116
    %v2120 = vxor.u32 %v2119, 2147483648
    %v2121 = vmul.f32 %v2120, 1.442695
    %v2122 = vpow.pop %v2121
    %v2123 = vadd.f32 %v2122, 1.0
    %v2124 = vrcp.pop %v2123
    %v2125 = vmul.f32 1.0, %v2124
    %v2126 = vtanh.pop %v2119
    %v2127 = vmul.f32 %v2125, %v2037
    %2129 = vrot.lane.b32.xlu0 %v2126, 32
    %v2130 = vpop.permute.xlu0 %2129
    %v2132 = vmul.f32 %v2125, %v2130
    %2134 = vrot.lane.b32.xlu0 %v2132, 32
    %v2135 = vpop.permute.xlu0 %2134
    %v2137 = vadd.f32 %v2127, %v2135
    %v2138 = vtanh.pop %v2137
    %2140 = vrot.lane.b32.xlu0 %v2138, 32
    %v2141 = vpop.permute.xlu0 %2140
    %v2143 = vmul.f32 %v2125, %v2141
    %2145 = vrot.lane.b32.xlu0 %v2143, 64
    %v2146 = vpop.permute.xlu0 %2145
    %v2147 = vsel %vm696, %v2146, 0
    %2149 = vmatprep.subr.mxu0 0.0
    %2150 = vmatpush1.msra.mxu0 0.0
    %2151 = vmatprep.subr.mxu0 0.0
    %2152 = vmatpush1.msra.mxu0 0.0
    %2153 = vmatprep.subr.mxu0 0.0
    %2154 = vmatpush1.msra.mxu0 0.0
    %2155 = vmatprep.subr.mxu0 0.0
    %2156 = vmatpush1.msra.mxu0 0.0
    %2157 = vmatprep.subr.mxu0 0.0
    %2158 = vmatpush1.msra.mxu0 0.0
    %2159 = vmatprep.subr.mxu0 0.0
    %2160 = vmatpush1.msra.mxu0 0.0
    %2161 = vmatprep.subr.mxu0 0.0
    %2162 = vmatpush1.msra.mxu0 0.0
    %2163 = vmatprep.subr.mxu0 0.0
    %2164 = vmatpush1.msra.mxu0 0.0
    %2165 = vmatprep.subr.mxu0 0.0
    %2166 = vmatpush1.msra.mxu0 0.0
    %2167 = vmatprep.subr.mxu0 0.0
    %2168 = vmatpush1.msra.mxu0 0.0
    %2169 = vmatprep.subr.mxu0 0.0
    %2170 = vmatpush1.msra.mxu0 0.0
    %2171 = vmatprep.subr.mxu0 0.0
    %2172 = vmatpush1.msra.mxu0 0.0
    %2173 = vmatprep.subr.mxu0 0.0
    %2174 = vmatpush1.msra.mxu0 %v1631
    %2175 = vmatprep.subr.mxu0 0.0
    %2176 = vmatpush1.msra.mxu0 %v1630
    %2177 = vmatprep.subr.mxu0 0.0
    %2178 = vmatpush1.msra.mxu0 %v1629
    %2179 = vmatprep.subr.mxu0 0.0
    %2180 = vmatpush1.msra.mxu0 %v1628
    %2181 = vmatprep.subr.mxu0 0.0
    %2182 = vmatpush2.msra.mxu0 0.0
    %2183 = vmatprep.subr.mxu0 0.0
    %2184 = vmatpush2.msra.mxu0 0.0
    %2185 = vmatprep.subr.mxu0 0.0
    %2186 = vmatpush2.msra.mxu0 0.0
    %2187 = vmatprep.subr.mxu0 0.0
    %2188 = vmatpush2.msra.mxu0 0.0
    %2189 = vmatprep.subr.mxu0 0.0
    %2190 = vmatpush2.msra.mxu0 0.0
    %2191 = vmatprep.subr.mxu0 0.0
    %2192 = vmatpush2.msra.mxu0 0.0
    %2193 = vmatprep.subr.mxu0 0.0
    %2194 = vmatpush2.msra.mxu0 0.0
    %2195 = vmatprep.subr.mxu0 0.0
    %2196 = vmatpush2.msra.mxu0 0.0
    %2197 = vmatprep.subr.mxu0 0.0
    %2198 = vmatpush2.msra.mxu0 0.0
    %2199 = vmatprep.subr.mxu0 0.0
    %2200 = vmatpush2.msra.mxu0 0.0
    %2201 = vmatprep.subr.mxu0 0.0
    %2202 = vmatpush2.msra.mxu0 0.0
    %2203 = vmatprep.subr.mxu0 0.0
    %2204 = vmatpush2.msra.mxu0 0.0
    %2205 = vmatprep.subr.mxu0 0.0
    %2206 = vmatpush2.msra.mxu0 0.0
    %2207 = vmatprep.subr.mxu0 0.0
    %2208 = vmatpush2.msra.mxu0 0.0
    %2209 = vmatprep.subr.mxu0 0.0
    %2210 = vmatpush2.msra.mxu0 0.0
    %2211 = vmatprep.subr.mxu0 0.0
    %2212 = vmatpush2.msra.mxu0 0.0
    %2213 = vmatprep.mubr.f32.mxu0 0.0
    %2214 = vmatmul.mubr.f32.gmra.mxu0 %v2147
    %v2215 = vpop.f32.mrf.mxu0
    %v2216 = vadd.f32 0.0, %v2215
    %v2217 = vpop.f32.mrf.mxu0
    %2218 = vdwg.mxu0
    %v2219 = vadd.f32 %v1731, %v2216
    %v2220 = vxor.u32 %v2219, 2147483648
    %v2221 = vmul.f32 %v2220, 1.442695
    %v2222 = vpow.pop %v2221
    %v2223 = vadd.f32 %v2222, 1.0
    %v2224 = vrcp.pop %v2223
    %v2225 = vmul.f32 1.0, %v2224
    %v2226 = vtanh.pop %v2219
    %v2227 = vmul.f32 %v2225, %v2137
    %2229 = vrot.lane.b32.xlu0 %v2226, 32
    %v2230 = vpop.permute.xlu0 %2229
    %v2232 = vmul.f32 %v2225, %v2230
    %2234 = vrot.lane.b32.xlu0 %v2232, 32
    %v2235 = vpop.permute.xlu0 %2234
    %v2237 = vadd.f32 %v2227, %v2235
    %v2238 = vtanh.pop %v2237
    %2240 = vrot.lane.b32.xlu0 %v2238, 32
    %v2241 = vpop.permute.xlu0 %2240
    %v2243 = vmul.f32 %v2225, %v2241
    %2245 = vrot.lane.b32.xlu0 %v2243, 64
    %v2246 = vpop.permute.xlu0 %2245
    %v2247 = vsel %vm696, %v2246, 0
    %2249 = vmatprep.subr.mxu0 0.0
    %2250 = vmatpush1.msra.mxu0 0.0
    %2251 = vmatprep.subr.mxu0 0.0
    %2252 = vmatpush1.msra.mxu0 0.0
    %2253 = vmatprep.subr.mxu0 0.0
    %2254 = vmatpush1.msra.mxu0 0.0
    %2255 = vmatprep.subr.mxu0 0.0
    %2256 = vmatpush1.msra.mxu0 0.0
    %2257 = vmatprep.subr.mxu0 0.0
    %2258 = vmatpush1.msra.mxu0 0.0
    %2259 = vmatprep.subr.mxu0 0.0
    %2260 = vmatpush1.msra.mxu0 0.0
    %2261 = vmatprep.subr.mxu0 0.0
    %2262 = vmatpush1.msra.mxu0 0.0
    %2263 = vmatprep.subr.mxu0 0.0
    %2264 = vmatpush1.msra.mxu0 0.0
    %2265 = vmatprep.subr.mxu0 0.0
    %2266 = vmatpush1.msra.mxu0 0.0
    %2267 = vmatprep.subr.mxu0 0.0
    %2268 = vmatpush1.msra.mxu0 0.0
    %2269 = vmatprep.subr.mxu0 0.0
    %2270 = vmatpush1.msra.mxu0 0.0
    %2271 = vmatprep.subr.mxu0 0.0
    %2272 = vmatpush1.msra.mxu0 0.0
    %2273 = vmatprep.subr.mxu0 0.0
    %2274 = vmatpush1.msra.mxu0 %v1631
    %2275 = vmatprep.subr.mxu0 0.0
    %2276 = vmatpush1.msra.mxu0 %v1630
    %2277 = vmatprep.subr.mxu0 0.0
    %2278 = vmatpush1.msra.mxu0 %v1629
    %2279 = vmatprep.subr.mxu0 0.0
    %2280 = vmatpush1.msra.mxu0 %v1628
    %2281 = vmatprep.subr.mxu0 0.0
    %2282 = vmatpush2.msra.mxu0 0.0
    %2283 = vmatprep.subr.mxu0 0.0
    %2284 = vmatpush2.msra.mxu0 0.0
    %2285 = vmatprep.subr.mxu0 0.0
    %2286 = vmatpush2.msra.mxu0 0.0
    %2287 = vmatprep.subr.mxu0 0.0
    %2288 = vmatpush2.msra.mxu0 0.0
    %2289 = vmatprep.subr.mxu0 0.0
    %2290 = vmatpush2.msra.mxu0 0.0
    %2291 = vmatprep.subr.mxu0 0.0
    %2292 = vmatpush2.msra.mxu0 0.0
    %2293 = vmatprep.subr.mxu0 0.0
    %2294 = vmatpush2.msra.mxu0 0.0
    %2295 = vmatprep.subr.mxu0 0.0
    %2296 = vmatpush2.msra.mxu0 0.0
    %2297 = vmatprep.subr.mxu0 0.0
    %2298 = vmatpush2.msra.mxu0 0.0
    %2299 = vmatprep.subr.mxu0 0.0
    %2300 = vmatpush2.msra.mxu0 0.0
    %2301 = vmatprep.subr.mxu0 0.0
    %2302 = vmatpush2.msra.mxu0 0.0
    %2303 = vmatprep.subr.mxu0 0.0
    %2304 = vmatpush2.msra.mxu0 0.0
    %2305 = vmatprep.subr.mxu0 0.0
    %2306 = vmatpush2.msra.mxu0 0.0
    %2307 = vmatprep.subr.mxu0 0.0
    %2308 = vmatpush2.msra.mxu0 0.0
    %2309 = vmatprep.subr.mxu0 0.0
    %2310 = vmatpush2.msra.mxu0 0.0
    %2311 = vmatprep.subr.mxu0 0.0
    %2312 = vmatpush2.msra.mxu0 0.0
    %2313 = vmatprep.mubr.f32.mxu0 0.0
    %2314 = vmatmul.mubr.f32.gmra.mxu0 %v2247
    %v2315 = vpop.f32.mrf.mxu0
    %v2316 = vadd.f32 0.0, %v2315
    %v2317 = vpop.f32.mrf.mxu0
    %2318 = vdwg.mxu0
    %v2319 = vadd.f32 %v1736, %v2316
    %v2320 = vxor.u32 %v2319, 2147483648
    %v2321 = vmul.f32 %v2320, 1.442695
    %v2322 = vpow.pop %v2321
    %v2323 = vadd.f32 %v2322, 1.0
    %v2324 = vrcp.pop %v2323
    %v2325 = vmul.f32 1.0, %v2324
    %v2326 = vtanh.pop %v2319
    %v2327 = vmul.f32 %v2325, %v2237
    %2329 = vrot.lane.b32.xlu0 %v2326, 32
    %v2330 = vpop.permute.xlu0 %2329
    %v2332 = vmul.f32 %v2325, %v2330
    %2334 = vrot.lane.b32.xlu0 %v2332, 32
    %v2335 = vpop.permute.xlu0 %2334
    %v2337 = vadd.f32 %v2327, %v2335
    %v2338 = vtanh.pop %v2337
    %2340 = vrot.lane.b32.xlu0 %v2338, 32
    %v2341 = vpop.permute.xlu0 %2340
    %v2343 = vmul.f32 %v2325, %v2341
    %2345 = vrot.lane.b32.xlu0 %v2343, 64
    %v2346 = vpop.permute.xlu0 %2345
    %v2347 = vsel %vm696, %v2346, 0
    %2349 = vmatprep.subr.mxu0 0.0
    %2350 = vmatpush1.msra.mxu0 0.0
    %2351 = vmatprep.subr.mxu0 0.0
    %2352 = vmatpush1.msra.mxu0 0.0
    %2353 = vmatprep.subr.mxu0 0.0
    %2354 = vmatpush1.msra.mxu0 0.0
    %2355 = vmatprep.subr.mxu0 0.0
    %2356 = vmatpush1.msra.mxu0 0.0
    %2357 = vmatprep.subr.mxu0 0.0
    %2358 = vmatpush1.msra.mxu0 0.0
    %2359 = vmatprep.subr.mxu0 0.0
    %2360 = vmatpush1.msra.mxu0 0.0
    %2361 = vmatprep.subr.mxu0 0.0
    %2362 = vmatpush1.msra.mxu0 0.0
    %2363 = vmatprep.subr.mxu0 0.0
    %2364 = vmatpush1.msra.mxu0 0.0
    %2365 = vmatprep.subr.mxu0 0.0
    %2366 = vmatpush1.msra.mxu0 0.0
    %2367 = vmatprep.subr.mxu0 0.0
    %2368 = vmatpush1.msra.mxu0 0.0
    %2369 = vmatprep.subr.mxu0 0.0
    %2370 = vmatpush1.msra.mxu0 0.0
    %2371 = vmatprep.subr.mxu0 0.0
    %2372 = vmatpush1.msra.mxu0 0.0
    %2373 = vmatprep.subr.mxu0 0.0
    %2374 = vmatpush1.msra.mxu0 %v1631
    %2375 = vmatprep.subr.mxu0 0.0
    %2376 = vmatpush1.msra.mxu0 %v1630
    %2377 = vmatprep.subr.mxu0 0.0
    %2378 = vmatpush1.msra.mxu0 %v1629
    %2379 = vmatprep.subr.mxu0 0.0
    %2380 = vmatpush1.msra.mxu0 %v1628
    %2381 = vmatprep.subr.mxu0 0.0
    %2382 = vmatpush2.msra.mxu0 0.0
    %2383 = vmatprep.subr.mxu0 0.0
    %2384 = vmatpush2.msra.mxu0 0.0
    %2385 = vmatprep.subr.mxu0 0.0
    %2386 = vmatpush2.msra.mxu0 0.0
    %2387 = vmatprep.subr.mxu0 0.0
    %2388 = vmatpush2.msra.mxu0 0.0
    %2389 = vmatprep.subr.mxu0 0.0
    %2390 = vmatpush2.msra.mxu0 0.0
    %2391 = vmatprep.subr.mxu0 0.0
    %2392 = vmatpush2.msra.mxu0 0.0
    %2393 = vmatprep.subr.mxu0 0.0
    %2394 = vmatpush2.msra.mxu0 0.0
    %2395 = vmatprep.subr.mxu0 0.0
    %2396 = vmatpush2.msra.mxu0 0.0
    %2397 = vmatprep.subr.mxu0 0.0
    %2398 = vmatpush2.msra.mxu0 0.0
    %2399 = vmatprep.subr.mxu0 0.0
    %2400 = vmatpush2.msra.mxu0 0.0
    %2401 = vmatprep.subr.mxu0 0.0
    %2402 = vmatpush2.msra.mxu0 0.0
    %2403 = vmatprep.subr.mxu0 0.0
    %2404 = vmatpush2.msra.mxu0 0.0
    %2405 = vmatprep.subr.mxu0 0.0
    %2406 = vmatpush2.msra.mxu0 0.0
    %2407 = vmatprep.subr.mxu0 0.0
    %2408 = vmatpush2.msra.mxu0 0.0
    %2409 = vmatprep.subr.mxu0 0.0
    %2410 = vmatpush2.msra.mxu0 0.0
    %2411 = vmatprep.subr.mxu0 0.0
    %2412 = vmatpush2.msra.mxu0 0.0
    %2413 = vmatprep.mubr.f32.mxu0 0.0
    %2414 = vmatmul.mubr.f32.gmra.mxu0 %v2347
    %v2415 = vpop.f32.mrf.mxu0
    %v2416 = vadd.f32 0.0, %v2415
    %v2417 = vpop.f32.mrf.mxu0
    %2418 = vdwg.mxu0
    %v2419 = vadd.f32 %v1741, %v2416
    %v2420 = vxor.u32 %v2419, 2147483648
    %v2421 = vmul.f32 %v2420, 1.442695
    %v2422 = vpow.pop %v2421
    %v2423 = vadd.f32 %v2422, 1.0
    %v2424 = vrcp.pop %v2423
    %v2425 = vmul.f32 1.0, %v2424
    %v2426 = vtanh.pop %v2419
    %v2427 = vmul.f32 %v2425, %v2337
    %2429 = vrot.lane.b32.xlu0 %v2426, 32
    %v2430 = vpop.permute.xlu0 %2429
    %v2432 = vmul.f32 %v2425, %v2430
    %2434 = vrot.lane.b32.xlu0 %v2432, 32
    %v2435 = vpop.permute.xlu0 %2434
    %v2437 = vadd.f32 %v2427, %v2435
    %v2438 = vtanh.pop %v2437
    %2440 = vrot.lane.b32.xlu0 %v2438, 32
    %v2441 = vpop.permute.xlu0 %2440
    %v2443 = vmul.f32 %v2425, %v2441
    %2445 = vrot.lane.b32.xlu0 %v2443, 64
    %v2446 = vpop.permute.xlu0 %2445
    %v2447 = vsel %vm696, %v2446, 0
    %2449 = vmatprep.subr.mxu0 0.0
    %2450 = vmatpush1.msra.mxu0 0.0
    %2451 = vmatprep.subr.mxu0 0.0
    %2452 = vmatpush1.msra.mxu0 0.0
    %2453 = vmatprep.subr.mxu0 0.0
    %2454 = vmatpush1.msra.mxu0 0.0
    %2455 = vmatprep.subr.mxu0 0.0
    %2456 = vmatpush1.msra.mxu0 0.0
    %2457 = vmatprep.subr.mxu0 0.0
    %2458 = vmatpush1.msra.mxu0 0.0
    %2459 = vmatprep.subr.mxu0 0.0
    %2460 = vmatpush1.msra.mxu0 0.0
    %2461 = vmatprep.subr.mxu0 0.0
    %2462 = vmatpush1.msra.mxu0 0.0
    %2463 = vmatprep.subr.mxu0 0.0
    %2464 = vmatpush1.msra.mxu0 0.0
    %2465 = vmatprep.subr.mxu0 0.0
    %2466 = vmatpush1.msra.mxu0 0.0
    %2467 = vmatprep.subr.mxu0 0.0
    %2468 = vmatpush1.msra.mxu0 0.0
    %2469 = vmatprep.subr.mxu0 0.0
    %2470 = vmatpush1.msra.mxu0 0.0
    %2471 = vmatprep.subr.mxu0 0.0
    %2472 = vmatpush1.msra.mxu0 0.0
    %2473 = vmatprep.subr.mxu0 0.0
    %2474 = vmatpush1.msra.mxu0 %v1631
    %2475 = vmatprep.subr.mxu0 0.0
    %2476 = vmatpush1.msra.mxu0 %v1630
    %2477 = vmatprep.subr.mxu0 0.0
    %2478 = vmatpush1.msra.mxu0 %v1629
    %2479 = vmatprep.subr.mxu0 0.0
    %2480 = vmatpush1.msra.mxu0 %v1628
    %2481 = vmatprep.subr.mxu0 0.0
    %2482 = vmatpush2.msra.mxu0 0.0
    %2483 = vmatprep.subr.mxu0 0.0
    %2484 = vmatpush2.msra.mxu0 0.0
    %2485 = vmatprep.subr.mxu0 0.0
    %2486 = vmatpush2.msra.mxu0 0.0
    %2487 = vmatprep.subr.mxu0 0.0
    %2488 = vmatpush2.msra.mxu0 0.0
    %2489 = vmatprep.subr.mxu0 0.0
    %2490 = vmatpush2.msra.mxu0 0.0
    %2491 = vmatprep.subr.mxu0 0.0
    %2492 = vmatpush2.msra.mxu0 0.0
    %2493 = vmatprep.subr.mxu0 0.0
    %2494 = vmatpush2.msra.mxu0 0.0
    %2495 = vmatprep.subr.mxu0 0.0
    %2496 = vmatpush2.msra.mxu0 0.0
    %2497 = vmatprep.subr.mxu0 0.0
    %2498 = vmatpush2.msra.mxu0 0.0
    %2499 = vmatprep.subr.mxu0 0.0
    %2500 = vmatpush2.msra.mxu0 0.0
    %2501 = vmatprep.subr.mxu0 0.0
    %2502 = vmatpush2.msra.mxu0 0.0
    %2503 = vmatprep.subr.mxu0 0.0
    %2504 = vmatpush2.msra.mxu0 0.0
    %2505 = vmatprep.subr.mxu0 0.0
    %2506 = vmatpush2.msra.mxu0 0.0
    %2507 = vmatprep.subr.mxu0 0.0
    %2508 = vmatpush2.msra.mxu0 0.0
    %2509 = vmatprep.subr.mxu0 0.0
    %2510 = vmatpush2.msra.mxu0 0.0
    %2511 = vmatprep.subr.mxu0 0.0
    %2512 = vmatpush2.msra.mxu0 0.0
    %2513 = vmatprep.mubr.f32.mxu0 0.0
    %2514 = vmatmul.mubr.f32.gmra.mxu0 %v2447
    %v2515 = vpop.f32.mrf.mxu0
    %v2516 = vadd.f32 0.0, %v2515
    %v2517 = vpop.f32.mrf.mxu0
    %2518 = vdwg.mxu0
    %v2519 = vadd.f32 %v1746, %v2516
    %v2520 = vxor.u32 %v2519, 2147483648
    %v2521 = vmul.f32 %v2520, 1.442695
    %v2522 = vpow.pop %v2521
    %v2523 = vadd.f32 %v2522, 1.0
    %v2524 = vrcp.pop %v2523
    %v2525 = vmul.f32 1.0, %v2524
    %v2526 = vtanh.pop %v2519
    %v2527 = vmul.f32 %v2525, %v2437
    %2529 = vrot.lane.b32.xlu0 %v2526, 32
    %v2530 = vpop.permute.xlu0 %2529
    %v2532 = vmul.f32 %v2525, %v2530
    %2534 = vrot.lane.b32.xlu0 %v2532, 32
    %v2535 = vpop.permute.xlu0 %2534
    %v2537 = vadd.f32 %v2527, %v2535
    %v2538 = vtanh.pop %v2537
    %2540 = vrot.lane.b32.xlu0 %v2538, 32
    %v2541 = vpop.permute.xlu0 %2540
    %v2543 = vmul.f32 %v2525, %v2541
    %2545 = vrot.lane.b32.xlu0 %v2543, 64
    %v2546 = vpop.permute.xlu0 %2545
    %v2555 = vadd.f32 %v643, %v1846
    %v2556 = vadd.f32 %v648, %v1946
    %v2557 = vadd.f32 %v653, %v2046
    %v2558 = vadd.f32 %v658, %v2146
    %v2559 = vadd.f32 %v663, %v2246
    %v2560 = vadd.f32 %v668, %v2346
    %v2561 = vadd.f32 %v673, %v2446
    %v2562 = vadd.f32 %v678, %v2546
    %v2563 = vld [vmem:[%s19] sm:$0xff]
    %v2564 = vld [vmem:[%s19 + $0x8] sm:$0xff]
    %v2565 = vld [vmem:[%s19 + $0x10] sm:$0xff]
    %v2566 = vld [vmem:[%s19 + $0x18] sm:$0xff]
    %v2567 = vld [vmem:[%s20] sm:$0xff]
    %v2568 = vld [vmem:[%s20 + $0x8] sm:$0xff]
    %v2569 = vld [vmem:[%s20 + $0x10] sm:$0xff]
    %v2570 = vld [vmem:[%s20 + $0x18] sm:$0xff]
    %v2571 = vld [vmem:[%s21] sm:$0x1]
    %v2573 = vlaneseq
    %v2574 = vshrl.u32 %v2573, 7
    %v2575 = vsub.s32 0, %v2574
    %v2576 = vrot.slane %v2571, %v2575
    %v2579 = vsel %vm696, %v2555, 0
    %v2582 = vsel %vm696, %v2556, 0
    %v2585 = vsel %vm696, %v2557, 0
    %v2588 = vsel %vm696, %v2558, 0
    %v2591 = vsel %vm696, %v2559, 0
    %v2594 = vsel %vm696, %v2560, 0
    %v2597 = vsel %vm696, %v2561, 0
    %v2600 = vsel %vm696, %v2562, 0
    %2602 = vmatprep.subr.mxu0 0.0
    %2603 = vmatpush1.msra.mxu0 0.0
    %2604 = vmatprep.subr.mxu0 0.0
    %2605 = vmatpush1.msra.mxu0 0.0
    %2606 = vmatprep.subr.mxu0 0.0
    %2607 = vmatpush1.msra.mxu0 0.0
    %2608 = vmatprep.subr.mxu0 0.0
    %2609 = vmatpush1.msra.mxu0 0.0
    %2610 = vmatprep.subr.mxu0 0.0
    %2611 = vmatpush1.msra.mxu0 0.0
    %2612 = vmatprep.subr.mxu0 0.0
    %2613 = vmatpush1.msra.mxu0 0.0
    %2614 = vmatprep.subr.mxu0 0.0
    %2615 = vmatpush1.msra.mxu0 0.0
    %2616 = vmatprep.subr.mxu0 0.0
    %2617 = vmatpush1.msra.mxu0 0.0
    %2618 = vmatprep.subr.mxu0 0.0
    %2619 = vmatpush1.msra.mxu0 0.0
    %2620 = vmatprep.subr.mxu0 0.0
    %2621 = vmatpush1.msra.mxu0 0.0
    %2622 = vmatprep.subr.mxu0 0.0
    %2623 = vmatpush1.msra.mxu0 0.0
    %2624 = vmatprep.subr.mxu0 0.0
    %2625 = vmatpush1.msra.mxu0 0.0
    %2626 = vmatprep.subr.mxu0 0.0
    %2627 = vmatpush1.msra.mxu0 %v2566
    %2628 = vmatprep.subr.mxu0 0.0
    %2629 = vmatpush1.msra.mxu0 %v2565
    %2630 = vmatprep.subr.mxu0 0.0
    %2631 = vmatpush1.msra.mxu0 %v2564
    %2632 = vmatprep.subr.mxu0 0.0
    %2633 = vmatpush1.msra.mxu0 %v2563
    %2634 = vmatprep.subr.mxu0 0.0
    %2635 = vmatpush2.msra.mxu0 0.0
    %2636 = vmatprep.subr.mxu0 0.0
    %2637 = vmatpush2.msra.mxu0 0.0
    %2638 = vmatprep.subr.mxu0 0.0
    %2639 = vmatpush2.msra.mxu0 0.0
    %2640 = vmatprep.subr.mxu0 0.0
    %2641 = vmatpush2.msra.mxu0 0.0
    %2642 = vmatprep.subr.mxu0 0.0
    %2643 = vmatpush2.msra.mxu0 0.0
    %2644 = vmatprep.subr.mxu0 0.0
    %2645 = vmatpush2.msra.mxu0 0.0
    %2646 = vmatprep.subr.mxu0 0.0
    %2647 = vmatpush2.msra.mxu0 0.0
    %2648 = vmatprep.subr.mxu0 0.0
    %2649 = vmatpush2.msra.mxu0 0.0
    %2650 = vmatprep.subr.mxu0 0.0
    %2651 = vmatpush2.msra.mxu0 0.0
    %2652 = vmatprep.subr.mxu0 0.0
    %2653 = vmatpush2.msra.mxu0 0.0
    %2654 = vmatprep.subr.mxu0 0.0
    %2655 = vmatpush2.msra.mxu0 0.0
    %2656 = vmatprep.subr.mxu0 0.0
    %2657 = vmatpush2.msra.mxu0 0.0
    %2658 = vmatprep.subr.mxu0 0.0
    %2659 = vmatpush2.msra.mxu0 0.0
    %2660 = vmatprep.subr.mxu0 0.0
    %2661 = vmatpush2.msra.mxu0 0.0
    %2662 = vmatprep.subr.mxu0 0.0
    %2663 = vmatpush2.msra.mxu0 0.0
    %2664 = vmatprep.subr.mxu0 0.0
    %2665 = vmatpush2.msra.mxu0 0.0
    %2666 = vmatprep.mubr.f32.mxu0 0.0
    %2667 = vmatmul.mubr.f32.gmra.mxu0 %v2579
    %v2668 = vpop.f32.mrf.mxu0
    %v2669 = vadd.f32 %v2576, %v2668
    %v2670 = vpop.f32.mrf.mxu0
    %2671 = vmatprep.mubr.f32.mxu0 0.0
    %2672 = vmatmul.mubr.f32.gmra.mxu0 %v2582
    %v2673 = vpop.f32.mrf.mxu0
    %v2674 = vadd.f32 %v2576, %v2673
    %v2675 = vpop.f32.mrf.mxu0
    %2676 = vmatprep.mubr.f32.mxu0 0.0
    %2677 = vmatmul.mubr.f32.gmra.mxu0 %v2585
    %v2678 = vpop.f32.mrf.mxu0
    %v2679 = vadd.f32 %v2576, %v2678
    %v2680 = vpop.f32.mrf.mxu0
    %2681 = vmatprep.mubr.f32.mxu0 0.0
    %2682 = vmatmul.mubr.f32.gmra.mxu0 %v2588
    %v2683 = vpop.f32.mrf.mxu0
    %v2684 = vadd.f32 %v2576, %v2683
    %v2685 = vpop.f32.mrf.mxu0
    %2686 = vmatprep.mubr.f32.mxu0 0.0
    %2687 = vmatmul.mubr.f32.gmra.mxu0 %v2591
    %v2688 = vpop.f32.mrf.mxu0
    %v2689 = vadd.f32 %v2576, %v2688
    %v2690 = vpop.f32.mrf.mxu0
    %2691 = vmatprep.mubr.f32.mxu0 0.0
    %2692 = vmatmul.mubr.f32.gmra.mxu0 %v2594
    %v2693 = vpop.f32.mrf.mxu0
    %v2694 = vadd.f32 %v2576, %v2693
    %v2695 = vpop.f32.mrf.mxu0
    %2696 = vmatprep.mubr.f32.mxu0 0.0
    %2697 = vmatmul.mubr.f32.gmra.mxu0 %v2597
    %v2698 = vpop.f32.mrf.mxu0
    %v2699 = vadd.f32 %v2576, %v2698
    %v2700 = vpop.f32.mrf.mxu0
    %2701 = vmatprep.mubr.f32.mxu0 0.0
    %2702 = vmatmul.mubr.f32.gmra.mxu0 %v2600
    %v2703 = vpop.f32.mrf.mxu0
    %v2704 = vadd.f32 %v2576, %v2703
    %v2705 = vpop.f32.mrf.mxu0
    %2706 = vdwg.mxu0
    %2707 = vmatprep.subr.mxu0 0.0
    %2708 = vmatpush1.msra.mxu0 0.0
    %2709 = vmatprep.subr.mxu0 0.0
    %2710 = vmatpush1.msra.mxu0 0.0
    %2711 = vmatprep.subr.mxu0 0.0
    %2712 = vmatpush1.msra.mxu0 0.0
    %2713 = vmatprep.subr.mxu0 0.0
    %2714 = vmatpush1.msra.mxu0 0.0
    %2715 = vmatprep.subr.mxu0 0.0
    %2716 = vmatpush1.msra.mxu0 0.0
    %2717 = vmatprep.subr.mxu0 0.0
    %2718 = vmatpush1.msra.mxu0 0.0
    %2719 = vmatprep.subr.mxu0 0.0
    %2720 = vmatpush1.msra.mxu0 0.0
    %2721 = vmatprep.subr.mxu0 0.0
    %2722 = vmatpush1.msra.mxu0 0.0
    %2723 = vmatprep.subr.mxu0 0.0
    %2724 = vmatpush1.msra.mxu0 0.0
    %2725 = vmatprep.subr.mxu0 0.0
    %2726 = vmatpush1.msra.mxu0 0.0
    %2727 = vmatprep.subr.mxu0 0.0
    %2728 = vmatpush1.msra.mxu0 0.0
    %2729 = vmatprep.subr.mxu0 0.0
    %2730 = vmatpush1.msra.mxu0 0.0
    %2731 = vmatprep.subr.mxu0 0.0
    %2732 = vmatpush1.msra.mxu0 %v2570
    %2733 = vmatprep.subr.mxu0 0.0
    %2734 = vmatpush1.msra.mxu0 %v2569
    %2735 = vmatprep.subr.mxu0 0.0
    %2736 = vmatpush1.msra.mxu0 %v2568
    %2737 = vmatprep.subr.mxu0 0.0
    %2738 = vmatpush1.msra.mxu0 %v2567
    %2739 = vmatprep.subr.mxu0 0.0
    %2740 = vmatpush2.msra.mxu0 0.0
    %2741 = vmatprep.subr.mxu0 0.0
    %2742 = vmatpush2.msra.mxu0 0.0
    %2743 = vmatprep.subr.mxu0 0.0
    %2744 = vmatpush2.msra.mxu0 0.0
    %2745 = vmatprep.subr.mxu0 0.0
    %2746 = vmatpush2.msra.mxu0 0.0
    %2747 = vmatprep.subr.mxu0 0.0
    %2748 = vmatpush2.msra.mxu0 0.0
    %2749 = vmatprep.subr.mxu0 0.0
    %2750 = vmatpush2.msra.mxu0 0.0
    %2751 = vmatprep.subr.mxu0 0.0
    %2752 = vmatpush2.msra.mxu0 0.0
    %2753 = vmatprep.subr.mxu0 0.0
    %2754 = vmatpush2.msra.mxu0 0.0
    %2755 = vmatprep.subr.mxu0 0.0
    %2756 = vmatpush2.msra.mxu0 0.0
    %2757 = vmatprep.subr.mxu0 0.0
    %2758 = vmatpush2.msra.mxu0 0.0
    %2759 = vmatprep.subr.mxu0 0.0
    %2760 = vmatpush2.msra.mxu0 0.0
    %2761 = vmatprep.subr.mxu0 0.0
    %2762 = vmatpush2.msra.mxu0 0.0
    %2763 = vmatprep.subr.mxu0 0.0
    %2764 = vmatpush2.msra.mxu0 0.0
    %2765 = vmatprep.subr.mxu0 0.0
    %2766 = vmatpush2.msra.mxu0 0.0
    %2767 = vmatprep.subr.mxu0 0.0
    %2768 = vmatpush2.msra.mxu0 0.0
    %2769 = vmatprep.subr.mxu0 0.0
    %2770 = vmatpush2.msra.mxu0 0.0
    %2771 = vmatprep.mubr.f32.mxu0 0.0
    %2772 = vmatmul.mubr.f32.gmra.mxu0 %v827
    %v2773 = vpop.f32.mrf.mxu0
    %v2774 = vadd.f32 0.0, %v2773
    %v2775 = vpop.f32.mrf.mxu0
    %2776 = vdwg.mxu0
    %v2777 = vadd.f32 %v2669, %v2774
    %v2778 = vxor.u32 %v2777, 2147483648
    %v2779 = vmul.f32 %v2778, 1.442695
    %v2780 = vpow.pop %v2779
    %v2781 = vadd.f32 %v2780, 1.0
    %v2782 = vrcp.pop %v2781
    %v2783 = vmul.f32 1.0, %v2782
    %v2784 = vtanh.pop %v2777
    %v2785 = vmul.f32 %v2783, 0.0
    %2787 = vrot.lane.b32.xlu0 %v2784, 32
    %v2788 = vpop.permute.xlu0 %2787
    %v2790 = vmul.f32 %v2783, %v2788
    %2792 = vrot.lane.b32.xlu0 %v2790, 32
    %v2793 = vpop.permute.xlu0 %2792
    %v2795 = vadd.f32 %v2785, %v2793
    %v2796 = vtanh.pop %v2795
    %2798 = vrot.lane.b32.xlu0 %v2796, 32
    %v2799 = vpop.permute.xlu0 %2798
    %v2801 = vmul.f32 %v2783, %v2799
    %2803 = vrot.lane.b32.xlu0 %v2801, 64
    %v2804 = vpop.permute.xlu0 %2803
    %v2805 = vsel %vm696, %v2804, 0
    %2807 = vmatprep.subr.mxu0 0.0
    %2808 = vmatpush1.msra.mxu0 0.0
    %2809 = vmatprep.subr.mxu0 0.0
    %2810 = vmatpush1.msra.mxu0 0.0
    %2811 = vmatprep.subr.mxu0 0.0
    %2812 = vmatpush1.msra.mxu0 0.0
    %2813 = vmatprep.subr.mxu0 0.0
    %2814 = vmatpush1.msra.mxu0 0.0
    %2815 = vmatprep.subr.mxu0 0.0
    %2816 = vmatpush1.msra.mxu0 0.0
    %2817 = vmatprep.subr.mxu0 0.0
    %2818 = vmatpush1.msra.mxu0 0.0
    %2819 = vmatprep.subr.mxu0 0.0
    %2820 = vmatpush1.msra.mxu0 0.0
    %2821 = vmatprep.subr.mxu0 0.0
    %2822 = vmatpush1.msra.mxu0 0.0
    %2823 = vmatprep.subr.mxu0 0.0
    %2824 = vmatpush1.msra.mxu0 0.0
    %2825 = vmatprep.subr.mxu0 0.0
    %2826 = vmatpush1.msra.mxu0 0.0
    %2827 = vmatprep.subr.mxu0 0.0
    %2828 = vmatpush1.msra.mxu0 0.0
    %2829 = vmatprep.subr.mxu0 0.0
    %2830 = vmatpush1.msra.mxu0 0.0
    %2831 = vmatprep.subr.mxu0 0.0
    %2832 = vmatpush1.msra.mxu0 %v2570
    %2833 = vmatprep.subr.mxu0 0.0
    %2834 = vmatpush1.msra.mxu0 %v2569
    %2835 = vmatprep.subr.mxu0 0.0
    %2836 = vmatpush1.msra.mxu0 %v2568
    %2837 = vmatprep.subr.mxu0 0.0
    %2838 = vmatpush1.msra.mxu0 %v2567
    %2839 = vmatprep.subr.mxu0 0.0
    %2840 = vmatpush2.msra.mxu0 0.0
    %2841 = vmatprep.subr.mxu0 0.0
    %2842 = vmatpush2.msra.mxu0 0.0
    %2843 = vmatprep.subr.mxu0 0.0
    %2844 = vmatpush2.msra.mxu0 0.0
    %2845 = vmatprep.subr.mxu0 0.0
    %2846 = vmatpush2.msra.mxu0 0.0
    %2847 = vmatprep.subr.mxu0 0.0
    %2848 = vmatpush2.msra.mxu0 0.0
    %2849 = vmatprep.subr.mxu0 0.0
    %2850 = vmatpush2.msra.mxu0 0.0
    %2851 = vmatprep.subr.mxu0 0.0
    %2852 = vmatpush2.msra.mxu0 0.0
    %2853 = vmatprep.subr.mxu0 0.0
    %2854 = vmatpush2.msra.mxu0 0.0
    %2855 = vmatprep.subr.mxu0 0.0
    %2856 = vmatpush2.msra.mxu0 0.0
    %2857 = vmatprep.subr.mxu0 0.0
    %2858 = vmatpush2.msra.mxu0 0.0
    %2859 = vmatprep.subr.mxu0 0.0
    %2860 = vmatpush2.msra.mxu0 0.0
    %2861 = vmatprep.subr.mxu0 0.0
    %2862 = vmatpush2.msra.mxu0 0.0
    %2863 = vmatprep.subr.mxu0 0.0
    %2864 = vmatpush2.msra.mxu0 0.0
    %2865 = vmatprep.subr.mxu0 0.0
    %2866 = vmatpush2.msra.mxu0 0.0
    %2867 = vmatprep.subr.mxu0 0.0
    %2868 = vmatpush2.msra.mxu0 0.0
    %2869 = vmatprep.subr.mxu0 0.0
    %2870 = vmatpush2.msra.mxu0 0.0
    %2871 = vmatprep.mubr.f32.mxu0 0.0
    %2872 = vmatmul.mubr.f32.gmra.mxu0 %v2805
    %v2873 = vpop.f32.mrf.mxu0
    %v2874 = vadd.f32 0.0, %v2873
    %v2875 = vpop.f32.mrf.mxu0
    %2876 = vdwg.mxu0
    %v2877 = vadd.f32 %v2674, %v2874
    %v2878 = vxor.u32 %v2877, 2147483648
    %v2879 = vmul.f32 %v2878, 1.442695
    %v2880 = vpow.pop %v2879
    %v2881 = vadd.f32 %v2880, 1.0
    %v2882 = vrcp.pop %v2881
    %v2883 = vmul.f32 1.0, %v2882
    %v2884 = vtanh.pop %v2877
    %v2885 = vmul.f32 %v2883, %v2795
    %2887 = vrot.lane.b32.xlu0 %v2884, 32
    %v2888 = vpop.permute.xlu0 %2887
    %v2890 = vmul.f32 %v2883, %v2888
    %2892 = vrot.lane.b32.xlu0 %v2890, 32
    %v2893 = vpop.permute.xlu0 %2892
    %v2895 = vadd.f32 %v2885, %v2893
    %v2896 = vtanh.pop %v2895
    %2898 = vrot.lane.b32.xlu0 %v2896, 32
    %v2899 = vpop.permute.xlu0 %2898
    %v2901 = vmul.f32 %v2883, %v2899
    %2903 = vrot.lane.b32.xlu0 %v2901, 64
    %v2904 = vpop.permute.xlu0 %2903
    %v2905 = vsel %vm696, %v2904, 0
    %2907 = vmatprep.subr.mxu0 0.0
    %2908 = vmatpush1.msra.mxu0 0.0
    %2909 = vmatprep.subr.mxu0 0.0
    %2910 = vmatpush1.msra.mxu0 0.0
    %2911 = vmatprep.subr.mxu0 0.0
    %2912 = vmatpush1.msra.mxu0 0.0
    %2913 = vmatprep.subr.mxu0 0.0
    %2914 = vmatpush1.msra.mxu0 0.0
    %2915 = vmatprep.subr.mxu0 0.0
    %2916 = vmatpush1.msra.mxu0 0.0
    %2917 = vmatprep.subr.mxu0 0.0
    %2918 = vmatpush1.msra.mxu0 0.0
    %2919 = vmatprep.subr.mxu0 0.0
    %2920 = vmatpush1.msra.mxu0 0.0
    %2921 = vmatprep.subr.mxu0 0.0
    %2922 = vmatpush1.msra.mxu0 0.0
    %2923 = vmatprep.subr.mxu0 0.0
    %2924 = vmatpush1.msra.mxu0 0.0
    %2925 = vmatprep.subr.mxu0 0.0
    %2926 = vmatpush1.msra.mxu0 0.0
    %2927 = vmatprep.subr.mxu0 0.0
    %2928 = vmatpush1.msra.mxu0 0.0
    %2929 = vmatprep.subr.mxu0 0.0
    %2930 = vmatpush1.msra.mxu0 0.0
    %2931 = vmatprep.subr.mxu0 0.0
    %2932 = vmatpush1.msra.mxu0 %v2570
    %2933 = vmatprep.subr.mxu0 0.0
    %2934 = vmatpush1.msra.mxu0 %v2569
    %2935 = vmatprep.subr.mxu0 0.0
    %2936 = vmatpush1.msra.mxu0 %v2568
    %2937 = vmatprep.subr.mxu0 0.0
    %2938 = vmatpush1.msra.mxu0 %v2567
    %2939 = vmatprep.subr.mxu0 0.0
    %2940 = vmatpush2.msra.mxu0 0.0
    %2941 = vmatprep.subr.mxu0 0.0
    %2942 = vmatpush2.msra.mxu0 0.0
    %2943 = vmatprep.subr.mxu0 0.0
    %2944 = vmatpush2.msra.mxu0 0.0
    %2945 = vmatprep.subr.mxu0 0.0
    %2946 = vmatpush2.msra.mxu0 0.0
    %2947 = vmatprep.subr.mxu0 0.0
    %2948 = vmatpush2.msra.mxu0 0.0
    %2949 = vmatprep.subr.mxu0 0.0
    %2950 = vmatpush2.msra.mxu0 0.0
    %2951 = vmatprep.subr.mxu0 0.0
    %2952 = vmatpush2.msra.mxu0 0.0
    %2953 = vmatprep.subr.mxu0 0.0
    %2954 = vmatpush2.msra.mxu0 0.0
    %2955 = vmatprep.subr.mxu0 0.0
    %2956 = vmatpush2.msra.mxu0 0.0
    %2957 = vmatprep.subr.mxu0 0.0
    %2958 = vmatpush2.msra.mxu0 0.0
    %2959 = vmatprep.subr.mxu0 0.0
    %2960 = vmatpush2.msra.mxu0 0.0
    %2961 = vmatprep.subr.mxu0 0.0
    %2962 = vmatpush2.msra.mxu0 0.0
    %2963 = vmatprep.subr.mxu0 0.0
    %2964 = vmatpush2.msra.mxu0 0.0
    %2965 = vmatprep.subr.mxu0 0.0
    %2966 = vmatpush2.msra.mxu0 0.0
    %2967 = vmatprep.subr.mxu0 0.0
    %2968 = vmatpush2.msra.mxu0 0.0
    %2969 = vmatprep.subr.mxu0 0.0
    %2970 = vmatpush2.msra.mxu0 0.0
    %2971 = vmatprep.mubr.f32.mxu0 0.0
    %2972 = vmatmul.mubr.f32.gmra.mxu0 %v2905
    %v2973 = vpop.f32.mrf.mxu0
    %v2974 = vadd.f32 0.0, %v2973
    %v2975 = vpop.f32.mrf.mxu0
    %2976 = vdwg.mxu0
    %v2977 = vadd.f32 %v2679, %v2974
    %v2978 = vxor.u32 %v2977, 2147483648
    %v2979 = vmul.f32 %v2978, 1.442695
    %v2980 = vpow.pop %v2979
    %v2981 = vadd.f32 %v2980, 1.0
    %v2982 = vrcp.pop %v2981
    %v2983 = vmul.f32 1.0, %v2982
    %v2984 = vtanh.pop %v2977
    %v2985 = vmul.f32 %v2983, %v2895
    %2987 = vrot.lane.b32.xlu0 %v2984, 32
    %v2988 = vpop.permute.xlu0 %2987
    %v2990 = vmul.f32 %v2983, %v2988
    %2992 = vrot.lane.b32.xlu0 %v2990, 32
    %v2993 = vpop.permute.xlu0 %2992
    %v2995 = vadd.f32 %v2985, %v2993
    %v2996 = vtanh.pop %v2995
    %2998 = vrot.lane.b32.xlu0 %v2996, 32
    %v2999 = vpop.permute.xlu0 %2998
    %v3001 = vmul.f32 %v2983, %v2999
    %3003 = vrot.lane.b32.xlu0 %v3001, 64
    %v3004 = vpop.permute.xlu0 %3003
    %v3005 = vsel %vm696, %v3004, 0
    %3007 = vmatprep.subr.mxu0 0.0
    %3008 = vmatpush1.msra.mxu0 0.0
    %3009 = vmatprep.subr.mxu0 0.0
    %3010 = vmatpush1.msra.mxu0 0.0
    %3011 = vmatprep.subr.mxu0 0.0
    %3012 = vmatpush1.msra.mxu0 0.0
    %3013 = vmatprep.subr.mxu0 0.0
    %3014 = vmatpush1.msra.mxu0 0.0
    %3015 = vmatprep.subr.mxu0 0.0
    %3016 = vmatpush1.msra.mxu0 0.0
    %3017 = vmatprep.subr.mxu0 0.0
    %3018 = vmatpush1.msra.mxu0 0.0
    %3019 = vmatprep.subr.mxu0 0.0
    %3020 = vmatpush1.msra.mxu0 0.0
    %3021 = vmatprep.subr.mxu0 0.0
    %3022 = vmatpush1.msra.mxu0 0.0
    %3023 = vmatprep.subr.mxu0 0.0
    %3024 = vmatpush1.msra.mxu0 0.0
    %3025 = vmatprep.subr.mxu0 0.0
    %3026 = vmatpush1.msra.mxu0 0.0
    %3027 = vmatprep.subr.mxu0 0.0
    %3028 = vmatpush1.msra.mxu0 0.0
    %3029 = vmatprep.subr.mxu0 0.0
    %3030 = vmatpush1.msra.mxu0 0.0
    %3031 = vmatprep.subr.mxu0 0.0
    %3032 = vmatpush1.msra.mxu0 %v2570
    %3033 = vmatprep.subr.mxu0 0.0
    %3034 = vmatpush1.msra.mxu0 %v2569
    %3035 = vmatprep.subr.mxu0 0.0
    %3036 = vmatpush1.msra.mxu0 %v2568
    %3037 = vmatprep.subr.mxu0 0.0
    %3038 = vmatpush1.msra.mxu0 %v2567
    %3039 = vmatprep.subr.mxu0 0.0
    %3040 = vmatpush2.msra.mxu0 0.0
    %3041 = vmatprep.subr.mxu0 0.0
    %3042 = vmatpush2.msra.mxu0 0.0
    %3043 = vmatprep.subr.mxu0 0.0
    %3044 = vmatpush2.msra.mxu0 0.0
    %3045 = vmatprep.subr.mxu0 0.0
    %3046 = vmatpush2.msra.mxu0 0.0
    %3047 = vmatprep.subr.mxu0 0.0
    %3048 = vmatpush2.msra.mxu0 0.0
    %3049 = vmatprep.subr.mxu0 0.0
    %3050 = vmatpush2.msra.mxu0 0.0
    %3051 = vmatprep.subr.mxu0 0.0
    %3052 = vmatpush2.msra.mxu0 0.0
    %3053 = vmatprep.subr.mxu0 0.0
    %3054 = vmatpush2.msra.mxu0 0.0
    %3055 = vmatprep.subr.mxu0 0.0
    %3056 = vmatpush2.msra.mxu0 0.0
    %3057 = vmatprep.subr.mxu0 0.0
    %3058 = vmatpush2.msra.mxu0 0.0
    %3059 = vmatprep.subr.mxu0 0.0
    %3060 = vmatpush2.msra.mxu0 0.0
    %3061 = vmatprep.subr.mxu0 0.0
    %3062 = vmatpush2.msra.mxu0 0.0
    %3063 = vmatprep.subr.mxu0 0.0
    %3064 = vmatpush2.msra.mxu0 0.0
    %3065 = vmatprep.subr.mxu0 0.0
    %3066 = vmatpush2.msra.mxu0 0.0
    %3067 = vmatprep.subr.mxu0 0.0
    %3068 = vmatpush2.msra.mxu0 0.0
    %3069 = vmatprep.subr.mxu0 0.0
    %3070 = vmatpush2.msra.mxu0 0.0
    %3071 = vmatprep.mubr.f32.mxu0 0.0
    %3072 = vmatmul.mubr.f32.gmra.mxu0 %v3005
    %v3073 = vpop.f32.mrf.mxu0
    %v3074 = vadd.f32 0.0, %v3073
    %v3075 = vpop.f32.mrf.mxu0
    %3076 = vdwg.mxu0
    %v3077 = vadd.f32 %v2684, %v3074
    %v3078 = vxor.u32 %v3077, 2147483648
    %v3079 = vmul.f32 %v3078, 1.442695
    %v3080 = vpow.pop %v3079
    %v3081 = vadd.f32 %v3080, 1.0
    %v3082 = vrcp.pop %v3081
    %v3083 = vmul.f32 1.0, %v3082
    %v3084 = vtanh.pop %v3077
    %v3085 = vmul.f32 %v3083, %v2995
    %3087 = vrot.lane.b32.xlu0 %v3084, 32
    %v3088 = vpop.permute.xlu0 %3087
    %v3090 = vmul.f32 %v3083, %v3088
    %3092 = vrot.lane.b32.xlu0 %v3090, 32
    %v3093 = vpop.permute.xlu0 %3092
    %v3095 = vadd.f32 %v3085, %v3093
    %v3096 = vtanh.pop %v3095
    %3098 = vrot.lane.b32.xlu0 %v3096, 32
    %v3099 = vpop.permute.xlu0 %3098
    %v3101 = vmul.f32 %v3083, %v3099
    %3103 = vrot.lane.b32.xlu0 %v3101, 64
    %v3104 = vpop.permute.xlu0 %3103
    %v3105 = vsel %vm696, %v3104, 0
    %3107 = vmatprep.subr.mxu0 0.0
    %3108 = vmatpush1.msra.mxu0 0.0
    %3109 = vmatprep.subr.mxu0 0.0
    %3110 = vmatpush1.msra.mxu0 0.0
    %3111 = vmatprep.subr.mxu0 0.0
    %3112 = vmatpush1.msra.mxu0 0.0
    %3113 = vmatprep.subr.mxu0 0.0
    %3114 = vmatpush1.msra.mxu0 0.0
    %3115 = vmatprep.subr.mxu0 0.0
    %3116 = vmatpush1.msra.mxu0 0.0
    %3117 = vmatprep.subr.mxu0 0.0
    %3118 = vmatpush1.msra.mxu0 0.0
    %3119 = vmatprep.subr.mxu0 0.0
    %3120 = vmatpush1.msra.mxu0 0.0
    %3121 = vmatprep.subr.mxu0 0.0
    %3122 = vmatpush1.msra.mxu0 0.0
    %3123 = vmatprep.subr.mxu0 0.0
    %3124 = vmatpush1.msra.mxu0 0.0
    %3125 = vmatprep.subr.mxu0 0.0
    %3126 = vmatpush1.msra.mxu0 0.0
    %3127 = vmatprep.subr.mxu0 0.0
    %3128 = vmatpush1.msra.mxu0 0.0
    %3129 = vmatprep.subr.mxu0 0.0
    %3130 = vmatpush1.msra.mxu0 0.0
    %3131 = vmatprep.subr.mxu0 0.0
    %3132 = vmatpush1.msra.mxu0 %v2570
    %3133 = vmatprep.subr.mxu0 0.0
    %3134 = vmatpush1.msra.mxu0 %v2569
    %3135 = vmatprep.subr.mxu0 0.0
    %3136 = vmatpush1.msra.mxu0 %v2568
    %3137 = vmatprep.subr.mxu0 0.0
    %3138 = vmatpush1.msra.mxu0 %v2567
    %3139 = vmatprep.subr.mxu0 0.0
    %3140 = vmatpush2.msra.mxu0 0.0
    %3141 = vmatprep.subr.mxu0 0.0
    %3142 = vmatpush2.msra.mxu0 0.0
    %3143 = vmatprep.subr.mxu0 0.0
    %3144 = vmatpush2.msra.mxu0 0.0
    %3145 = vmatprep.subr.mxu0 0.0
    %3146 = vmatpush2.msra.mxu0 0.0
    %3147 = vmatprep.subr.mxu0 0.0
    %3148 = vmatpush2.msra.mxu0 0.0
    %3149 = vmatprep.subr.mxu0 0.0
    %3150 = vmatpush2.msra.mxu0 0.0
    %3151 = vmatprep.subr.mxu0 0.0
    %3152 = vmatpush2.msra.mxu0 0.0
    %3153 = vmatprep.subr.mxu0 0.0
    %3154 = vmatpush2.msra.mxu0 0.0
    %3155 = vmatprep.subr.mxu0 0.0
    %3156 = vmatpush2.msra.mxu0 0.0
    %3157 = vmatprep.subr.mxu0 0.0
    %3158 = vmatpush2.msra.mxu0 0.0
    %3159 = vmatprep.subr.mxu0 0.0
    %3160 = vmatpush2.msra.mxu0 0.0
    %3161 = vmatprep.subr.mxu0 0.0
    %3162 = vmatpush2.msra.mxu0 0.0
    %3163 = vmatprep.subr.mxu0 0.0
    %3164 = vmatpush2.msra.mxu0 0.0
    %3165 = vmatprep.subr.mxu0 0.0
    %3166 = vmatpush2.msra.mxu0 0.0
    %3167 = vmatprep.subr.mxu0 0.0
    %3168 = vmatpush2.msra.mxu0 0.0
    %3169 = vmatprep.subr.mxu0 0.0
    %3170 = vmatpush2.msra.mxu0 0.0
    %3171 = vmatprep.mubr.f32.mxu0 0.0
    %3172 = vmatmul.mubr.f32.gmra.mxu0 %v3105
    %v3173 = vpop.f32.mrf.mxu0
    %v3174 = vadd.f32 0.0, %v3173
    %v3175 = vpop.f32.mrf.mxu0
    %3176 = vdwg.mxu0
    %v3177 = vadd.f32 %v2689, %v3174
    %v3178 = vxor.u32 %v3177, 2147483648
    %v3179 = vmul.f32 %v3178, 1.442695
    %v3180 = vpow.pop %v3179
    %v3181 = vadd.f32 %v3180, 1.0
    %v3182 = vrcp.pop %v3181
    %v3183 = vmul.f32 1.0, %v3182
    %v3184 = vtanh.pop %v3177
    %v3185 = vmul.f32 %v3183, %v3095
    %3187 = vrot.lane.b32.xlu0 %v3184, 32
    %v3188 = vpop.permute.xlu0 %3187
    %v3190 = vmul.f32 %v3183, %v3188
    %3192 = vrot.lane.b32.xlu0 %v3190, 32
    %v3193 = vpop.permute.xlu0 %3192
    %v3195 = vadd.f32 %v3185, %v3193
    %v3196 = vtanh.pop %v3195
    %3198 = vrot.lane.b32.xlu0 %v3196, 32
    %v3199 = vpop.permute.xlu0 %3198
    %v3201 = vmul.f32 %v3183, %v3199
    %3203 = vrot.lane.b32.xlu0 %v3201, 64
    %v3204 = vpop.permute.xlu0 %3203
    %v3205 = vsel %vm696, %v3204, 0
    %3207 = vmatprep.subr.mxu0 0.0
    %3208 = vmatpush1.msra.mxu0 0.0
    %3209 = vmatprep.subr.mxu0 0.0
    %3210 = vmatpush1.msra.mxu0 0.0
    %3211 = vmatprep.subr.mxu0 0.0
    %3212 = vmatpush1.msra.mxu0 0.0
    %3213 = vmatprep.subr.mxu0 0.0
    %3214 = vmatpush1.msra.mxu0 0.0
    %3215 = vmatprep.subr.mxu0 0.0
    %3216 = vmatpush1.msra.mxu0 0.0
    %3217 = vmatprep.subr.mxu0 0.0
    %3218 = vmatpush1.msra.mxu0 0.0
    %3219 = vmatprep.subr.mxu0 0.0
    %3220 = vmatpush1.msra.mxu0 0.0
    %3221 = vmatprep.subr.mxu0 0.0
    %3222 = vmatpush1.msra.mxu0 0.0
    %3223 = vmatprep.subr.mxu0 0.0
    %3224 = vmatpush1.msra.mxu0 0.0
    %3225 = vmatprep.subr.mxu0 0.0
    %3226 = vmatpush1.msra.mxu0 0.0
    %3227 = vmatprep.subr.mxu0 0.0
    %3228 = vmatpush1.msra.mxu0 0.0
    %3229 = vmatprep.subr.mxu0 0.0
    %3230 = vmatpush1.msra.mxu0 0.0
    %3231 = vmatprep.subr.mxu0 0.0
    %3232 = vmatpush1.msra.mxu0 %v2570
    %3233 = vmatprep.subr.mxu0 0.0
    %3234 = vmatpush1.msra.mxu0 %v2569
    %3235 = vmatprep.subr.mxu0 0.0
    %3236 = vmatpush1.msra.mxu0 %v2568
    %3237 = vmatprep.subr.mxu0 0.0
    %3238 = vmatpush1.msra.mxu0 %v2567
    %3239 = vmatprep.subr.mxu0 0.0
    %3240 = vmatpush2.msra.mxu0 0.0
    %3241 = vmatprep.subr.mxu0 0.0
    %3242 = vmatpush2.msra.mxu0 0.0
    %3243 = vmatprep.subr.mxu0 0.0
    %3244 = vmatpush2.msra.mxu0 0.0
    %3245 = vmatprep.subr.mxu0 0.0
    %3246 = vmatpush2.msra.mxu0 0.0
    %3247 = vmatprep.subr.mxu0 0.0
    %3248 = vmatpush2.msra.mxu0 0.0
    %3249 = vmatprep.subr.mxu0 0.0
    %3250 = vmatpush2.msra.mxu0 0.0
    %3251 = vmatprep.subr.mxu0 0.0
    %3252 = vmatpush2.msra.mxu0 0.0
    %3253 = vmatprep.subr.mxu0 0.0
    %3254 = vmatpush2.msra.mxu0 0.0
    %3255 = vmatprep.subr.mxu0 0.0
    %3256 = vmatpush2.msra.mxu0 0.0
    %3257 = vmatprep.subr.mxu0 0.0
    %3258 = vmatpush2.msra.mxu0 0.0
    %3259 = vmatprep.subr.mxu0 0.0
    %3260 = vmatpush2.msra.mxu0 0.0
    %3261 = vmatprep.subr.mxu0 0.0
    %3262 = vmatpush2.msra.mxu0 0.0
    %3263 = vmatprep.subr.mxu0 0.0
    %3264 = vmatpush2.msra.mxu0 0.0
    %3265 = vmatprep.subr.mxu0 0.0
    %3266 = vmatpush2.msra.mxu0 0.0
    %3267 = vmatprep.subr.mxu0 0.0
    %3268 = vmatpush2.msra.mxu0 0.0
    %3269 = vmatprep.subr.mxu0 0.0
    %3270 = vmatpush2.msra.mxu0 0.0
    %3271 = vmatprep.mubr.f32.mxu0 0.0
    %3272 = vmatmul.mubr.f32.gmra.mxu0 %v3205
    %v3273 = vpop.f32.mrf.mxu0
    %v3274 = vadd.f32 0.0, %v3273
    %v3275 = vpop.f32.mrf.mxu0
    %3276 = vdwg.mxu0
    %v3277 = vadd.f32 %v2694, %v3274
    %v3278 = vxor.u32 %v3277, 2147483648
    %v3279 = vmul.f32 %v3278, 1.442695
    %v3280 = vpow.pop %v3279
    %v3281 = vadd.f32 %v3280, 1.0
    %v3282 = vrcp.pop %v3281
    %v3283 = vmul.f32 1.0, %v3282
    %v3284 = vtanh.pop %v3277
    %v3285 = vmul.f32 %v3283, %v3195
    %3287 = vrot.lane.b32.xlu0 %v3284, 32
    %v3288 = vpop.permute.xlu0 %3287
    %v3290 = vmul.f32 %v3283, %v3288
    %3292 = vrot.lane.b32.xlu0 %v3290, 32
    %v3293 = vpop.permute.xlu0 %3292
    %v3295 = vadd.f32 %v3285, %v3293
    %v3296 = vtanh.pop %v3295
    %3298 = vrot.lane.b32.xlu0 %v3296, 32
    %v3299 = vpop.permute.xlu0 %3298
    %v3301 = vmul.f32 %v3283, %v3299
    %3303 = vrot.lane.b32.xlu0 %v3301, 64
    %v3304 = vpop.permute.xlu0 %3303
    %v3305 = vsel %vm696, %v3304, 0
    %3307 = vmatprep.subr.mxu0 0.0
    %3308 = vmatpush1.msra.mxu0 0.0
    %3309 = vmatprep.subr.mxu0 0.0
    %3310 = vmatpush1.msra.mxu0 0.0
    %3311 = vmatprep.subr.mxu0 0.0
    %3312 = vmatpush1.msra.mxu0 0.0
    %3313 = vmatprep.subr.mxu0 0.0
    %3314 = vmatpush1.msra.mxu0 0.0
    %3315 = vmatprep.subr.mxu0 0.0
    %3316 = vmatpush1.msra.mxu0 0.0
    %3317 = vmatprep.subr.mxu0 0.0
    %3318 = vmatpush1.msra.mxu0 0.0
    %3319 = vmatprep.subr.mxu0 0.0
    %3320 = vmatpush1.msra.mxu0 0.0
    %3321 = vmatprep.subr.mxu0 0.0
    %3322 = vmatpush1.msra.mxu0 0.0
    %3323 = vmatprep.subr.mxu0 0.0
    %3324 = vmatpush1.msra.mxu0 0.0
    %3325 = vmatprep.subr.mxu0 0.0
    %3326 = vmatpush1.msra.mxu0 0.0
    %3327 = vmatprep.subr.mxu0 0.0
    %3328 = vmatpush1.msra.mxu0 0.0
    %3329 = vmatprep.subr.mxu0 0.0
    %3330 = vmatpush1.msra.mxu0 0.0
    %3331 = vmatprep.subr.mxu0 0.0
    %3332 = vmatpush1.msra.mxu0 %v2570
    %3333 = vmatprep.subr.mxu0 0.0
    %3334 = vmatpush1.msra.mxu0 %v2569
    %3335 = vmatprep.subr.mxu0 0.0
    %3336 = vmatpush1.msra.mxu0 %v2568
    %3337 = vmatprep.subr.mxu0 0.0
    %3338 = vmatpush1.msra.mxu0 %v2567
    %3339 = vmatprep.subr.mxu0 0.0
    %3340 = vmatpush2.msra.mxu0 0.0
    %3341 = vmatprep.subr.mxu0 0.0
    %3342 = vmatpush2.msra.mxu0 0.0
    %3343 = vmatprep.subr.mxu0 0.0
    %3344 = vmatpush2.msra.mxu0 0.0
    %3345 = vmatprep.subr.mxu0 0.0
    %3346 = vmatpush2.msra.mxu0 0.0
    %3347 = vmatprep.subr.mxu0 0.0
    %3348 = vmatpush2.msra.mxu0 0.0
    %3349 = vmatprep.subr.mxu0 0.0
    %3350 = vmatpush2.msra.mxu0 0.0
    %3351 = vmatprep.subr.mxu0 0.0
    %3352 = vmatpush2.msra.mxu0 0.0
    %3353 = vmatprep.subr.mxu0 0.0
    %3354 = vmatpush2.msra.mxu0 0.0
    %3355 = vmatprep.subr.mxu0 0.0
    %3356 = vmatpush2.msra.mxu0 0.0
    %3357 = vmatprep.subr.mxu0 0.0
    %3358 = vmatpush2.msra.mxu0 0.0
    %3359 = vmatprep.subr.mxu0 0.0
    %3360 = vmatpush2.msra.mxu0 0.0
    %3361 = vmatprep.subr.mxu0 0.0
    %3362 = vmatpush2.msra.mxu0 0.0
    %3363 = vmatprep.subr.mxu0 0.0
    %3364 = vmatpush2.msra.mxu0 0.0
    %3365 = vmatprep.subr.mxu0 0.0
    %3366 = vmatpush2.msra.mxu0 0.0
    %3367 = vmatprep.subr.mxu0 0.0
    %3368 = vmatpush2.msra.mxu0 0.0
    %3369 = vmatprep.subr.mxu0 0.0
    %3370 = vmatpush2.msra.mxu0 0.0
    %3371 = vmatprep.mubr.f32.mxu0 0.0
    %3372 = vmatmul.mubr.f32.gmra.mxu0 %v3305
    %v3373 = vpop.f32.mrf.mxu0
    %v3374 = vadd.f32 0.0, %v3373
    %v3375 = vpop.f32.mrf.mxu0
    %3376 = vdwg.mxu0
    %v3377 = vadd.f32 %v2699, %v3374
    %v3378 = vxor.u32 %v3377, 2147483648
    %v3379 = vmul.f32 %v3378, 1.442695
    %v3380 = vpow.pop %v3379
    %v3381 = vadd.f32 %v3380, 1.0
    %v3382 = vrcp.pop %v3381
    %v3383 = vmul.f32 1.0, %v3382
    %v3384 = vtanh.pop %v3377
    %v3385 = vmul.f32 %v3383, %v3295
    %3387 = vrot.lane.b32.xlu0 %v3384, 32
    %v3388 = vpop.permute.xlu0 %3387
    %v3390 = vmul.f32 %v3383, %v3388
    %3392 = vrot.lane.b32.xlu0 %v3390, 32
    %v3393 = vpop.permute.xlu0 %3392
    %v3395 = vadd.f32 %v3385, %v3393
    %v3396 = vtanh.pop %v3395
    %3398 = vrot.lane.b32.xlu0 %v3396, 32
    %v3399 = vpop.permute.xlu0 %3398
    %v3401 = vmul.f32 %v3383, %v3399
    %3403 = vrot.lane.b32.xlu0 %v3401, 64
    %v3404 = vpop.permute.xlu0 %3403
    %v3405 = vsel %vm696, %v3404, 0
    %3407 = vmatprep.subr.mxu0 0.0
    %3408 = vmatpush1.msra.mxu0 0.0
    %3409 = vmatprep.subr.mxu0 0.0
    %3410 = vmatpush1.msra.mxu0 0.0
    %3411 = vmatprep.subr.mxu0 0.0
    %3412 = vmatpush1.msra.mxu0 0.0
    %3413 = vmatprep.subr.mxu0 0.0
    %3414 = vmatpush1.msra.mxu0 0.0
    %3415 = vmatprep.subr.mxu0 0.0
    %3416 = vmatpush1.msra.mxu0 0.0
    %3417 = vmatprep.subr.mxu0 0.0
    %3418 = vmatpush1.msra.mxu0 0.0
    %3419 = vmatprep.subr.mxu0 0.0
    %3420 = vmatpush1.msra.mxu0 0.0
    %3421 = vmatprep.subr.mxu0 0.0
    %3422 = vmatpush1.msra.mxu0 0.0
    %3423 = vmatprep.subr.mxu0 0.0
    %3424 = vmatpush1.msra.mxu0 0.0
    %3425 = vmatprep.subr.mxu0 0.0
    %3426 = vmatpush1.msra.mxu0 0.0
    %3427 = vmatprep.subr.mxu0 0.0
    %3428 = vmatpush1.msra.mxu0 0.0
    %3429 = vmatprep.subr.mxu0 0.0
    %3430 = vmatpush1.msra.mxu0 0.0
    %3431 = vmatprep.subr.mxu0 0.0
    %3432 = vmatpush1.msra.mxu0 %v2570
    %3433 = vmatprep.subr.mxu0 0.0
    %3434 = vmatpush1.msra.mxu0 %v2569
    %3435 = vmatprep.subr.mxu0 0.0
    %3436 = vmatpush1.msra.mxu0 %v2568
    %3437 = vmatprep.subr.mxu0 0.0
    %3438 = vmatpush1.msra.mxu0 %v2567
    %3439 = vmatprep.subr.mxu0 0.0
    %3440 = vmatpush2.msra.mxu0 0.0
    %3441 = vmatprep.subr.mxu0 0.0
    %3442 = vmatpush2.msra.mxu0 0.0
    %3443 = vmatprep.subr.mxu0 0.0
    %3444 = vmatpush2.msra.mxu0 0.0
    %3445 = vmatprep.subr.mxu0 0.0
    %3446 = vmatpush2.msra.mxu0 0.0
    %3447 = vmatprep.subr.mxu0 0.0
    %3448 = vmatpush2.msra.mxu0 0.0
    %3449 = vmatprep.subr.mxu0 0.0
    %3450 = vmatpush2.msra.mxu0 0.0
    %3451 = vmatprep.subr.mxu0 0.0
    %3452 = vmatpush2.msra.mxu0 0.0
    %3453 = vmatprep.subr.mxu0 0.0
    %3454 = vmatpush2.msra.mxu0 0.0
    %3455 = vmatprep.subr.mxu0 0.0
    %3456 = vmatpush2.msra.mxu0 0.0
    %3457 = vmatprep.subr.mxu0 0.0
    %3458 = vmatpush2.msra.mxu0 0.0
    %3459 = vmatprep.subr.mxu0 0.0
    %3460 = vmatpush2.msra.mxu0 0.0
    %3461 = vmatprep.subr.mxu0 0.0
    %3462 = vmatpush2.msra.mxu0 0.0
    %3463 = vmatprep.subr.mxu0 0.0
    %3464 = vmatpush2.msra.mxu0 0.0
    %3465 = vmatprep.subr.mxu0 0.0
    %3466 = vmatpush2.msra.mxu0 0.0
    %3467 = vmatprep.subr.mxu0 0.0
    %3468 = vmatpush2.msra.mxu0 0.0
    %3469 = vmatprep.subr.mxu0 0.0
    %3470 = vmatpush2.msra.mxu0 0.0
    %3471 = vmatprep.mubr.f32.mxu0 0.0
    %3472 = vmatmul.mubr.f32.gmra.mxu0 %v3405
    %v3473 = vpop.f32.mrf.mxu0
    %v3474 = vadd.f32 0.0, %v3473
    %v3475 = vpop.f32.mrf.mxu0
    %3476 = vdwg.mxu0
    %v3477 = vadd.f32 %v2704, %v3474
    %v3478 = vxor.u32 %v3477, 2147483648
    %v3479 = vmul.f32 %v3478, 1.442695
    %v3480 = vpow.pop %v3479
    %v3481 = vadd.f32 %v3480, 1.0
    %v3482 = vrcp.pop %v3481
    %v3483 = vmul.f32 1.0, %v3482
    %v3484 = vtanh.pop %v3477
    %v3485 = vmul.f32 %v3483, %v3395
    %3487 = vrot.lane.b32.xlu0 %v3484, 32
    %v3488 = vpop.permute.xlu0 %3487
    %v3490 = vmul.f32 %v3483, %v3488
    %3492 = vrot.lane.b32.xlu0 %v3490, 32
    %v3493 = vpop.permute.xlu0 %3492
    %v3495 = vadd.f32 %v3485, %v3493
    %v3496 = vtanh.pop %v3495
    %3498 = vrot.lane.b32.xlu0 %v3496, 32
    %v3499 = vpop.permute.xlu0 %3498
    %v3501 = vmul.f32 %v3483, %v3499
    %v3502 = vld [vmem:[%s22] sm:$0xff]
    %v3503 = vld [vmem:[%s22 + $0x8] sm:$0xff]
    %v3504 = vld [vmem:[%s22 + $0x10] sm:$0xff]
    %v3505 = vld [vmem:[%s22 + $0x18] sm:$0xff]
    %v3506 = vld [vmem:[#allocation21] sm:$0xff]
    %v3507 = vld [vmem:[#allocation21 + $0x8] sm:$0xff]
    %v3508 = vld [vmem:[#allocation21 + $0x10] sm:$0xff]
    %v3509 = vld [vmem:[#allocation21 + $0x18] sm:$0xff]
    %v3510 = vld [vmem:[%s24] sm:$0x1]
    %v3512 = vlaneseq
    %v3513 = vshrl.u32 %v3512, 7
    %v3514 = vsub.s32 0, %v3513
    %v3515 = vrot.slane %v3510, %v3514
    %3518 = vrot.lane.b32.xlu0 %v3501, 64
    %v3519 = vpop.permute.xlu0 %3518
    %v3520 = vsel %vm696, %v3519, 0
    %3522 = vmatprep.subr.mxu0 0.0
    %3523 = vmatpush1.msra.mxu0 0.0
    %3524 = vmatprep.subr.mxu0 0.0
    %3525 = vmatpush1.msra.mxu0 0.0
    %3526 = vmatprep.subr.mxu0 0.0
    %3527 = vmatpush1.msra.mxu0 0.0
    %3528 = vmatprep.subr.mxu0 0.0
    %3529 = vmatpush1.msra.mxu0 0.0
    %3530 = vmatprep.subr.mxu0 0.0
    %3531 = vmatpush1.msra.mxu0 0.0
    %3532 = vmatprep.subr.mxu0 0.0
    %3533 = vmatpush1.msra.mxu0 0.0
    %3534 = vmatprep.subr.mxu0 0.0
    %3535 = vmatpush1.msra.mxu0 0.0
    %3536 = vmatprep.subr.mxu0 0.0
    %3537 = vmatpush1.msra.mxu0 0.0
    %3538 = vmatprep.subr.mxu0 0.0
    %3539 = vmatpush1.msra.mxu0 0.0
    %3540 = vmatprep.subr.mxu0 0.0
    %3541 = vmatpush1.msra.mxu0 0.0
    %3542 = vmatprep.subr.mxu0 0.0
    %3543 = vmatpush1.msra.mxu0 0.0
    %3544 = vmatprep.subr.mxu0 0.0
    %3545 = vmatpush1.msra.mxu0 0.0
    %3546 = vmatprep.subr.mxu0 0.0
    %3547 = vmatpush1.msra.mxu0 %v3505
    %3548 = vmatprep.subr.mxu0 0.0
    %3549 = vmatpush1.msra.mxu0 %v3504
    %3550 = vmatprep.subr.mxu0 0.0
    %3551 = vmatpush1.msra.mxu0 %v3503
    %3552 = vmatprep.subr.mxu0 0.0
    %3553 = vmatpush1.msra.mxu0 %v3502
    %3554 = vmatprep.subr.mxu0 0.0
    %3555 = vmatpush2.msra.mxu0 0.0
    %3556 = vmatprep.subr.mxu0 0.0
    %3557 = vmatpush2.msra.mxu0 0.0
    %3558 = vmatprep.subr.mxu0 0.0
    %3559 = vmatpush2.msra.mxu0 0.0
    %3560 = vmatprep.subr.mxu0 0.0
    %3561 = vmatpush2.msra.mxu0 0.0
    %3562 = vmatprep.subr.mxu0 0.0
    %3563 = vmatpush2.msra.mxu0 0.0
    %3564 = vmatprep.subr.mxu0 0.0
    %3565 = vmatpush2.msra.mxu0 0.0
    %3566 = vmatprep.subr.mxu0 0.0
    %3567 = vmatpush2.msra.mxu0 0.0
    %3568 = vmatprep.subr.mxu0 0.0
    %3569 = vmatpush2.msra.mxu0 0.0
    %3570 = vmatprep.subr.mxu0 0.0
    %3571 = vmatpush2.msra.mxu0 0.0
    %3572 = vmatprep.subr.mxu0 0.0
    %3573 = vmatpush2.msra.mxu0 0.0
    %3574 = vmatprep.subr.mxu0 0.0
    %3575 = vmatpush2.msra.mxu0 0.0
    %3576 = vmatprep.subr.mxu0 0.0
    %3577 = vmatpush2.msra.mxu0 0.0
    %3578 = vmatprep.subr.mxu0 0.0
    %3579 = vmatpush2.msra.mxu0 0.0
    %3580 = vmatprep.subr.mxu0 0.0
    %3581 = vmatpush2.msra.mxu0 0.0
    %3582 = vmatprep.subr.mxu0 0.0
    %3583 = vmatpush2.msra.mxu0 0.0
    %3584 = vmatprep.subr.mxu0 0.0
    %3585 = vmatpush2.msra.mxu0 0.0
    %3586 = vmatprep.mubr.f32.mxu0 0.0
    %3587 = vmatmul.mubr.f32.gmra.mxu0 %v2805
    %v3588 = vpop.f32.mrf.mxu0
    %v3589 = vadd.f32 %v3515, %v3588
    %v3590 = vpop.f32.mrf.mxu0
    %3591 = vmatprep.mubr.f32.mxu0 0.0
    %3592 = vmatmul.mubr.f32.gmra.mxu0 %v2905
    %v3593 = vpop.f32.mrf.mxu0
    %v3594 = vadd.f32 %v3515, %v3593
    %v3595 = vpop.f32.mrf.mxu0
    %3596 = vmatprep.mubr.f32.mxu0 0.0
    %3597 = vmatmul.mubr.f32.gmra.mxu0 %v3005
    %v3598 = vpop.f32.mrf.mxu0
    %v3599 = vadd.f32 %v3515, %v3598
    %v3600 = vpop.f32.mrf.mxu0
    %3601 = vmatprep.mubr.f32.mxu0 0.0
    %3602 = vmatmul.mubr.f32.gmra.mxu0 %v3105
    %v3603 = vpop.f32.mrf.mxu0
    %v3604 = vadd.f32 %v3515, %v3603
    %v3605 = vpop.f32.mrf.mxu0
    %3606 = vmatprep.mubr.f32.mxu0 0.0
    %3607 = vmatmul.mubr.f32.gmra.mxu0 %v3205
    %v3608 = vpop.f32.mrf.mxu0
    %v3609 = vadd.f32 %v3515, %v3608
    %v3610 = vpop.f32.mrf.mxu0
    %3611 = vmatprep.mubr.f32.mxu0 0.0
    %3612 = vmatmul.mubr.f32.gmra.mxu0 %v3305
    %v3613 = vpop.f32.mrf.mxu0
    %v3614 = vadd.f32 %v3515, %v3613
    %v3615 = vpop.f32.mrf.mxu0
    %3616 = vmatprep.mubr.f32.mxu0 0.0
    %3617 = vmatmul.mubr.f32.gmra.mxu0 %v3405
    %v3618 = vpop.f32.mrf.mxu0
    %v3619 = vadd.f32 %v3515, %v3618
    %v3620 = vpop.f32.mrf.mxu0
    %3621 = vmatprep.mubr.f32.mxu0 0.0
    %3622 = vmatmul.mubr.f32.gmra.mxu0 %v3520
    %v3623 = vpop.f32.mrf.mxu0
    %v3624 = vadd.f32 %v3515, %v3623
    %v3625 = vpop.f32.mrf.mxu0
    %3626 = vdwg.mxu0
    %3627 = vmatprep.subr.mxu0 0.0
    %3628 = vmatpush1.msra.mxu0 0.0
    %3629 = vmatprep.subr.mxu0 0.0
    %3630 = vmatpush1.msra.mxu0 0.0
    %3631 = vmatprep.subr.mxu0 0.0
    %3632 = vmatpush1.msra.mxu0 0.0
    %3633 = vmatprep.subr.mxu0 0.0
    %3634 = vmatpush1.msra.mxu0 0.0
    %3635 = vmatprep.subr.mxu0 0.0
    %3636 = vmatpush1.msra.mxu0 0.0
    %3637 = vmatprep.subr.mxu0 0.0
    %3638 = vmatpush1.msra.mxu0 0.0
    %3639 = vmatprep.subr.mxu0 0.0
    %3640 = vmatpush1.msra.mxu0 0.0
    %3641 = vmatprep.subr.mxu0 0.0
    %3642 = vmatpush1.msra.mxu0 0.0
    %3643 = vmatprep.subr.mxu0 0.0
    %3644 = vmatpush1.msra.mxu0 0.0
    %3645 = vmatprep.subr.mxu0 0.0
    %3646 = vmatpush1.msra.mxu0 0.0
    %3647 = vmatprep.subr.mxu0 0.0
    %3648 = vmatpush1.msra.mxu0 0.0
    %3649 = vmatprep.subr.mxu0 0.0
    %3650 = vmatpush1.msra.mxu0 0.0
    %3651 = vmatprep.subr.mxu0 0.0
    %3652 = vmatpush1.msra.mxu0 %v3509
    %3653 = vmatprep.subr.mxu0 0.0
    %3654 = vmatpush1.msra.mxu0 %v3508
    %3655 = vmatprep.subr.mxu0 0.0
    %3656 = vmatpush1.msra.mxu0 %v3507
    %3657 = vmatprep.subr.mxu0 0.0
    %3658 = vmatpush1.msra.mxu0 %v3506
    %3659 = vmatprep.subr.mxu0 0.0
    %3660 = vmatpush2.msra.mxu0 0.0
    %3661 = vmatprep.subr.mxu0 0.0
    %3662 = vmatpush2.msra.mxu0 0.0
    %3663 = vmatprep.subr.mxu0 0.0
    %3664 = vmatpush2.msra.mxu0 0.0
    %3665 = vmatprep.subr.mxu0 0.0
    %3666 = vmatpush2.msra.mxu0 0.0
    %3667 = vmatprep.subr.mxu0 0.0
    %3668 = vmatpush2.msra.mxu0 0.0
    %3669 = vmatprep.subr.mxu0 0.0
    %3670 = vmatpush2.msra.mxu0 0.0
    %3671 = vmatprep.subr.mxu0 0.0
    %3672 = vmatpush2.msra.mxu0 0.0
    %3673 = vmatprep.subr.mxu0 0.0
    %3674 = vmatpush2.msra.mxu0 0.0
    %3675 = vmatprep.subr.mxu0 0.0
    %3676 = vmatpush2.msra.mxu0 0.0
    %3677 = vmatprep.subr.mxu0 0.0
    %3678 = vmatpush2.msra.mxu0 0.0
    %3679 = vmatprep.subr.mxu0 0.0
    %3680 = vmatpush2.msra.mxu0 0.0
    %3681 = vmatprep.subr.mxu0 0.0
    %3682 = vmatpush2.msra.mxu0 0.0
    %3683 = vmatprep.subr.mxu0 0.0
    %3684 = vmatpush2.msra.mxu0 0.0
    %3685 = vmatprep.subr.mxu0 0.0
    %3686 = vmatpush2.msra.mxu0 0.0
    %3687 = vmatprep.subr.mxu0 0.0
    %3688 = vmatpush2.msra.mxu0 0.0
    %3689 = vmatprep.subr.mxu0 0.0
    %3690 = vmatpush2.msra.mxu0 0.0
    %3691 = vmatprep.mubr.f32.mxu0 0.0
    %3692 = vmatmul.mubr.f32.gmra.mxu0 %v827
    %v3693 = vpop.f32.mrf.mxu0
    %v3694 = vadd.f32 0.0, %v3693
    %v3695 = vpop.f32.mrf.mxu0
    %3696 = vdwg.mxu0
    %v3697 = vadd.f32 %v3589, %v3694
    %v3698 = vxor.u32 %v3697, 2147483648
    %v3699 = vmul.f32 %v3698, 1.442695
    %v3700 = vpow.pop %v3699
    %v3701 = vadd.f32 %v3700, 1.0
    %v3702 = vrcp.pop %v3701
    %v3703 = vmul.f32 1.0, %v3702
    %v3704 = vtanh.pop %v3697
    %v3705 = vmul.f32 %v3703, 0.0
    %3707 = vrot.lane.b32.xlu0 %v3704, 32
    %v3708 = vpop.permute.xlu0 %3707
    %v3710 = vmul.f32 %v3703, %v3708
    %3712 = vrot.lane.b32.xlu0 %v3710, 32
    %v3713 = vpop.permute.xlu0 %3712
    %v3715 = vadd.f32 %v3705, %v3713
    %v3716 = vtanh.pop %v3715
    %3718 = vrot.lane.b32.xlu0 %v3716, 32
    %v3719 = vpop.permute.xlu0 %3718
    %v3721 = vmul.f32 %v3703, %v3719
    %3723 = vrot.lane.b32.xlu0 %v3721, 64
    %v3724 = vpop.permute.xlu0 %3723
    %v3725 = vsel %vm696, %v3724, 0
    %3727 = vmatprep.subr.mxu0 0.0
    %3728 = vmatpush1.msra.mxu0 0.0
    %3729 = vmatprep.subr.mxu0 0.0
    %3730 = vmatpush1.msra.mxu0 0.0
    %3731 = vmatprep.subr.mxu0 0.0
    %3732 = vmatpush1.msra.mxu0 0.0
    %3733 = vmatprep.subr.mxu0 0.0
    %3734 = vmatpush1.msra.mxu0 0.0
    %3735 = vmatprep.subr.mxu0 0.0
    %3736 = vmatpush1.msra.mxu0 0.0
    %3737 = vmatprep.subr.mxu0 0.0
    %3738 = vmatpush1.msra.mxu0 0.0
    %3739 = vmatprep.subr.mxu0 0.0
    %3740 = vmatpush1.msra.mxu0 0.0
    %3741 = vmatprep.subr.mxu0 0.0
    %3742 = vmatpush1.msra.mxu0 0.0
    %3743 = vmatprep.subr.mxu0 0.0
    %3744 = vmatpush1.msra.mxu0 0.0
    %3745 = vmatprep.subr.mxu0 0.0
    %3746 = vmatpush1.msra.mxu0 0.0
    %3747 = vmatprep.subr.mxu0 0.0
    %3748 = vmatpush1.msra.mxu0 0.0
    %3749 = vmatprep.subr.mxu0 0.0
    %3750 = vmatpush1.msra.mxu0 0.0
    %3751 = vmatprep.subr.mxu0 0.0
    %3752 = vmatpush1.msra.mxu0 %v3509
    %3753 = vmatprep.subr.mxu0 0.0
    %3754 = vmatpush1.msra.mxu0 %v3508
    %3755 = vmatprep.subr.mxu0 0.0
    %3756 = vmatpush1.msra.mxu0 %v3507
    %3757 = vmatprep.subr.mxu0 0.0
    %3758 = vmatpush1.msra.mxu0 %v3506
    %3759 = vmatprep.subr.mxu0 0.0
    %3760 = vmatpush2.msra.mxu0 0.0
    %3761 = vmatprep.subr.mxu0 0.0
    %3762 = vmatpush2.msra.mxu0 0.0
    %3763 = vmatprep.subr.mxu0 0.0
    %3764 = vmatpush2.msra.mxu0 0.0
    %3765 = vmatprep.subr.mxu0 0.0
    %3766 = vmatpush2.msra.mxu0 0.0
    %3767 = vmatprep.subr.mxu0 0.0
    %3768 = vmatpush2.msra.mxu0 0.0
    %3769 = vmatprep.subr.mxu0 0.0
    %3770 = vmatpush2.msra.mxu0 0.0
    %3771 = vmatprep.subr.mxu0 0.0
    %3772 = vmatpush2.msra.mxu0 0.0
    %3773 = vmatprep.subr.mxu0 0.0
    %3774 = vmatpush2.msra.mxu0 0.0
    %3775 = vmatprep.subr.mxu0 0.0
    %3776 = vmatpush2.msra.mxu0 0.0
    %3777 = vmatprep.subr.mxu0 0.0
    %3778 = vmatpush2.msra.mxu0 0.0
    %3779 = vmatprep.subr.mxu0 0.0
    %3780 = vmatpush2.msra.mxu0 0.0
    %3781 = vmatprep.subr.mxu0 0.0
    %3782 = vmatpush2.msra.mxu0 0.0
    %3783 = vmatprep.subr.mxu0 0.0
    %3784 = vmatpush2.msra.mxu0 0.0
    %3785 = vmatprep.subr.mxu0 0.0
    %3786 = vmatpush2.msra.mxu0 0.0
    %3787 = vmatprep.subr.mxu0 0.0
    %3788 = vmatpush2.msra.mxu0 0.0
    %3789 = vmatprep.subr.mxu0 0.0
    %3790 = vmatpush2.msra.mxu0 0.0
    %3791 = vmatprep.mubr.f32.mxu0 0.0
    %3792 = vmatmul.mubr.f32.gmra.mxu0 %v3725
    %v3793 = vpop.f32.mrf.mxu0
    %v3794 = vadd.f32 0.0, %v3793
    %v3795 = vpop.f32.mrf.mxu0
    %3796 = vdwg.mxu0
    %v3797 = vadd.f32 %v3594, %v3794
    %v3798 = vxor.u32 %v3797, 2147483648
    %v3799 = vmul.f32 %v3798, 1.442695
    %v3800 = vpow.pop %v3799
    %v3801 = vadd.f32 %v3800, 1.0
    %v3802 = vrcp.pop %v3801
    %v3803 = vmul.f32 1.0, %v3802
    %v3804 = vtanh.pop %v3797
    %v3805 = vmul.f32 %v3803, %v3715
    %3807 = vrot.lane.b32.xlu0 %v3804, 32
    %v3808 = vpop.permute.xlu0 %3807
    %v3810 = vmul.f32 %v3803, %v3808
    %3812 = vrot.lane.b32.xlu0 %v3810, 32
    %v3813 = vpop.permute.xlu0 %3812
    %v3815 = vadd.f32 %v3805, %v3813
    %v3816 = vtanh.pop %v3815
    %3818 = vrot.lane.b32.xlu0 %v3816, 32
    %v3819 = vpop.permute.xlu0 %3818
    %v3821 = vmul.f32 %v3803, %v3819
    %3823 = vrot.lane.b32.xlu0 %v3821, 64
    %v3824 = vpop.permute.xlu0 %3823
    %v3825 = vsel %vm696, %v3824, 0
    %3827 = vmatprep.subr.mxu0 0.0
    %3828 = vmatpush1.msra.mxu0 0.0
    %3829 = vmatprep.subr.mxu0 0.0
    %3830 = vmatpush1.msra.mxu0 0.0
    %3831 = vmatprep.subr.mxu0 0.0
    %3832 = vmatpush1.msra.mxu0 0.0
    %3833 = vmatprep.subr.mxu0 0.0
    %3834 = vmatpush1.msra.mxu0 0.0
    %3835 = vmatprep.subr.mxu0 0.0
    %3836 = vmatpush1.msra.mxu0 0.0
    %3837 = vmatprep.subr.mxu0 0.0
    %3838 = vmatpush1.msra.mxu0 0.0
    %3839 = vmatprep.subr.mxu0 0.0
    %3840 = vmatpush1.msra.mxu0 0.0
    %3841 = vmatprep.subr.mxu0 0.0
    %3842 = vmatpush1.msra.mxu0 0.0
    %3843 = vmatprep.subr.mxu0 0.0
    %3844 = vmatpush1.msra.mxu0 0.0
    %3845 = vmatprep.subr.mxu0 0.0
    %3846 = vmatpush1.msra.mxu0 0.0
    %3847 = vmatprep.subr.mxu0 0.0
    %3848 = vmatpush1.msra.mxu0 0.0
    %3849 = vmatprep.subr.mxu0 0.0
    %3850 = vmatpush1.msra.mxu0 0.0
    %3851 = vmatprep.subr.mxu0 0.0
    %3852 = vmatpush1.msra.mxu0 %v3509
    %3853 = vmatprep.subr.mxu0 0.0
    %3854 = vmatpush1.msra.mxu0 %v3508
    %3855 = vmatprep.subr.mxu0 0.0
    %3856 = vmatpush1.msra.mxu0 %v3507
    %3857 = vmatprep.subr.mxu0 0.0
    %3858 = vmatpush1.msra.mxu0 %v3506
    %3859 = vmatprep.subr.mxu0 0.0
    %3860 = vmatpush2.msra.mxu0 0.0
    %3861 = vmatprep.subr.mxu0 0.0
    %3862 = vmatpush2.msra.mxu0 0.0
    %3863 = vmatprep.subr.mxu0 0.0
    %3864 = vmatpush2.msra.mxu0 0.0
    %3865 = vmatprep.subr.mxu0 0.0
    %3866 = vmatpush2.msra.mxu0 0.0
    %3867 = vmatprep.subr.mxu0 0.0
    %3868 = vmatpush2.msra.mxu0 0.0
    %3869 = vmatprep.subr.mxu0 0.0
    %3870 = vmatpush2.msra.mxu0 0.0
    %3871 = vmatprep.subr.mxu0 0.0
    %3872 = vmatpush2.msra.mxu0 0.0
    %3873 = vmatprep.subr.mxu0 0.0
    %3874 = vmatpush2.msra.mxu0 0.0
    %3875 = vmatprep.subr.mxu0 0.0
    %3876 = vmatpush2.msra.mxu0 0.0
    %3877 = vmatprep.subr.mxu0 0.0
    %3878 = vmatpush2.msra.mxu0 0.0
    %3879 = vmatprep.subr.mxu0 0.0
    %3880 = vmatpush2.msra.mxu0 0.0
    %3881 = vmatprep.subr.mxu0 0.0
    %3882 = vmatpush2.msra.mxu0 0.0
    %3883 = vmatprep.subr.mxu0 0.0
    %3884 = vmatpush2.msra.mxu0 0.0
    %3885 = vmatprep.subr.mxu0 0.0
    %3886 = vmatpush2.msra.mxu0 0.0
    %3887 = vmatprep.subr.mxu0 0.0
    %3888 = vmatpush2.msra.mxu0 0.0
    %3889 = vmatprep.subr.mxu0 0.0
    %3890 = vmatpush2.msra.mxu0 0.0
    %3891 = vmatprep.mubr.f32.mxu0 0.0
    %3892 = vmatmul.mubr.f32.gmra.mxu0 %v3825
    %v3893 = vpop.f32.mrf.mxu0
    %v3894 = vadd.f32 0.0, %v3893
    %v3895 = vpop.f32.mrf.mxu0
    %3896 = vdwg.mxu0
    %v3897 = vadd.f32 %v3599, %v3894
    %v3898 = vxor.u32 %v3897, 2147483648
    %v3899 = vmul.f32 %v3898, 1.442695
    %v3900 = vpow.pop %v3899
    %v3901 = vadd.f32 %v3900, 1.0
    %v3902 = vrcp.pop %v3901
    %v3903 = vmul.f32 1.0, %v3902
    %v3904 = vtanh.pop %v3897
    %v3905 = vmul.f32 %v3903, %v3815
    %3907 = vrot.lane.b32.xlu0 %v3904, 32
    %v3908 = vpop.permute.xlu0 %3907
    %v3910 = vmul.f32 %v3903, %v3908
    %3912 = vrot.lane.b32.xlu0 %v3910, 32
    %v3913 = vpop.permute.xlu0 %3912
    %v3915 = vadd.f32 %v3905, %v3913
    %v3916 = vtanh.pop %v3915
    %3918 = vrot.lane.b32.xlu0 %v3916, 32
    %v3919 = vpop.permute.xlu0 %3918
    %v3921 = vmul.f32 %v3903, %v3919
    %3923 = vrot.lane.b32.xlu0 %v3921, 64
    %v3924 = vpop.permute.xlu0 %3923
    %v3925 = vsel %vm696, %v3924, 0
    %3927 = vmatprep.subr.mxu0 0.0
    %3928 = vmatpush1.msra.mxu0 0.0
    %3929 = vmatprep.subr.mxu0 0.0
    %3930 = vmatpush1.msra.mxu0 0.0
    %3931 = vmatprep.subr.mxu0 0.0
    %3932 = vmatpush1.msra.mxu0 0.0
    %3933 = vmatprep.subr.mxu0 0.0
    %3934 = vmatpush1.msra.mxu0 0.0
    %3935 = vmatprep.subr.mxu0 0.0
    %3936 = vmatpush1.msra.mxu0 0.0
    %3937 = vmatprep.subr.mxu0 0.0
    %3938 = vmatpush1.msra.mxu0 0.0
    %3939 = vmatprep.subr.mxu0 0.0
    %3940 = vmatpush1.msra.mxu0 0.0
    %3941 = vmatprep.subr.mxu0 0.0
    %3942 = vmatpush1.msra.mxu0 0.0
    %3943 = vmatprep.subr.mxu0 0.0
    %3944 = vmatpush1.msra.mxu0 0.0
    %3945 = vmatprep.subr.mxu0 0.0
    %3946 = vmatpush1.msra.mxu0 0.0
    %3947 = vmatprep.subr.mxu0 0.0
    %3948 = vmatpush1.msra.mxu0 0.0
    %3949 = vmatprep.subr.mxu0 0.0
    %3950 = vmatpush1.msra.mxu0 0.0
    %3951 = vmatprep.subr.mxu0 0.0
    %3952 = vmatpush1.msra.mxu0 %v3509
    %3953 = vmatprep.subr.mxu0 0.0
    %3954 = vmatpush1.msra.mxu0 %v3508
    %3955 = vmatprep.subr.mxu0 0.0
    %3956 = vmatpush1.msra.mxu0 %v3507
    %3957 = vmatprep.subr.mxu0 0.0
    %3958 = vmatpush1.msra.mxu0 %v3506
    %3959 = vmatprep.subr.mxu0 0.0
    %3960 = vmatpush2.msra.mxu0 0.0
    %3961 = vmatprep.subr.mxu0 0.0
    %3962 = vmatpush2.msra.mxu0 0.0
    %3963 = vmatprep.subr.mxu0 0.0
    %3964 = vmatpush2.msra.mxu0 0.0
    %3965 = vmatprep.subr.mxu0 0.0
    %3966 = vmatpush2.msra.mxu0 0.0
    %3967 = vmatprep.subr.mxu0 0.0
    %3968 = vmatpush2.msra.mxu0 0.0
    %3969 = vmatprep.subr.mxu0 0.0
    %3970 = vmatpush2.msra.mxu0 0.0
    %3971 = vmatprep.subr.mxu0 0.0
    %3972 = vmatpush2.msra.mxu0 0.0
    %3973 = vmatprep.subr.mxu0 0.0
    %3974 = vmatpush2.msra.mxu0 0.0
    %3975 = vmatprep.subr.mxu0 0.0
    %3976 = vmatpush2.msra.mxu0 0.0
    %3977 = vmatprep.subr.mxu0 0.0
    %3978 = vmatpush2.msra.mxu0 0.0
    %3979 = vmatprep.subr.mxu0 0.0
    %3980 = vmatpush2.msra.mxu0 0.0
    %3981 = vmatprep.subr.mxu0 0.0
    %3982 = vmatpush2.msra.mxu0 0.0
    %3983 = vmatprep.subr.mxu0 0.0
    %3984 = vmatpush2.msra.mxu0 0.0
    %3985 = vmatprep.subr.mxu0 0.0
    %3986 = vmatpush2.msra.mxu0 0.0
    %3987 = vmatprep.subr.mxu0 0.0
    %3988 = vmatpush2.msra.mxu0 0.0
    %3989 = vmatprep.subr.mxu0 0.0
    %3990 = vmatpush2.msra.mxu0 0.0
    %3991 = vmatprep.mubr.f32.mxu0 0.0
    %3992 = vmatmul.mubr.f32.gmra.mxu0 %v3925
    %v3993 = vpop.f32.mrf.mxu0
    %v3994 = vadd.f32 0.0, %v3993
    %v3995 = vpop.f32.mrf.mxu0
    %3996 = vdwg.mxu0
    %v3997 = vadd.f32 %v3604, %v3994
    %v3998 = vxor.u32 %v3997, 2147483648
    %v3999 = vmul.f32 %v3998, 1.442695
    %v4000 = vpow.pop %v3999
    %v4001 = vadd.f32 %v4000, 1.0
    %v4002 = vrcp.pop %v4001
    %v4003 = vmul.f32 1.0, %v4002
    %v4004 = vtanh.pop %v3997
    %v4005 = vmul.f32 %v4003, %v3915
    %4007 = vrot.lane.b32.xlu0 %v4004, 32
    %v4008 = vpop.permute.xlu0 %4007
    %v4010 = vmul.f32 %v4003, %v4008
    %4012 = vrot.lane.b32.xlu0 %v4010, 32
    %v4013 = vpop.permute.xlu0 %4012
    %v4015 = vadd.f32 %v4005, %v4013
    %v4016 = vtanh.pop %v4015
    %4018 = vrot.lane.b32.xlu0 %v4016, 32
    %v4019 = vpop.permute.xlu0 %4018
    %v4021 = vmul.f32 %v4003, %v4019
    %4023 = vrot.lane.b32.xlu0 %v4021, 64
    %v4024 = vpop.permute.xlu0 %4023
    %v4025 = vsel %vm696, %v4024, 0
    %4027 = vmatprep.subr.mxu0 0.0
    %4028 = vmatpush1.msra.mxu0 0.0
    %4029 = vmatprep.subr.mxu0 0.0
    %4030 = vmatpush1.msra.mxu0 0.0
    %4031 = vmatprep.subr.mxu0 0.0
    %4032 = vmatpush1.msra.mxu0 0.0
    %4033 = vmatprep.subr.mxu0 0.0
    %4034 = vmatpush1.msra.mxu0 0.0
    %4035 = vmatprep.subr.mxu0 0.0
    %4036 = vmatpush1.msra.mxu0 0.0
    %4037 = vmatprep.subr.mxu0 0.0
    %4038 = vmatpush1.msra.mxu0 0.0
    %4039 = vmatprep.subr.mxu0 0.0
    %4040 = vmatpush1.msra.mxu0 0.0
    %4041 = vmatprep.subr.mxu0 0.0
    %4042 = vmatpush1.msra.mxu0 0.0
    %4043 = vmatprep.subr.mxu0 0.0
    %4044 = vmatpush1.msra.mxu0 0.0
    %4045 = vmatprep.subr.mxu0 0.0
    %4046 = vmatpush1.msra.mxu0 0.0
    %4047 = vmatprep.subr.mxu0 0.0
    %4048 = vmatpush1.msra.mxu0 0.0
    %4049 = vmatprep.subr.mxu0 0.0
    %4050 = vmatpush1.msra.mxu0 0.0
    %4051 = vmatprep.subr.mxu0 0.0
    %4052 = vmatpush1.msra.mxu0 %v3509
    %4053 = vmatprep.subr.mxu0 0.0
    %4054 = vmatpush1.msra.mxu0 %v3508
    %4055 = vmatprep.subr.mxu0 0.0
    %4056 = vmatpush1.msra.mxu0 %v3507
    %4057 = vmatprep.subr.mxu0 0.0
    %4058 = vmatpush1.msra.mxu0 %v3506
    %4059 = vmatprep.subr.mxu0 0.0
    %4060 = vmatpush2.msra.mxu0 0.0
    %4061 = vmatprep.subr.mxu0 0.0
    %4062 = vmatpush2.msra.mxu0 0.0
    %4063 = vmatprep.subr.mxu0 0.0
    %4064 = vmatpush2.msra.mxu0 0.0
    %4065 = vmatprep.subr.mxu0 0.0
    %4066 = vmatpush2.msra.mxu0 0.0
    %4067 = vmatprep.subr.mxu0 0.0
    %4068 = vmatpush2.msra.mxu0 0.0
    %4069 = vmatprep.subr.mxu0 0.0
    %4070 = vmatpush2.msra.mxu0 0.0
    %4071 = vmatprep.subr.mxu0 0.0
    %4072 = vmatpush2.msra.mxu0 0.0
    %4073 = vmatprep.subr.mxu0 0.0
    %4074 = vmatpush2.msra.mxu0 0.0
    %4075 = vmatprep.subr.mxu0 0.0
    %4076 = vmatpush2.msra.mxu0 0.0
    %4077 = vmatprep.subr.mxu0 0.0
    %4078 = vmatpush2.msra.mxu0 0.0
    %4079 = vmatprep.subr.mxu0 0.0
    %4080 = vmatpush2.msra.mxu0 0.0
    %4081 = vmatprep.subr.mxu0 0.0
    %4082 = vmatpush2.msra.mxu0 0.0
    %4083 = vmatprep.subr.mxu0 0.0
    %4084 = vmatpush2.msra.mxu0 0.0
    %4085 = vmatprep.subr.mxu0 0.0
    %4086 = vmatpush2.msra.mxu0 0.0
    %4087 = vmatprep.subr.mxu0 0.0
    %4088 = vmatpush2.msra.mxu0 0.0
    %4089 = vmatprep.subr.mxu0 0.0
    %4090 = vmatpush2.msra.mxu0 0.0
    %4091 = vmatprep.mubr.f32.mxu0 0.0
    %4092 = vmatmul.mubr.f32.gmra.mxu0 %v4025
    %v4093 = vpop.f32.mrf.mxu0
    %v4094 = vadd.f32 0.0, %v4093
    %v4095 = vpop.f32.mrf.mxu0
    %4096 = vdwg.mxu0
    %v4097 = vadd.f32 %v3609, %v4094
    %v4098 = vxor.u32 %v4097, 2147483648
    %v4099 = vmul.f32 %v4098, 1.442695
    %v4100 = vpow.pop %v4099
    %v4101 = vadd.f32 %v4100, 1.0
    %v4102 = vrcp.pop %v4101
    %v4103 = vmul.f32 1.0, %v4102
    %v4104 = vtanh.pop %v4097
    %v4105 = vmul.f32 %v4103, %v4015
    %4107 = vrot.lane.b32.xlu0 %v4104, 32
    %v4108 = vpop.permute.xlu0 %4107
    %v4110 = vmul.f32 %v4103, %v4108
    %4112 = vrot.lane.b32.xlu0 %v4110, 32
    %v4113 = vpop.permute.xlu0 %4112
    %v4115 = vadd.f32 %v4105, %v4113
    %v4116 = vtanh.pop %v4115
    %4118 = vrot.lane.b32.xlu0 %v4116, 32
    %v4119 = vpop.permute.xlu0 %4118
    %v4121 = vmul.f32 %v4103, %v4119
    %4123 = vrot.lane.b32.xlu0 %v4121, 64
    %v4124 = vpop.permute.xlu0 %4123
    %v4125 = vsel %vm696, %v4124, 0
    %4127 = vmatprep.subr.mxu0 0.0
    %4128 = vmatpush1.msra.mxu0 0.0
    %4129 = vmatprep.subr.mxu0 0.0
    %4130 = vmatpush1.msra.mxu0 0.0
    %4131 = vmatprep.subr.mxu0 0.0
    %4132 = vmatpush1.msra.mxu0 0.0
    %4133 = vmatprep.subr.mxu0 0.0
    %4134 = vmatpush1.msra.mxu0 0.0
    %4135 = vmatprep.subr.mxu0 0.0
    %4136 = vmatpush1.msra.mxu0 0.0
    %4137 = vmatprep.subr.mxu0 0.0
    %4138 = vmatpush1.msra.mxu0 0.0
    %4139 = vmatprep.subr.mxu0 0.0
    %4140 = vmatpush1.msra.mxu0 0.0
    %4141 = vmatprep.subr.mxu0 0.0
    %4142 = vmatpush1.msra.mxu0 0.0
    %4143 = vmatprep.subr.mxu0 0.0
    %4144 = vmatpush1.msra.mxu0 0.0
    %4145 = vmatprep.subr.mxu0 0.0
    %4146 = vmatpush1.msra.mxu0 0.0
    %4147 = vmatprep.subr.mxu0 0.0
    %4148 = vmatpush1.msra.mxu0 0.0
    %4149 = vmatprep.subr.mxu0 0.0
    %4150 = vmatpush1.msra.mxu0 0.0
    %4151 = vmatprep.subr.mxu0 0.0
    %4152 = vmatpush1.msra.mxu0 %v3509
    %4153 = vmatprep.subr.mxu0 0.0
    %4154 = vmatpush1.msra.mxu0 %v3508
    %4155 = vmatprep.subr.mxu0 0.0
    %4156 = vmatpush1.msra.mxu0 %v3507
    %4157 = vmatprep.subr.mxu0 0.0
    %4158 = vmatpush1.msra.mxu0 %v3506
    %4159 = vmatprep.subr.mxu0 0.0
    %4160 = vmatpush2.msra.mxu0 0.0
    %4161 = vmatprep.subr.mxu0 0.0
    %4162 = vmatpush2.msra.mxu0 0.0
    %4163 = vmatprep.subr.mxu0 0.0
    %4164 = vmatpush2.msra.mxu0 0.0
    %4165 = vmatprep.subr.mxu0 0.0
    %4166 = vmatpush2.msra.mxu0 0.0
    %4167 = vmatprep.subr.mxu0 0.0
    %4168 = vmatpush2.msra.mxu0 0.0
    %4169 = vmatprep.subr.mxu0 0.0
    %4170 = vmatpush2.msra.mxu0 0.0
    %4171 = vmatprep.subr.mxu0 0.0
    %4172 = vmatpush2.msra.mxu0 0.0
    %4173 = vmatprep.subr.mxu0 0.0
    %4174 = vmatpush2.msra.mxu0 0.0
    %4175 = vmatprep.subr.mxu0 0.0
    %4176 = vmatpush2.msra.mxu0 0.0
    %4177 = vmatprep.subr.mxu0 0.0
    %4178 = vmatpush2.msra.mxu0 0.0
    %4179 = vmatprep.subr.mxu0 0.0
    %4180 = vmatpush2.msra.mxu0 0.0
    %4181 = vmatprep.subr.mxu0 0.0
    %4182 = vmatpush2.msra.mxu0 0.0
    %4183 = vmatprep.subr.mxu0 0.0
    %4184 = vmatpush2.msra.mxu0 0.0
    %4185 = vmatprep.subr.mxu0 0.0
    %4186 = vmatpush2.msra.mxu0 0.0
    %4187 = vmatprep.subr.mxu0 0.0
    %4188 = vmatpush2.msra.mxu0 0.0
    %4189 = vmatprep.subr.mxu0 0.0
    %4190 = vmatpush2.msra.mxu0 0.0
    %4191 = vmatprep.mubr.f32.mxu0 0.0
    %4192 = vmatmul.mubr.f32.gmra.mxu0 %v4125
    %v4193 = vpop.f32.mrf.mxu0
    %v4194 = vadd.f32 0.0, %v4193
    %v4195 = vpop.f32.mrf.mxu0
    %4196 = vdwg.mxu0
    %v4197 = vadd.f32 %v3614, %v4194
    %v4198 = vxor.u32 %v4197, 2147483648
    %v4199 = vmul.f32 %v4198, 1.442695
    %v4200 = vpow.pop %v4199
    %v4201 = vadd.f32 %v4200, 1.0
    %v4202 = vrcp.pop %v4201
    %v4203 = vmul.f32 1.0, %v4202
    %v4204 = vtanh.pop %v4197
    %v4205 = vmul.f32 %v4203, %v4115
    %4207 = vrot.lane.b32.xlu0 %v4204, 32
    %v4208 = vpop.permute.xlu0 %4207
    %v4210 = vmul.f32 %v4203, %v4208
    %4212 = vrot.lane.b32.xlu0 %v4210, 32
    %v4213 = vpop.permute.xlu0 %4212
    %v4215 = vadd.f32 %v4205, %v4213
    %v4216 = vtanh.pop %v4215
    %4218 = vrot.lane.b32.xlu0 %v4216, 32
    %v4219 = vpop.permute.xlu0 %4218
    %v4221 = vmul.f32 %v4203, %v4219
    %4223 = vrot.lane.b32.xlu0 %v4221, 64
    %v4224 = vpop.permute.xlu0 %4223
    %v4225 = vsel %vm696, %v4224, 0
    %4227 = vmatprep.subr.mxu0 0.0
    %4228 = vmatpush1.msra.mxu0 0.0
    %4229 = vmatprep.subr.mxu0 0.0
    %4230 = vmatpush1.msra.mxu0 0.0
    %4231 = vmatprep.subr.mxu0 0.0
    %4232 = vmatpush1.msra.mxu0 0.0
    %4233 = vmatprep.subr.mxu0 0.0
    %4234 = vmatpush1.msra.mxu0 0.0
    %4235 = vmatprep.subr.mxu0 0.0
    %4236 = vmatpush1.msra.mxu0 0.0
    %4237 = vmatprep.subr.mxu0 0.0
    %4238 = vmatpush1.msra.mxu0 0.0
    %4239 = vmatprep.subr.mxu0 0.0
    %4240 = vmatpush1.msra.mxu0 0.0
    %4241 = vmatprep.subr.mxu0 0.0
    %4242 = vmatpush1.msra.mxu0 0.0
    %4243 = vmatprep.subr.mxu0 0.0
    %4244 = vmatpush1.msra.mxu0 0.0
    %4245 = vmatprep.subr.mxu0 0.0
    %4246 = vmatpush1.msra.mxu0 0.0
    %4247 = vmatprep.subr.mxu0 0.0
    %4248 = vmatpush1.msra.mxu0 0.0
    %4249 = vmatprep.subr.mxu0 0.0
    %4250 = vmatpush1.msra.mxu0 0.0
    %4251 = vmatprep.subr.mxu0 0.0
    %4252 = vmatpush1.msra.mxu0 %v3509
    %4253 = vmatprep.subr.mxu0 0.0
    %4254 = vmatpush1.msra.mxu0 %v3508
    %4255 = vmatprep.subr.mxu0 0.0
    %4256 = vmatpush1.msra.mxu0 %v3507
    %4257 = vmatprep.subr.mxu0 0.0
    %4258 = vmatpush1.msra.mxu0 %v3506
    %4259 = vmatprep.subr.mxu0 0.0
    %4260 = vmatpush2.msra.mxu0 0.0
    %4261 = vmatprep.subr.mxu0 0.0
    %4262 = vmatpush2.msra.mxu0 0.0
    %4263 = vmatprep.subr.mxu0 0.0
    %4264 = vmatpush2.msra.mxu0 0.0
    %4265 = vmatprep.subr.mxu0 0.0
    %4266 = vmatpush2.msra.mxu0 0.0
    %4267 = vmatprep.subr.mxu0 0.0
    %4268 = vmatpush2.msra.mxu0 0.0
    %4269 = vmatprep.subr.mxu0 0.0
    %4270 = vmatpush2.msra.mxu0 0.0
    %4271 = vmatprep.subr.mxu0 0.0
    %4272 = vmatpush2.msra.mxu0 0.0
    %4273 = vmatprep.subr.mxu0 0.0
    %4274 = vmatpush2.msra.mxu0 0.0
    %4275 = vmatprep.subr.mxu0 0.0
    %4276 = vmatpush2.msra.mxu0 0.0
    %4277 = vmatprep.subr.mxu0 0.0
    %4278 = vmatpush2.msra.mxu0 0.0
    %4279 = vmatprep.subr.mxu0 0.0
    %4280 = vmatpush2.msra.mxu0 0.0
    %4281 = vmatprep.subr.mxu0 0.0
    %4282 = vmatpush2.msra.mxu0 0.0
    %4283 = vmatprep.subr.mxu0 0.0
    %4284 = vmatpush2.msra.mxu0 0.0
    %4285 = vmatprep.subr.mxu0 0.0
    %4286 = vmatpush2.msra.mxu0 0.0
    %4287 = vmatprep.subr.mxu0 0.0
    %4288 = vmatpush2.msra.mxu0 0.0
    %4289 = vmatprep.subr.mxu0 0.0
    %4290 = vmatpush2.msra.mxu0 0.0
    %4291 = vmatprep.mubr.f32.mxu0 0.0
    %4292 = vmatmul.mubr.f32.gmra.mxu0 %v4225
    %v4293 = vpop.f32.mrf.mxu0
    %v4294 = vadd.f32 0.0, %v4293
    %v4295 = vpop.f32.mrf.mxu0
    %4296 = vdwg.mxu0
    %v4297 = vadd.f32 %v3619, %v4294
    %v4298 = vxor.u32 %v4297, 2147483648
    %v4299 = vmul.f32 %v4298, 1.442695
    %v4300 = vpow.pop %v4299
    %v4301 = vadd.f32 %v4300, 1.0
    %v4302 = vrcp.pop %v4301
    %v4303 = vmul.f32 1.0, %v4302
    %v4304 = vtanh.pop %v4297
    %v4305 = vmul.f32 %v4303, %v4215
    %4307 = vrot.lane.b32.xlu0 %v4304, 32
    %v4308 = vpop.permute.xlu0 %4307
    %v4310 = vmul.f32 %v4303, %v4308
    %4312 = vrot.lane.b32.xlu0 %v4310, 32
    %v4313 = vpop.permute.xlu0 %4312
    %v4315 = vadd.f32 %v4305, %v4313
    %v4316 = vtanh.pop %v4315
    %4318 = vrot.lane.b32.xlu0 %v4316, 32
    %v4319 = vpop.permute.xlu0 %4318
    %v4321 = vmul.f32 %v4303, %v4319
    %4323 = vrot.lane.b32.xlu0 %v4321, 64
    %v4324 = vpop.permute.xlu0 %4323
    %v4325 = vsel %vm696, %v4324, 0
    %4327 = vmatprep.subr.mxu0 0.0
    %4328 = vmatpush1.msra.mxu0 0.0
    %4329 = vmatprep.subr.mxu0 0.0
    %4330 = vmatpush1.msra.mxu0 0.0
    %4331 = vmatprep.subr.mxu0 0.0
    %4332 = vmatpush1.msra.mxu0 0.0
    %4333 = vmatprep.subr.mxu0 0.0
    %4334 = vmatpush1.msra.mxu0 0.0
    %4335 = vmatprep.subr.mxu0 0.0
    %4336 = vmatpush1.msra.mxu0 0.0
    %4337 = vmatprep.subr.mxu0 0.0
    %4338 = vmatpush1.msra.mxu0 0.0
    %4339 = vmatprep.subr.mxu0 0.0
    %4340 = vmatpush1.msra.mxu0 0.0
    %4341 = vmatprep.subr.mxu0 0.0
    %4342 = vmatpush1.msra.mxu0 0.0
    %4343 = vmatprep.subr.mxu0 0.0
    %4344 = vmatpush1.msra.mxu0 0.0
    %4345 = vmatprep.subr.mxu0 0.0
    %4346 = vmatpush1.msra.mxu0 0.0
    %4347 = vmatprep.subr.mxu0 0.0
    %4348 = vmatpush1.msra.mxu0 0.0
    %4349 = vmatprep.subr.mxu0 0.0
    %4350 = vmatpush1.msra.mxu0 0.0
    %4351 = vmatprep.subr.mxu0 0.0
    %4352 = vmatpush1.msra.mxu0 %v3509
    %4353 = vmatprep.subr.mxu0 0.0
    %4354 = vmatpush1.msra.mxu0 %v3508
    %4355 = vmatprep.subr.mxu0 0.0
    %4356 = vmatpush1.msra.mxu0 %v3507
    %4357 = vmatprep.subr.mxu0 0.0
    %4358 = vmatpush1.msra.mxu0 %v3506
    %4359 = vmatprep.subr.mxu0 0.0
    %4360 = vmatpush2.msra.mxu0 0.0
    %4361 = vmatprep.subr.mxu0 0.0
    %4362 = vmatpush2.msra.mxu0 0.0
    %4363 = vmatprep.subr.mxu0 0.0
    %4364 = vmatpush2.msra.mxu0 0.0
    %4365 = vmatprep.subr.mxu0 0.0
    %4366 = vmatpush2.msra.mxu0 0.0
    %4367 = vmatprep.subr.mxu0 0.0
    %4368 = vmatpush2.msra.mxu0 0.0
    %4369 = vmatprep.subr.mxu0 0.0
    %4370 = vmatpush2.msra.mxu0 0.0
    %4371 = vmatprep.subr.mxu0 0.0
    %4372 = vmatpush2.msra.mxu0 0.0
    %4373 = vmatprep.subr.mxu0 0.0
    %4374 = vmatpush2.msra.mxu0 0.0
    %4375 = vmatprep.subr.mxu0 0.0
    %4376 = vmatpush2.msra.mxu0 0.0
    %4377 = vmatprep.subr.mxu0 0.0
    %4378 = vmatpush2.msra.mxu0 0.0
    %4379 = vmatprep.subr.mxu0 0.0
    %4380 = vmatpush2.msra.mxu0 0.0
    %4381 = vmatprep.subr.mxu0 0.0
    %4382 = vmatpush2.msra.mxu0 0.0
    %4383 = vmatprep.subr.mxu0 0.0
    %4384 = vmatpush2.msra.mxu0 0.0
    %4385 = vmatprep.subr.mxu0 0.0
    %4386 = vmatpush2.msra.mxu0 0.0
    %4387 = vmatprep.subr.mxu0 0.0
    %4388 = vmatpush2.msra.mxu0 0.0
    %4389 = vmatprep.subr.mxu0 0.0
    %4390 = vmatpush2.msra.mxu0 0.0
    %4391 = vmatprep.mubr.f32.mxu0 0.0
    %4392 = vmatmul.mubr.f32.gmra.mxu0 %v4325
    %v4393 = vpop.f32.mrf.mxu0
    %v4394 = vadd.f32 0.0, %v4393
    %v4395 = vpop.f32.mrf.mxu0
    %4396 = vdwg.mxu0
    %v4397 = vadd.f32 %v3624, %v4394
    %v4398 = vxor.u32 %v4397, 2147483648
    %v4399 = vmul.f32 %v4398, 1.442695
    %v4400 = vpow.pop %v4399
    %v4401 = vadd.f32 %v4400, 1.0
    %v4402 = vrcp.pop %v4401
    %v4403 = vmul.f32 1.0, %v4402
    %v4404 = vtanh.pop %v4397
    %v4405 = vmul.f32 %v4403, %v4315
    %4407 = vrot.lane.b32.xlu0 %v4404, 32
    %v4408 = vpop.permute.xlu0 %4407
    %v4410 = vmul.f32 %v4403, %v4408
    %4412 = vrot.lane.b32.xlu0 %v4410, 32
    %v4413 = vpop.permute.xlu0 %4412
    %v4415 = vadd.f32 %v4405, %v4413
    %v4416 = vtanh.pop %v4415
    %4418 = vrot.lane.b32.xlu0 %v4416, 32
    %v4419 = vpop.permute.xlu0 %4418
    %v4421 = vmul.f32 %v4403, %v4419
    %v4422 = vld [vmem:[%s25] sm:$0xff]
    %v4423 = vld [vmem:[%s25 + $0x8] sm:$0xff]
    %v4424 = vld [vmem:[%s25 + $0x10] sm:$0xff]
    %v4425 = vld [vmem:[%s25 + $0x18] sm:$0xff]
    %v4426 = vld [vmem:[%s26] sm:$0x1]
    %v4428 = vlaneseq
    %v4429 = vshrl.u32 %v4428, 7
    %v4430 = vsub.s32 0, %v4429
    %v4431 = vrot.slane %v4426, %v4430
    %4434 = vrot.lane.b32.xlu0 %v4421, 64
    %v4435 = vpop.permute.xlu0 %4434
    %v4436 = vsel %vm696, %v4435, 0
    %4438 = vmatprep.subr.mxu0 0.0
    %4439 = vmatpush1.msra.mxu0 0.0
    %4440 = vmatprep.subr.mxu0 0.0
    %4441 = vmatpush1.msra.mxu0 0.0
    %4442 = vmatprep.subr.mxu0 0.0
    %4443 = vmatpush1.msra.mxu0 0.0
    %4444 = vmatprep.subr.mxu0 0.0
    %4445 = vmatpush1.msra.mxu0 0.0
    %4446 = vmatprep.subr.mxu0 0.0
    %4447 = vmatpush1.msra.mxu0 0.0
    %4448 = vmatprep.subr.mxu0 0.0
    %4449 = vmatpush1.msra.mxu0 0.0
    %4450 = vmatprep.subr.mxu0 0.0
    %4451 = vmatpush1.msra.mxu0 0.0
    %4452 = vmatprep.subr.mxu0 0.0
    %4453 = vmatpush1.msra.mxu0 0.0
    %4454 = vmatprep.subr.mxu0 0.0
    %4455 = vmatpush1.msra.mxu0 0.0
    %4456 = vmatprep.subr.mxu0 0.0
    %4457 = vmatpush1.msra.mxu0 0.0
    %4458 = vmatprep.subr.mxu0 0.0
    %4459 = vmatpush1.msra.mxu0 0.0
    %4460 = vmatprep.subr.mxu0 0.0
    %4461 = vmatpush1.msra.mxu0 0.0
    %4462 = vmatprep.subr.mxu0 0.0
    %4463 = vmatpush1.msra.mxu0 %v4425
    %4464 = vmatprep.subr.mxu0 0.0
    %4465 = vmatpush1.msra.mxu0 %v4424
    %4466 = vmatprep.subr.mxu0 0.0
    %4467 = vmatpush1.msra.mxu0 %v4423
    %4468 = vmatprep.subr.mxu0 0.0
    %4469 = vmatpush1.msra.mxu0 %v4422
    %4470 = vmatprep.subr.mxu0 0.0
    %4471 = vmatpush2.msra.mxu0 0.0
    %4472 = vmatprep.subr.mxu0 0.0
    %4473 = vmatpush2.msra.mxu0 0.0
    %4474 = vmatprep.subr.mxu0 0.0
    %4475 = vmatpush2.msra.mxu0 0.0
    %4476 = vmatprep.subr.mxu0 0.0
    %4477 = vmatpush2.msra.mxu0 0.0
    %4478 = vmatprep.subr.mxu0 0.0
    %4479 = vmatpush2.msra.mxu0 0.0
    %4480 = vmatprep.subr.mxu0 0.0
    %4481 = vmatpush2.msra.mxu0 0.0
    %4482 = vmatprep.subr.mxu0 0.0
    %4483 = vmatpush2.msra.mxu0 0.0
    %4484 = vmatprep.subr.mxu0 0.0
    %4485 = vmatpush2.msra.mxu0 0.0
    %4486 = vmatprep.subr.mxu0 0.0
    %4487 = vmatpush2.msra.mxu0 0.0
    %4488 = vmatprep.subr.mxu0 0.0
    %4489 = vmatpush2.msra.mxu0 0.0
    %4490 = vmatprep.subr.mxu0 0.0
    %4491 = vmatpush2.msra.mxu0 0.0
    %4492 = vmatprep.subr.mxu0 0.0
    %4493 = vmatpush2.msra.mxu0 0.0
    %4494 = vmatprep.subr.mxu0 0.0
    %4495 = vmatpush2.msra.mxu0 0.0
    %4496 = vmatprep.subr.mxu0 0.0
    %4497 = vmatpush2.msra.mxu0 0.0
    %4498 = vmatprep.subr.mxu0 0.0
    %4499 = vmatpush2.msra.mxu0 0.0
    %4500 = vmatprep.subr.mxu0 0.0
    %4501 = vmatpush2.msra.mxu0 0.0
    %4502 = vmatprep.mubr.f32.mxu0 0.0
    %4503 = vmatmul.mubr.f32.gmra.mxu0 %v3725
    %v4504 = vpop.f32.mrf.mxu0
    %v4505 = vadd.f32 %v4431, %v4504
    %v4506 = vpop.f32.mrf.mxu0
    %4507 = vmatprep.mubr.f32.mxu0 0.0
    %4508 = vmatmul.mubr.f32.gmra.mxu0 %v3825
    %v4509 = vpop.f32.mrf.mxu0
    %v4510 = vadd.f32 %v4431, %v4509
    %v4511 = vpop.f32.mrf.mxu0
    %4512 = vmatprep.mubr.f32.mxu0 0.0
    %4513 = vmatmul.mubr.f32.gmra.mxu0 %v3925
    %v4514 = vpop.f32.mrf.mxu0
    %v4515 = vadd.f32 %v4431, %v4514
    %v4516 = vpop.f32.mrf.mxu0
    %4517 = vmatprep.mubr.f32.mxu0 0.0
    %4518 = vmatmul.mubr.f32.gmra.mxu0 %v4025
    %v4519 = vpop.f32.mrf.mxu0
    %v4520 = vadd.f32 %v4431, %v4519
    %v4521 = vpop.f32.mrf.mxu0
    %4522 = vmatprep.mubr.f32.mxu0 0.0
    %4523 = vmatmul.mubr.f32.gmra.mxu0 %v4125
    %v4524 = vpop.f32.mrf.mxu0
    %v4525 = vadd.f32 %v4431, %v4524
    %v4526 = vpop.f32.mrf.mxu0
    %4527 = vmatprep.mubr.f32.mxu0 0.0
    %4528 = vmatmul.mubr.f32.gmra.mxu0 %v4225
    %v4529 = vpop.f32.mrf.mxu0
    %v4530 = vadd.f32 %v4431, %v4529
    %v4531 = vpop.f32.mrf.mxu0
    %4532 = vmatprep.mubr.f32.mxu0 0.0
    %4533 = vmatmul.mubr.f32.gmra.mxu0 %v4325
    %v4534 = vpop.f32.mrf.mxu0
    %v4535 = vadd.f32 %v4431, %v4534
    %v4536 = vpop.f32.mrf.mxu0
    %4537 = vmatprep.mubr.f32.mxu0 0.0
    %4538 = vmatmul.mubr.f32.gmra.mxu0 %v4436
    %v4539 = vpop.f32.mrf.mxu0
    %v4540 = vadd.f32 %v4431, %v4539
    %v4541 = vpop.f32.mrf.mxu0
    %4542 = vdwg.mxu0
    %4543 = vst.msk [vmem:[%s27] sm:$0xff] %vm547, %v4505
    %4544 = vst.msk [vmem:[%s27 + $0x8] sm:$0xff] %vm547, %v4510
    %4545 = vst.msk [vmem:[%s27 + $0x10] sm:$0xff] %vm547, %v4515
    %4546 = vst.msk [vmem:[%s27 + $0x18] sm:$0xff] %vm547, %v4520
    %4547 = vst.msk [vmem:[%s27 + $0x20] sm:$0xff] %vm547, %v4525
    %4548 = vst.msk [vmem:[%s27 + $0x28] sm:$0xff] %vm547, %v4530
    %4549 = vst.msk [vmem:[%s27 + $0x30] sm:$0xff] %vm547, %v4535
    %4550 = vst.msk [vmem:[%s27 + $0x38] sm:$0xff] %vm547, %v4540
    // Predicated region
    $region162: #{seq2seq_forward.1} parent=1 // pred_check
      _
    $region163: #{seq2seq_forward.1} parent=1 // pred_check_branch
      %4552 = sbr.rel (0) target = $region165
    $region164: #{seq2seq_forward.1} parent=1 // pred_region
      _
    $region165: #{seq2seq_forward.1} parent=1 // pred_fallthru
      _
    // Predicated region
    $region166: #{seq2seq_forward.1} parent=1 // pred_check
      _
    $region167: #{seq2seq_forward.1} parent=1 // pred_check_branch
      %4554 = sbr.rel (0) target = $region169
    $region168: #{seq2seq_forward.1} parent=1 // pred_region
      _
    $region169: #{seq2seq_forward.1} parent=1 // pred_fallthru
      _
    %4555 = vsyncpa [#allocation3], 1
    %4556 = vsyncpa [#allocation5], 1
    %4557 = vsyncpa [#allocation8], 1
    %4558 = vsyncpa [#allocation11], 1
    %4559 = vsyncpa [#allocation14], 1
    %4560 = vsyncpa [#allocation17], 1
    %4561 = vsyncpa [#allocation20], 1

</llo_original>
